<compile_context>
chip_gen: v6e
topology: v6e:2x2x1
jax: 0.10.0
libtpu: 0.0.40
codegen_flags: <defaults>
</compile_context>

<pallas_src>
import functools

import jax
import jax.numpy as jnp
from jax.experimental import pallas as pl
from jax.experimental.pallas import tpu as pltpu


def _residual_block_kernel(x_ref, w1_ref, b1_ref, w2_ref, b2_ref, o_ref,
                           *, H, W, C, NB):
    """One grid step processes NB batch elements.

    x_ref/o_ref : (NB, C, H*W) lane-dense f32 blocks.
    w*_ref      : VMEM (C, 9*C) weight tiles; rows = cout, column (t*C + cin)
                  with t = dy*3 + dx  ->  a column slice is the cout vector.
    b*_ref      : VMEM (C, 1) biases (cout on sublanes).
    """
    HW = H * W
    taps = [(dy, dx) for dy in range(3) for dx in range(3)]

    # ---- per-tap border-validity masks, (1, HW), built once per grid step --
    pos = jax.lax.broadcasted_iota(jnp.int32, (1, HW), 1)
    if (W & (W - 1)) == 0:                    # power-of-two W -> cheap bit ops
        yy = pos >> (W.bit_length() - 1)
        xx = pos & (W - 1)
    else:
        yy = pos // W
        xx = pos % W
    masks = []
    for dy, dx in taps:
        conds = []
        if dy == 0:
            conds.append(yy >= 1)
        elif dy == 2:
            conds.append(yy <= H - 2)
        if dx == 0:
            conds.append(xx >= 1)
        elif dx == 2:
            conds.append(xx <= W - 2)
        m = None
        for cond in conds:
            m = cond if m is None else (m & cond)
        masks.append(m)                       # None => interior tap (all valid)

    # Tiny weight / bias tiles, loaded once per step (no per-FMA SMEM reads).
    wv1 = w1_ref[...]                         # (C, 9*C)
    wv2 = w2_ref[...]
    bc1 = b1_ref[...]                         # (C, 1)
    bc2 = b2_ref[...]

    def conv3x3(xb, wv, bcol):
        """xb: (C, HW) lane-dense block.  Returns conv3x3(xb) + bias, (C, HW).

        Loop order tap -> cin keeps exactly one shifted tap live at a time
        (no spills); accumulation is vectorized over cout via a (C,1) weight
        column x (1,HW) shifted row broadcast FMA.
        """
        acc = jnp.broadcast_to(bcol, (C, HW))                 # bias init
        for t, (dy, dx) in enumerate(taps):
            s = (dy - 1) * W + (dx - 1)
            # Whole-block per-row circular shift along the lane (HW) axis.
            sh = xb if s == 0 else pltpu.roll(xb, shift=(-s) % HW, axis=1)
            if masks[t] is not None:
                sh = jnp.where(masks[t], sh, 0.0)             # zero the wrap
            for cin in range(C):
                row = sh[cin:cin + 1, :]                      # (1, HW)
                wcol = wv[:, t * C + cin: t * C + cin + 1]    # (C, 1)
                acc = acc + wcol * row                        # (C, HW) FMA
        return acc

    for n in range(NB):                       # NB is small & static
        xb = x_ref[n, :, :]                   # (C, HW) lane-dense load
        # conv1 + bias + ReLU  (BatchNorm2d is Identity: use_batchnorm=False)
        # TODO(synk): training-mode BatchNorm2d (batch statistics) not implemented;
        # this module instance uses use_batchnorm=False -> Identity.
        h = jnp.maximum(conv3x3(xb, wv1, bc1), 0.0)
        # conv2 + bias + residual add; direct lane-dense block store.
        y = conv3x3(h, wv2, bc2) + xb
        o_ref[n, :, :] = y.astype(o_ref.dtype)


def _pick_batch_tile(N, C, HW):
    """Largest divisor of N whose f32 block stays small; collapses the grid
    to a single step for small batches (per-step overhead ~0.35 µs)."""
    limit_bytes = 2 * 1024 * 1024
    nb = 1
    for cand in range(1, N + 1):
        if N % cand == 0 and cand * C * HW * 4 <= limit_bytes:
            nb = cand
    return nb


@functools.partial(jax.jit, static_argnames=("H", "W", "NB"))
def _residual_block_pallas(x_flat, w1, b1, w2, b2, *, H, W, NB):
    """x_flat: (N, C, H*W) f32.  w*: (C, 9*C) f32.  b*: (C, 1) f32."""
    N, C, HW = x_flat.shape
    kernel = functools.partial(_residual_block_kernel, H=H, W=W, C=C, NB=NB)
    return pl.pallas_call(
        kernel,
        out_shape=jax.ShapeDtypeStruct((N, C, HW), jnp.float32),
        grid=(N // NB,),
        in_specs=[
            pl.BlockSpec((NB, C, HW), lambda i: (i, 0, 0)),          # x
            pl.BlockSpec(memory_space=pltpu.MemorySpace.VMEM),       # w1 tile
            pl.BlockSpec(memory_space=pltpu.MemorySpace.VMEM),       # b1
            pl.BlockSpec(memory_space=pltpu.MemorySpace.VMEM),       # w2 tile
            pl.BlockSpec(memory_space=pltpu.MemorySpace.VMEM),       # b2
        ],
        out_specs=pl.BlockSpec((NB, C, HW), lambda i: (i, 0, 0)),
        compiler_params=pltpu.CompilerParams(
            dimension_semantics=("parallel",),   # only splits when grid > 1
            vmem_limit_bytes=32 * 1024 * 1024,   # explicit budget; tiny resident set
        ),
    )(x_flat, w1, b1, w2, b2)


def residual_block(x_nchw, w1_oihw, b1, w2_oihw, b2):
    """PyTorch-facing wrapper.

    x_nchw: (N, C, H, W).  w*_oihw: torch Conv2d weights (Cout, Cin, 3, 3).
    b*: (C,).
    """
    N, C, H, W = x_nchw.shape
    HW = H * W
    # Pure reshape (spatial already contiguous in NCHW) -> no transpose round trip.
    x_flat = x_nchw.reshape(N, C, HW)
    # (Cout, Cin, 3, 3) -> (Cout, 9*Cin), columns ordered [dy, dx, cin].
    w1k = jnp.transpose(w1_oihw, (0, 2, 3, 1)).reshape(C, 9 * C)
    w2k = jnp.transpose(w2_oihw, (0, 2, 3, 1)).reshape(C, 9 * C)
    b1c = b1.reshape(C, 1)
    b2c = b2.reshape(C, 1)
    NB = _pick_batch_tile(N, C, HW)
    y = _residual_block_pallas(x_flat, w1k, b1c, w2k, b2c, H=H, W=W, NB=NB)
    return y.reshape(N, C, H, W)


def _reference(x_nchw, w1_oihw, b1, w2_oihw, b2):
    """Pure-JAX reference (lax.conv), same math as the torch module."""
    dn = jax.lax.conv_dimension_numbers(x_nchw.shape, w1_oihw.shape,
                                        ("NCHW", "OIHW", "NCHW"))
    h = jax.lax.conv_general_dilated(x_nchw, w1_oihw, (1, 1), "SAME",
                                     dimension_numbers=dn)
    h = jnp.maximum(h + b1[None, :, None, None], 0.0)
    y = jax.lax.conv_general_dilated(h, w2_oihw, (1, 1), "SAME",
                                     dimension_numbers=dn)
    return y + b2[None, :, None, None] + x_nchw


if __name__ == "__main__":
    N, C, H, W = 2, 4, 16, 16          # feature_map_size = 4, use_batchnorm=False

    key = jax.random.PRNGKey(0)
    kx, k1, kb1, k2, kb2 = jax.random.split(key, 5)

    x = jax.random.normal(kx, (N, C, H, W), dtype=jnp.float32)          # NCHW
    w1 = jax.random.normal(k1, (C, C, 3, 3), dtype=jnp.float32) * 0.1   # torch OIHW
    b1 = jax.random.normal(kb1, (C,), dtype=jnp.float32) * 0.1
    w2 = jax.random.normal(k2, (C, C, 3, 3), dtype=jnp.float32) * 0.1
    b2 = jax.random.normal(kb2, (C,), dtype=jnp.float32) * 0.1

    out = jax.block_until_ready(residual_block(x, w1, b1, w2, b2))
    ref = jax.block_until_ready(_reference(x, w1, b1, w2, b2))

    assert out.shape == (N, C, H, W)
    assert jnp.allclose(out, ref, atol=1e-4, rtol=1e-4), "mismatch vs reference"

    print("KERNEL_OK")
</pallas_src>

<mosaic_0001>
module attributes {stable_mosaic.version = 11 : i64} {
  func.func @_residual_block_kernel(%arg0: i32, %arg1: memref<2x4x256xf32, #tpu.memory_space<vmem>>, %arg2: memref<4x36xf32, #tpu.memory_space<vmem>>, %arg3: memref<4x1xf32, #tpu.memory_space<vmem>>, %arg4: memref<4x36xf32, #tpu.memory_space<vmem>>, %arg5: memref<4x1xf32, #tpu.memory_space<vmem>>, %arg6: memref<2x4x256xf32, #tpu.memory_space<vmem>>) attributes {dimension_semantics = [#tpu.dimension_semantics<parallel>], iteration_bounds = array<i64: 1>, scalar_prefetch = 0 : i64, scratch_operands = 0 : i64, tpu.core_type = #tpu.core_type<tc>, window_params = [{transform_indices = @transform_0, window_bounds = array<i64: 2, 4, 256>}, {pipeline_mode = #tpu.pipeline_mode<synchronous>, transform_indices = @transform_1, window_bounds = array<i64: 4, 36>}, {pipeline_mode = #tpu.pipeline_mode<synchronous>, transform_indices = @transform_2, window_bounds = array<i64: 4, 1>}, {pipeline_mode = #tpu.pipeline_mode<synchronous>, transform_indices = @transform_3, window_bounds = array<i64: 4, 36>}, {pipeline_mode = #tpu.pipeline_mode<synchronous>, transform_indices = @transform_4, window_bounds = array<i64: 4, 1>}, {transform_indices = @transform_5, window_bounds = array<i64: 2, 4, 256>}]} {
    %0 = tpu.iota {dimensions = array<i32: 1>} : vector<1x256xi32>
    %c4_i32 = arith.constant 4 : i32
    %1 = vector.broadcast %c4_i32 : i32 to vector<1x256xi32>
    %2 = arith.shrsi %0, %1 : vector<1x256xi32>
    %c15_i32 = arith.constant 15 : i32
    %3 = vector.broadcast %c15_i32 : i32 to vector<1x256xi32>
    %4 = arith.andi %0, %3 : vector<1x256xi32>
    %c1_i32 = arith.constant 1 : i32
    %5 = vector.broadcast %c1_i32 : i32 to vector<1x256xi32>
    %6 = arith.cmpi sge, %2, %5 : vector<1x256xi32>
    %c1_i32_0 = arith.constant 1 : i32
    %7 = vector.broadcast %c1_i32_0 : i32 to vector<1x256xi32>
    %8 = arith.cmpi sge, %4, %7 : vector<1x256xi32>
    %9 = arith.andi %6, %8 : vector<1x256xi1>
    %c1_i32_1 = arith.constant 1 : i32
    %10 = vector.broadcast %c1_i32_1 : i32 to vector<1x256xi32>
    %11 = arith.cmpi sge, %2, %10 : vector<1x256xi32>
    %c1_i32_2 = arith.constant 1 : i32
    %12 = vector.broadcast %c1_i32_2 : i32 to vector<1x256xi32>
    %13 = arith.cmpi sge, %2, %12 : vector<1x256xi32>
    %c14_i32 = arith.constant 14 : i32
    %14 = vector.broadcast %c14_i32 : i32 to vector<1x256xi32>
    %15 = arith.cmpi sle, %4, %14 : vector<1x256xi32>
    %16 = arith.andi %13, %15 : vector<1x256xi1>
    %c1_i32_3 = arith.constant 1 : i32
    %17 = vector.broadcast %c1_i32_3 : i32 to vector<1x256xi32>
    %18 = arith.cmpi sge, %4, %17 : vector<1x256xi32>
    %c14_i32_4 = arith.constant 14 : i32
    %19 = vector.broadcast %c14_i32_4 : i32 to vector<1x256xi32>
    %20 = arith.cmpi sle, %4, %19 : vector<1x256xi32>
    %c14_i32_5 = arith.constant 14 : i32
    %21 = vector.broadcast %c14_i32_5 : i32 to vector<1x256xi32>
    %22 = arith.cmpi sle, %2, %21 : vector<1x256xi32>
    %c1_i32_6 = arith.constant 1 : i32
    %23 = vector.broadcast %c1_i32_6 : i32 to vector<1x256xi32>
    %24 = arith.cmpi sge, %4, %23 : vector<1x256xi32>
    %25 = arith.andi %22, %24 : vector<1x256xi1>
    %c14_i32_7 = arith.constant 14 : i32
    %26 = vector.broadcast %c14_i32_7 : i32 to vector<1x256xi32>
    %27 = arith.cmpi sle, %2, %26 : vector<1x256xi32>
    %c14_i32_8 = arith.constant 14 : i32
    %28 = vector.broadcast %c14_i32_8 : i32 to vector<1x256xi32>
    %29 = arith.cmpi sle, %2, %28 : vector<1x256xi32>
    %c14_i32_9 = arith.constant 14 : i32
    %30 = vector.broadcast %c14_i32_9 : i32 to vector<1x256xi32>
    %31 = arith.cmpi sle, %4, %30 : vector<1x256xi32>
    %32 = arith.andi %29, %31 : vector<1x256xi1>
    %c0 = arith.constant 0 : index
    %c0_10 = arith.constant 0 : index
    %33 = vector.load %arg2[%c0, %c0_10] : memref<4x36xf32, #tpu.memory_space<vmem>>, vector<4x36xf32>
    %c0_11 = arith.constant 0 : index
    %c0_12 = arith.constant 0 : index
    %34 = vector.load %arg4[%c0_11, %c0_12] : memref<4x36xf32, #tpu.memory_space<vmem>>, vector<4x36xf32>
    %c0_13 = arith.constant 0 : index
    %c0_14 = arith.constant 0 : index
    %35 = vector.load %arg3[%c0_13, %c0_14] : memref<4x1xf32, #tpu.memory_space<vmem>>, vector<4x1xf32>
    %c0_15 = arith.constant 0 : index
    %c0_16 = arith.constant 0 : index
    %36 = vector.load %arg5[%c0_15, %c0_16] : memref<4x1xf32, #tpu.memory_space<vmem>>, vector<4x1xf32>
    %c0_17 = arith.constant 0 : index
    %c0_18 = arith.constant 0 : index
    %c0_19 = arith.constant 0 : index
    %37 = vector.load %arg1[%c0_17, %c0_18, %c0_19] : memref<2x4x256xf32, #tpu.memory_space<vmem>>, vector<1x4x256xf32>
    %38 = vector.shape_cast %37 : vector<1x4x256xf32> to vector<4x256xf32>
    %39 = vector.shape_cast %35 : vector<4x1xf32> to vector<4x1xf32>
    %40 = vector.broadcast %39 : vector<4x1xf32> to vector<4x256xf32>
    %c17_i32 = arith.constant 17 : i32
    %41 = tpu.dynamic_rotate %38 by %c17_i32 dim 1 : vector<4x256xf32>, i32 -> vector<4x256xf32>
    %cst = arith.constant 0.000000e+00 : f32
    %42 = vector.shape_cast %9 : vector<1x256xi1> to vector<1x256xi1>
    %43 = vector.broadcast %42 : vector<1x256xi1> to vector<4x256xi1>
    %44 = vector.broadcast %cst : f32 to vector<4x256xf32>
    %45 = arith.select %43, %41, %44 : vector<4x256xi1>, vector<4x256xf32>
    %46 = vector.extract_strided_slice %45 {offsets = [0, 0], sizes = [1, 256], strides = [1, 1]} : vector<4x256xf32> to vector<1x256xf32>
    %47 = vector.extract_strided_slice %33 {offsets = [0, 0], sizes = [4, 1], strides = [1, 1]} : vector<4x36xf32> to vector<4x1xf32>
    %48 = vector.broadcast %47 : vector<4x1xf32> to vector<4x256xf32>
    %49 = vector.broadcast %46 : vector<1x256xf32> to vector<4x256xf32>
    %50 = arith.mulf %48, %49 : vector<4x256xf32>
    %51 = arith.addf %40, %50 : vector<4x256xf32>
    %52 = vector.extract_strided_slice %45 {offsets = [1, 0], sizes = [1, 256], strides = [1, 1]} : vector<4x256xf32> to vector<1x256xf32>
    %53 = vector.extract_strided_slice %33 {offsets = [0, 1], sizes = [4, 1], strides = [1, 1]} : vector<4x36xf32> to vector<4x1xf32>
    %54 = vector.broadcast %53 : vector<4x1xf32> to vector<4x256xf32>
    %55 = vector.broadcast %52 : vector<1x256xf32> to vector<4x256xf32>
    %56 = arith.mulf %54, %55 : vector<4x256xf32>
    %57 = arith.addf %51, %56 : vector<4x256xf32>
    %58 = vector.extract_strided_slice %45 {offsets = [2, 0], sizes = [1, 256], strides = [1, 1]} : vector<4x256xf32> to vector<1x256xf32>
    %59 = vector.extract_strided_slice %33 {offsets = [0, 2], sizes = [4, 1], strides = [1, 1]} : vector<4x36xf32> to vector<4x1xf32>
    %60 = vector.broadcast %59 : vector<4x1xf32> to vector<4x256xf32>
    %61 = vector.broadcast %58 : vector<1x256xf32> to vector<4x256xf32>
    %62 = arith.mulf %60, %61 : vector<4x256xf32>
    %63 = arith.addf %57, %62 : vector<4x256xf32>
    %64 = vector.extract_strided_slice %45 {offsets = [3, 0], sizes = [1, 256], strides = [1, 1]} : vector<4x256xf32> to vector<1x256xf32>
    %65 = vector.extract_strided_slice %33 {offsets = [0, 3], sizes = [4, 1], strides = [1, 1]} : vector<4x36xf32> to vector<4x1xf32>
    %66 = vector.broadcast %65 : vector<4x1xf32> to vector<4x256xf32>
    %67 = vector.broadcast %64 : vector<1x256xf32> to vector<4x256xf32>
    %68 = arith.mulf %66, %67 : vector<4x256xf32>
    %69 = arith.addf %63, %68 : vector<4x256xf32>
    %c16_i32 = arith.constant 16 : i32
    %70 = tpu.dynamic_rotate %38 by %c16_i32 dim 1 : vector<4x256xf32>, i32 -> vector<4x256xf32>
    %cst_20 = arith.constant 0.000000e+00 : f32
    %71 = vector.shape_cast %11 : vector<1x256xi1> to vector<1x256xi1>
    %72 = vector.broadcast %71 : vector<1x256xi1> to vector<4x256xi1>
    %73 = vector.broadcast %cst_20 : f32 to vector<4x256xf32>
    %74 = arith.select %72, %70, %73 : vector<4x256xi1>, vector<4x256xf32>
    %75 = vector.extract_strided_slice %74 {offsets = [0, 0], sizes = [1, 256], strides = [1, 1]} : vector<4x256xf32> to vector<1x256xf32>
    %76 = vector.extract_strided_slice %33 {offsets = [0, 4], sizes = [4, 1], strides = [1, 1]} : vector<4x36xf32> to vector<4x1xf32>
    %77 = vector.broadcast %76 : vector<4x1xf32> to vector<4x256xf32>
    %78 = vector.broadcast %75 : vector<1x256xf32> to vector<4x256xf32>
    %79 = arith.mulf %77, %78 : vector<4x256xf32>
    %80 = arith.addf %69, %79 : vector<4x256xf32>
    %81 = vector.extract_strided_slice %74 {offsets = [1, 0], sizes = [1, 256], strides = [1, 1]} : vector<4x256xf32> to vector<1x256xf32>
    %82 = vector.extract_strided_slice %33 {offsets = [0, 5], sizes = [4, 1], strides = [1, 1]} : vector<4x36xf32> to vector<4x1xf32>
    %83 = vector.broadcast %82 : vector<4x1xf32> to vector<4x256xf32>
    %84 = vector.broadcast %81 : vector<1x256xf32> to vector<4x256xf32>
    %85 = arith.mulf %83, %84 : vector<4x256xf32>
    %86 = arith.addf %80, %85 : vector<4x256xf32>
    %87 = vector.extract_strided_slice %74 {offsets = [2, 0], sizes = [1, 256], strides = [1, 1]} : vector<4x256xf32> to vector<1x256xf32>
    %88 = vector.extract_strided_slice %33 {offsets = [0, 6], sizes = [4, 1], strides = [1, 1]} : vector<4x36xf32> to vector<4x1xf32>
    %89 = vector.broadcast %88 : vector<4x1xf32> to vector<4x256xf32>
    %90 = vector.broadcast %87 : vector<1x256xf32> to vector<4x256xf32>
    %91 = arith.mulf %89, %90 : vector<4x256xf32>
    %92 = arith.addf %86, %91 : vector<4x256xf32>
    %93 = vector.extract_strided_slice %74 {offsets = [3, 0], sizes = [1, 256], strides = [1, 1]} : vector<4x256xf32> to vector<1x256xf32>
    %94 = vector.extract_strided_slice %33 {offsets = [0, 7], sizes = [4, 1], strides = [1, 1]} : vector<4x36xf32> to vector<4x1xf32>
    %95 = vector.broadcast %94 : vector<4x1xf32> to vector<4x256xf32>
    %96 = vector.broadcast %93 : vector<1x256xf32> to vector<4x256xf32>
    %97 = arith.mulf %95, %96 : vector<4x256xf32>
    %98 = arith.addf %92, %97 : vector<4x256xf32>
    %c15_i32_21 = arith.constant 15 : i32
    %99 = tpu.dynamic_rotate %38 by %c15_i32_21 dim 1 : vector<4x256xf32>, i32 -> vector<4x256xf32>
    %cst_22 = arith.constant 0.000000e+00 : f32
    %100 = vector.shape_cast %16 : vector<1x256xi1> to vector<1x256xi1>
    %101 = vector.broadcast %100 : vector<1x256xi1> to vector<4x256xi1>
    %102 = vector.broadcast %cst_22 : f32 to vector<4x256xf32>
    %103 = arith.select %101, %99, %102 : vector<4x256xi1>, vector<4x256xf32>
    %104 = vector.extract_strided_slice %103 {offsets = [0, 0], sizes = [1, 256], strides = [1, 1]} : vector<4x256xf32> to vector<1x256xf32>
    %105 = vector.extract_strided_slice %33 {offsets = [0, 8], sizes = [4, 1], strides = [1, 1]} : vector<4x36xf32> to vector<4x1xf32>
    %106 = vector.broadcast %105 : vector<4x1xf32> to vector<4x256xf32>
    %107 = vector.broadcast %104 : vector<1x256xf32> to vector<4x256xf32>
    %108 = arith.mulf %106, %107 : vector<4x256xf32>
    %109 = arith.addf %98, %108 : vector<4x256xf32>
    %110 = vector.extract_strided_slice %103 {offsets = [1, 0], sizes = [1, 256], strides = [1, 1]} : vector<4x256xf32> to vector<1x256xf32>
    %111 = vector.extract_strided_slice %33 {offsets = [0, 9], sizes = [4, 1], strides = [1, 1]} : vector<4x36xf32> to vector<4x1xf32>
    %112 = vector.broadcast %111 : vector<4x1xf32> to vector<4x256xf32>
    %113 = vector.broadcast %110 : vector<1x256xf32> to vector<4x256xf32>
    %114 = arith.mulf %112, %113 : vector<4x256xf32>
    %115 = arith.addf %109, %114 : vector<4x256xf32>
    %116 = vector.extract_strided_slice %103 {offsets = [2, 0], sizes = [1, 256], strides = [1, 1]} : vector<4x256xf32> to vector<1x256xf32>
    %117 = vector.extract_strided_slice %33 {offsets = [0, 10], sizes = [4, 1], strides = [1, 1]} : vector<4x36xf32> to vector<4x1xf32>
    %118 = vector.broadcast %117 : vector<4x1xf32> to vector<4x256xf32>
    %119 = vector.broadcast %116 : vector<1x256xf32> to vector<4x256xf32>
    %120 = arith.mulf %118, %119 : vector<4x256xf32>
    %121 = arith.addf %115, %120 : vector<4x256xf32>
    %122 = vector.extract_strided_slice %103 {offsets = [3, 0], sizes = [1, 256], strides = [1, 1]} : vector<4x256xf32> to vector<1x256xf32>
    %123 = vector.extract_strided_slice %33 {offsets = [0, 11], sizes = [4, 1], strides = [1, 1]} : vector<4x36xf32> to vector<4x1xf32>
    %124 = vector.broadcast %123 : vector<4x1xf32> to vector<4x256xf32>
    %125 = vector.broadcast %122 : vector<1x256xf32> to vector<4x256xf32>
    %126 = arith.mulf %124, %125 : vector<4x256xf32>
    %127 = arith.addf %121, %126 : vector<4x256xf32>
    %c1_i32_23 = arith.constant 1 : i32
    %128 = tpu.dynamic_rotate %38 by %c1_i32_23 dim 1 : vector<4x256xf32>, i32 -> vector<4x256xf32>
    %cst_24 = arith.constant 0.000000e+00 : f32
    %129 = vector.shape_cast %18 : vector<1x256xi1> to vector<1x256xi1>
    %130 = vector.broadcast %129 : vector<1x256xi1> to vector<4x256xi1>
    %131 = vector.broadcast %cst_24 : f32 to vector<4x256xf32>
    %132 = arith.select %130, %128, %131 : vector<4x256xi1>, vector<4x256xf32>
    %133 = vector.extract_strided_slice %132 {offsets = [0, 0], sizes = [1, 256], strides = [1, 1]} : vector<4x256xf32> to vector<1x256xf32>
    %134 = vector.extract_strided_slice %33 {offsets = [0, 12], sizes = [4, 1], strides = [1, 1]} : vector<4x36xf32> to vector<4x1xf32>
    %135 = vector.broadcast %134 : vector<4x1xf32> to vector<4x256xf32>
    %136 = vector.broadcast %133 : vector<1x256xf32> to vector<4x256xf32>
    %137 = arith.mulf %135, %136 : vector<4x256xf32>
    %138 = arith.addf %127, %137 : vector<4x256xf32>
    %139 = vector.extract_strided_slice %132 {offsets = [1, 0], sizes = [1, 256], strides = [1, 1]} : vector<4x256xf32> to vector<1x256xf32>
    %140 = vector.extract_strided_slice %33 {offsets = [0, 13], sizes = [4, 1], strides = [1, 1]} : vector<4x36xf32> to vector<4x1xf32>
    %141 = vector.broadcast %140 : vector<4x1xf32> to vector<4x256xf32>
    %142 = vector.broadcast %139 : vector<1x256xf32> to vector<4x256xf32>
    %143 = arith.mulf %141, %142 : vector<4x256xf32>
    %144 = arith.addf %138, %143 : vector<4x256xf32>
    %145 = vector.extract_strided_slice %132 {offsets = [2, 0], sizes = [1, 256], strides = [1, 1]} : vector<4x256xf32> to vector<1x256xf32>
    %146 = vector.extract_strided_slice %33 {offsets = [0, 14], sizes = [4, 1], strides = [1, 1]} : vector<4x36xf32> to vector<4x1xf32>
    %147 = vector.broadcast %146 : vector<4x1xf32> to vector<4x256xf32>
    %148 = vector.broadcast %145 : vector<1x256xf32> to vector<4x256xf32>
    %149 = arith.mulf %147, %148 : vector<4x256xf32>
    %150 = arith.addf %144, %149 : vector<4x256xf32>
    %151 = vector.extract_strided_slice %132 {offsets = [3, 0], sizes = [1, 256], strides = [1, 1]} : vector<4x256xf32> to vector<1x256xf32>
    %152 = vector.extract_strided_slice %33 {offsets = [0, 15], sizes = [4, 1], strides = [1, 1]} : vector<4x36xf32> to vector<4x1xf32>
    %153 = vector.broadcast %152 : vector<4x1xf32> to vector<4x256xf32>
    %154 = vector.broadcast %151 : vector<1x256xf32> to vector<4x256xf32>
    %155 = arith.mulf %153, %154 : vector<4x256xf32>
    %156 = arith.addf %150, %155 : vector<4x256xf32>
    %157 = vector.extract_strided_slice %38 {offsets = [0, 0], sizes = [1, 256], strides = [1, 1]} : vector<4x256xf32> to vector<1x256xf32>
    %158 = vector.extract_strided_slice %33 {offsets = [0, 16], sizes = [4, 1], strides = [1, 1]} : vector<4x36xf32> to vector<4x1xf32>
    %159 = vector.broadcast %158 : vector<4x1xf32> to vector<4x256xf32>
    %160 = vector.broadcast %157 : vector<1x256xf32> to vector<4x256xf32>
    %161 = arith.mulf %159, %160 : vector<4x256xf32>
    %162 = arith.addf %156, %161 : vector<4x256xf32>
    %163 = vector.extract_strided_slice %38 {offsets = [1, 0], sizes = [1, 256], strides = [1, 1]} : vector<4x256xf32> to vector<1x256xf32>
    %164 = vector.extract_strided_slice %33 {offsets = [0, 17], sizes = [4, 1], strides = [1, 1]} : vector<4x36xf32> to vector<4x1xf32>
    %165 = vector.broadcast %164 : vector<4x1xf32> to vector<4x256xf32>
    %166 = vector.broadcast %163 : vector<1x256xf32> to vector<4x256xf32>
    %167 = arith.mulf %165, %166 : vector<4x256xf32>
    %168 = arith.addf %162, %167 : vector<4x256xf32>
    %169 = vector.extract_strided_slice %38 {offsets = [2, 0], sizes = [1, 256], strides = [1, 1]} : vector<4x256xf32> to vector<1x256xf32>
    %170 = vector.extract_strided_slice %33 {offsets = [0, 18], sizes = [4, 1], strides = [1, 1]} : vector<4x36xf32> to vector<4x1xf32>
    %171 = vector.broadcast %170 : vector<4x1xf32> to vector<4x256xf32>
    %172 = vector.broadcast %169 : vector<1x256xf32> to vector<4x256xf32>
    %173 = arith.mulf %171, %172 : vector<4x256xf32>
    %174 = arith.addf %168, %173 : vector<4x256xf32>
    %175 = vector.extract_strided_slice %38 {offsets = [3, 0], sizes = [1, 256], strides = [1, 1]} : vector<4x256xf32> to vector<1x256xf32>
    %176 = vector.extract_strided_slice %33 {offsets = [0, 19], sizes = [4, 1], strides = [1, 1]} : vector<4x36xf32> to vector<4x1xf32>
    %177 = vector.broadcast %176 : vector<4x1xf32> to vector<4x256xf32>
    %178 = vector.broadcast %175 : vector<1x256xf32> to vector<4x256xf32>
    %179 = arith.mulf %177, %178 : vector<4x256xf32>
    %180 = arith.addf %174, %179 : vector<4x256xf32>
    %c255_i32 = arith.constant 255 : i32
    %181 = tpu.dynamic_rotate %38 by %c255_i32 dim 1 : vector<4x256xf32>, i32 -> vector<4x256xf32>
    %cst_25 = arith.constant 0.000000e+00 : f32
    %182 = vector.shape_cast %20 : vector<1x256xi1> to vector<1x256xi1>
    %183 = vector.broadcast %182 : vector<1x256xi1> to vector<4x256xi1>
    %184 = vector.broadcast %cst_25 : f32 to vector<4x256xf32>
    %185 = arith.select %183, %181, %184 : vector<4x256xi1>, vector<4x256xf32>
    %186 = vector.extract_strided_slice %185 {offsets = [0, 0], sizes = [1, 256], strides = [1, 1]} : vector<4x256xf32> to vector<1x256xf32>
    %187 = vector.extract_strided_slice %33 {offsets = [0, 20], sizes = [4, 1], strides = [1, 1]} : vector<4x36xf32> to vector<4x1xf32>
    %188 = vector.broadcast %187 : vector<4x1xf32> to vector<4x256xf32>
    %189 = vector.broadcast %186 : vector<1x256xf32> to vector<4x256xf32>
    %190 = arith.mulf %188, %189 : vector<4x256xf32>
    %191 = arith.addf %180, %190 : vector<4x256xf32>
    %192 = vector.extract_strided_slice %185 {offsets = [1, 0], sizes = [1, 256], strides = [1, 1]} : vector<4x256xf32> to vector<1x256xf32>
    %193 = vector.extract_strided_slice %33 {offsets = [0, 21], sizes = [4, 1], strides = [1, 1]} : vector<4x36xf32> to vector<4x1xf32>
    %194 = vector.broadcast %193 : vector<4x1xf32> to vector<4x256xf32>
    %195 = vector.broadcast %192 : vector<1x256xf32> to vector<4x256xf32>
    %196 = arith.mulf %194, %195 : vector<4x256xf32>
    %197 = arith.addf %191, %196 : vector<4x256xf32>
    %198 = vector.extract_strided_slice %185 {offsets = [2, 0], sizes = [1, 256], strides = [1, 1]} : vector<4x256xf32> to vector<1x256xf32>
    %199 = vector.extract_strided_slice %33 {offsets = [0, 22], sizes = [4, 1], strides = [1, 1]} : vector<4x36xf32> to vector<4x1xf32>
    %200 = vector.broadcast %199 : vector<4x1xf32> to vector<4x256xf32>
    %201 = vector.broadcast %198 : vector<1x256xf32> to vector<4x256xf32>
    %202 = arith.mulf %200, %201 : vector<4x256xf32>
    %203 = arith.addf %197, %202 : vector<4x256xf32>
    %204 = vector.extract_strided_slice %185 {offsets = [3, 0], sizes = [1, 256], strides = [1, 1]} : vector<4x256xf32> to vector<1x256xf32>
    %205 = vector.extract_strided_slice %33 {offsets = [0, 23], sizes = [4, 1], strides = [1, 1]} : vector<4x36xf32> to vector<4x1xf32>
    %206 = vector.broadcast %205 : vector<4x1xf32> to vector<4x256xf32>
    %207 = vector.broadcast %204 : vector<1x256xf32> to vector<4x256xf32>
    %208 = arith.mulf %206, %207 : vector<4x256xf32>
    %209 = arith.addf %203, %208 : vector<4x256xf32>
    %c241_i32 = arith.constant 241 : i32
    %210 = tpu.dynamic_rotate %38 by %c241_i32 dim 1 : vector<4x256xf32>, i32 -> vector<4x256xf32>
    %cst_26 = arith.constant 0.000000e+00 : f32
    %211 = vector.shape_cast %25 : vector<1x256xi1> to vector<1x256xi1>
    %212 = vector.broadcast %211 : vector<1x256xi1> to vector<4x256xi1>
    %213 = vector.broadcast %cst_26 : f32 to vector<4x256xf32>
    %214 = arith.select %212, %210, %213 : vector<4x256xi1>, vector<4x256xf32>
    %215 = vector.extract_strided_slice %214 {offsets = [0, 0], sizes = [1, 256], strides = [1, 1]} : vector<4x256xf32> to vector<1x256xf32>
    %216 = vector.extract_strided_slice %33 {offsets = [0, 24], sizes = [4, 1], strides = [1, 1]} : vector<4x36xf32> to vector<4x1xf32>
    %217 = vector.broadcast %216 : vector<4x1xf32> to vector<4x256xf32>
    %218 = vector.broadcast %215 : vector<1x256xf32> to vector<4x256xf32>
    %219 = arith.mulf %217, %218 : vector<4x256xf32>
    %220 = arith.addf %209, %219 : vector<4x256xf32>
    %221 = vector.extract_strided_slice %214 {offsets = [1, 0], sizes = [1, 256], strides = [1, 1]} : vector<4x256xf32> to vector<1x256xf32>
    %222 = vector.extract_strided_slice %33 {offsets = [0, 25], sizes = [4, 1], strides = [1, 1]} : vector<4x36xf32> to vector<4x1xf32>
    %223 = vector.broadcast %222 : vector<4x1xf32> to vector<4x256xf32>
    %224 = vector.broadcast %221 : vector<1x256xf32> to vector<4x256xf32>
    %225 = arith.mulf %223, %224 : vector<4x256xf32>
    %226 = arith.addf %220, %225 : vector<4x256xf32>
    %227 = vector.extract_strided_slice %214 {offsets = [2, 0], sizes = [1, 256], strides = [1, 1]} : vector<4x256xf32> to vector<1x256xf32>
    %228 = vector.extract_strided_slice %33 {offsets = [0, 26], sizes = [4, 1], strides = [1, 1]} : vector<4x36xf32> to vector<4x1xf32>
    %229 = vector.broadcast %228 : vector<4x1xf32> to vector<4x256xf32>
    %230 = vector.broadcast %227 : vector<1x256xf32> to vector<4x256xf32>
    %231 = arith.mulf %229, %230 : vector<4x256xf32>
    %232 = arith.addf %226, %231 : vector<4x256xf32>
    %233 = vector.extract_strided_slice %214 {offsets = [3, 0], sizes = [1, 256], strides = [1, 1]} : vector<4x256xf32> to vector<1x256xf32>
    %234 = vector.extract_strided_slice %33 {offsets = [0, 27], sizes = [4, 1], strides = [1, 1]} : vector<4x36xf32> to vector<4x1xf32>
    %235 = vector.broadcast %234 : vector<4x1xf32> to vector<4x256xf32>
    %236 = vector.broadcast %233 : vector<1x256xf32> to vector<4x256xf32>
    %237 = arith.mulf %235, %236 : vector<4x256xf32>
    %238 = arith.addf %232, %237 : vector<4x256xf32>
    %c240_i32 = arith.constant 240 : i32
    %239 = tpu.dynamic_rotate %38 by %c240_i32 dim 1 : vector<4x256xf32>, i32 -> vector<4x256xf32>
    %cst_27 = arith.constant 0.000000e+00 : f32
    %240 = vector.shape_cast %27 : vector<1x256xi1> to vector<1x256xi1>
    %241 = vector.broadcast %240 : vector<1x256xi1> to vector<4x256xi1>
    %242 = vector.broadcast %cst_27 : f32 to vector<4x256xf32>
    %243 = arith.select %241, %239, %242 : vector<4x256xi1>, vector<4x256xf32>
    %244 = vector.extract_strided_slice %243 {offsets = [0, 0], sizes = [1, 256], strides = [1, 1]} : vector<4x256xf32> to vector<1x256xf32>
    %245 = vector.extract_strided_slice %33 {offsets = [0, 28], sizes = [4, 1], strides = [1, 1]} : vector<4x36xf32> to vector<4x1xf32>
    %246 = vector.broadcast %245 : vector<4x1xf32> to vector<4x256xf32>
    %247 = vector.broadcast %244 : vector<1x256xf32> to vector<4x256xf32>
    %248 = arith.mulf %246, %247 : vector<4x256xf32>
    %249 = arith.addf %238, %248 : vector<4x256xf32>
    %250 = vector.extract_strided_slice %243 {offsets = [1, 0], sizes = [1, 256], strides = [1, 1]} : vector<4x256xf32> to vector<1x256xf32>
    %251 = vector.extract_strided_slice %33 {offsets = [0, 29], sizes = [4, 1], strides = [1, 1]} : vector<4x36xf32> to vector<4x1xf32>
    %252 = vector.broadcast %251 : vector<4x1xf32> to vector<4x256xf32>
    %253 = vector.broadcast %250 : vector<1x256xf32> to vector<4x256xf32>
    %254 = arith.mulf %252, %253 : vector<4x256xf32>
    %255 = arith.addf %249, %254 : vector<4x256xf32>
    %256 = vector.extract_strided_slice %243 {offsets = [2, 0], sizes = [1, 256], strides = [1, 1]} : vector<4x256xf32> to vector<1x256xf32>
    %257 = vector.extract_strided_slice %33 {offsets = [0, 30], sizes = [4, 1], strides = [1, 1]} : vector<4x36xf32> to vector<4x1xf32>
    %258 = vector.broadcast %257 : vector<4x1xf32> to vector<4x256xf32>
    %259 = vector.broadcast %256 : vector<1x256xf32> to vector<4x256xf32>
    %260 = arith.mulf %258, %259 : vector<4x256xf32>
    %261 = arith.addf %255, %260 : vector<4x256xf32>
    %262 = vector.extract_strided_slice %243 {offsets = [3, 0], sizes = [1, 256], strides = [1, 1]} : vector<4x256xf32> to vector<1x256xf32>
    %263 = vector.extract_strided_slice %33 {offsets = [0, 31], sizes = [4, 1], strides = [1, 1]} : vector<4x36xf32> to vector<4x1xf32>
    %264 = vector.broadcast %263 : vector<4x1xf32> to vector<4x256xf32>
    %265 = vector.broadcast %262 : vector<1x256xf32> to vector<4x256xf32>
    %266 = arith.mulf %264, %265 : vector<4x256xf32>
    %267 = arith.addf %261, %266 : vector<4x256xf32>
    %c239_i32 = arith.constant 239 : i32
    %268 = tpu.dynamic_rotate %38 by %c239_i32 dim 1 : vector<4x256xf32>, i32 -> vector<4x256xf32>
    %cst_28 = arith.constant 0.000000e+00 : f32
    %269 = vector.shape_cast %32 : vector<1x256xi1> to vector<1x256xi1>
    %270 = vector.broadcast %269 : vector<1x256xi1> to vector<4x256xi1>
    %271 = vector.broadcast %cst_28 : f32 to vector<4x256xf32>
    %272 = arith.select %270, %268, %271 : vector<4x256xi1>, vector<4x256xf32>
    %273 = vector.extract_strided_slice %272 {offsets = [0, 0], sizes = [1, 256], strides = [1, 1]} : vector<4x256xf32> to vector<1x256xf32>
    %274 = vector.extract_strided_slice %33 {offsets = [0, 32], sizes = [4, 1], strides = [1, 1]} : vector<4x36xf32> to vector<4x1xf32>
    %275 = vector.broadcast %274 : vector<4x1xf32> to vector<4x256xf32>
    %276 = vector.broadcast %273 : vector<1x256xf32> to vector<4x256xf32>
    %277 = arith.mulf %275, %276 : vector<4x256xf32>
    %278 = arith.addf %267, %277 : vector<4x256xf32>
    %279 = vector.extract_strided_slice %272 {offsets = [1, 0], sizes = [1, 256], strides = [1, 1]} : vector<4x256xf32> to vector<1x256xf32>
    %280 = vector.extract_strided_slice %33 {offsets = [0, 33], sizes = [4, 1], strides = [1, 1]} : vector<4x36xf32> to vector<4x1xf32>
    %281 = vector.broadcast %280 : vector<4x1xf32> to vector<4x256xf32>
    %282 = vector.broadcast %279 : vector<1x256xf32> to vector<4x256xf32>
    %283 = arith.mulf %281, %282 : vector<4x256xf32>
    %284 = arith.addf %278, %283 : vector<4x256xf32>
    %285 = vector.extract_strided_slice %272 {offsets = [2, 0], sizes = [1, 256], strides = [1, 1]} : vector<4x256xf32> to vector<1x256xf32>
    %286 = vector.extract_strided_slice %33 {offsets = [0, 34], sizes = [4, 1], strides = [1, 1]} : vector<4x36xf32> to vector<4x1xf32>
    %287 = vector.broadcast %286 : vector<4x1xf32> to vector<4x256xf32>
    %288 = vector.broadcast %285 : vector<1x256xf32> to vector<4x256xf32>
    %289 = arith.mulf %287, %288 : vector<4x256xf32>
    %290 = arith.addf %284, %289 : vector<4x256xf32>
    %291 = vector.extract_strided_slice %272 {offsets = [3, 0], sizes = [1, 256], strides = [1, 1]} : vector<4x256xf32> to vector<1x256xf32>
    %292 = vector.extract_strided_slice %33 {offsets = [0, 35], sizes = [4, 1], strides = [1, 1]} : vector<4x36xf32> to vector<4x1xf32>
    %293 = vector.broadcast %292 : vector<4x1xf32> to vector<4x256xf32>
    %294 = vector.broadcast %291 : vector<1x256xf32> to vector<4x256xf32>
    %295 = arith.mulf %293, %294 : vector<4x256xf32>
    %296 = arith.addf %290, %295 : vector<4x256xf32>
    %cst_29 = arith.constant 0.000000e+00 : f32
    %297 = vector.broadcast %cst_29 : f32 to vector<4x256xf32>
    %298 = arith.maximumf %296, %297 : vector<4x256xf32>
    %299 = vector.shape_cast %36 : vector<4x1xf32> to vector<4x1xf32>
    %300 = vector.broadcast %299 : vector<4x1xf32> to vector<4x256xf32>
    %c17_i32_30 = arith.constant 17 : i32
    %301 = tpu.dynamic_rotate %298 by %c17_i32_30 dim 1 : vector<4x256xf32>, i32 -> vector<4x256xf32>
    %cst_31 = arith.constant 0.000000e+00 : f32
    %302 = vector.shape_cast %9 : vector<1x256xi1> to vector<1x256xi1>
    %303 = vector.broadcast %302 : vector<1x256xi1> to vector<4x256xi1>
    %304 = vector.broadcast %cst_31 : f32 to vector<4x256xf32>
    %305 = arith.select %303, %301, %304 : vector<4x256xi1>, vector<4x256xf32>
    %306 = vector.extract_strided_slice %305 {offsets = [0, 0], sizes = [1, 256], strides = [1, 1]} : vector<4x256xf32> to vector<1x256xf32>
    %307 = vector.extract_strided_slice %34 {offsets = [0, 0], sizes = [4, 1], strides = [1, 1]} : vector<4x36xf32> to vector<4x1xf32>
    %308 = vector.broadcast %307 : vector<4x1xf32> to vector<4x256xf32>
    %309 = vector.broadcast %306 : vector<1x256xf32> to vector<4x256xf32>
    %310 = arith.mulf %308, %309 : vector<4x256xf32>
    %311 = arith.addf %300, %310 : vector<4x256xf32>
    %312 = vector.extract_strided_slice %305 {offsets = [1, 0], sizes = [1, 256], strides = [1, 1]} : vector<4x256xf32> to vector<1x256xf32>
    %313 = vector.extract_strided_slice %34 {offsets = [0, 1], sizes = [4, 1], strides = [1, 1]} : vector<4x36xf32> to vector<4x1xf32>
    %314 = vector.broadcast %313 : vector<4x1xf32> to vector<4x256xf32>
    %315 = vector.broadcast %312 : vector<1x256xf32> to vector<4x256xf32>
    %316 = arith.mulf %314, %315 : vector<4x256xf32>
    %317 = arith.addf %311, %316 : vector<4x256xf32>
    %318 = vector.extract_strided_slice %305 {offsets = [2, 0], sizes = [1, 256], strides = [1, 1]} : vector<4x256xf32> to vector<1x256xf32>
    %319 = vector.extract_strided_slice %34 {offsets = [0, 2], sizes = [4, 1], strides = [1, 1]} : vector<4x36xf32> to vector<4x1xf32>
    %320 = vector.broadcast %319 : vector<4x1xf32> to vector<4x256xf32>
    %321 = vector.broadcast %318 : vector<1x256xf32> to vector<4x256xf32>
    %322 = arith.mulf %320, %321 : vector<4x256xf32>
    %323 = arith.addf %317, %322 : vector<4x256xf32>
    %324 = vector.extract_strided_slice %305 {offsets = [3, 0], sizes = [1, 256], strides = [1, 1]} : vector<4x256xf32> to vector<1x256xf32>
    %325 = vector.extract_strided_slice %34 {offsets = [0, 3], sizes = [4, 1], strides = [1, 1]} : vector<4x36xf32> to vector<4x1xf32>
    %326 = vector.broadcast %325 : vector<4x1xf32> to vector<4x256xf32>
    %327 = vector.broadcast %324 : vector<1x256xf32> to vector<4x256xf32>
    %328 = arith.mulf %326, %327 : vector<4x256xf32>
    %329 = arith.addf %323, %328 : vector<4x256xf32>
    %c16_i32_32 = arith.constant 16 : i32
    %330 = tpu.dynamic_rotate %298 by %c16_i32_32 dim 1 : vector<4x256xf32>, i32 -> vector<4x256xf32>
    %cst_33 = arith.constant 0.000000e+00 : f32
    %331 = vector.shape_cast %11 : vector<1x256xi1> to vector<1x256xi1>
    %332 = vector.broadcast %331 : vector<1x256xi1> to vector<4x256xi1>
    %333 = vector.broadcast %cst_33 : f32 to vector<4x256xf32>
    %334 = arith.select %332, %330, %333 : vector<4x256xi1>, vector<4x256xf32>
    %335 = vector.extract_strided_slice %334 {offsets = [0, 0], sizes = [1, 256], strides = [1, 1]} : vector<4x256xf32> to vector<1x256xf32>
    %336 = vector.extract_strided_slice %34 {offsets = [0, 4], sizes = [4, 1], strides = [1, 1]} : vector<4x36xf32> to vector<4x1xf32>
    %337 = vector.broadcast %336 : vector<4x1xf32> to vector<4x256xf32>
    %338 = vector.broadcast %335 : vector<1x256xf32> to vector<4x256xf32>
    %339 = arith.mulf %337, %338 : vector<4x256xf32>
    %340 = arith.addf %329, %339 : vector<4x256xf32>
    %341 = vector.extract_strided_slice %334 {offsets = [1, 0], sizes = [1, 256], strides = [1, 1]} : vector<4x256xf32> to vector<1x256xf32>
    %342 = vector.extract_strided_slice %34 {offsets = [0, 5], sizes = [4, 1], strides = [1, 1]} : vector<4x36xf32> to vector<4x1xf32>
    %343 = vector.broadcast %342 : vector<4x1xf32> to vector<4x256xf32>
    %344 = vector.broadcast %341 : vector<1x256xf32> to vector<4x256xf32>
    %345 = arith.mulf %343, %344 : vector<4x256xf32>
    %346 = arith.addf %340, %345 : vector<4x256xf32>
    %347 = vector.extract_strided_slice %334 {offsets = [2, 0], sizes = [1, 256], strides = [1, 1]} : vector<4x256xf32> to vector<1x256xf32>
    %348 = vector.extract_strided_slice %34 {offsets = [0, 6], sizes = [4, 1], strides = [1, 1]} : vector<4x36xf32> to vector<4x1xf32>
    %349 = vector.broadcast %348 : vector<4x1xf32> to vector<4x256xf32>
    %350 = vector.broadcast %347 : vector<1x256xf32> to vector<4x256xf32>
    %351 = arith.mulf %349, %350 : vector<4x256xf32>
    %352 = arith.addf %346, %351 : vector<4x256xf32>
    %353 = vector.extract_strided_slice %334 {offsets = [3, 0], sizes = [1, 256], strides = [1, 1]} : vector<4x256xf32> to vector<1x256xf32>
    %354 = vector.extract_strided_slice %34 {offsets = [0, 7], sizes = [4, 1], strides = [1, 1]} : vector<4x36xf32> to vector<4x1xf32>
    %355 = vector.broadcast %354 : vector<4x1xf32> to vector<4x256xf32>
    %356 = vector.broadcast %353 : vector<1x256xf32> to vector<4x256xf32>
    %357 = arith.mulf %355, %356 : vector<4x256xf32>
    %358 = arith.addf %352, %357 : vector<4x256xf32>
    %c15_i32_34 = arith.constant 15 : i32
    %359 = tpu.dynamic_rotate %298 by %c15_i32_34 dim 1 : vector<4x256xf32>, i32 -> vector<4x256xf32>
    %cst_35 = arith.constant 0.000000e+00 : f32
    %360 = vector.shape_cast %16 : vector<1x256xi1> to vector<1x256xi1>
    %361 = vector.broadcast %360 : vector<1x256xi1> to vector<4x256xi1>
    %362 = vector.broadcast %cst_35 : f32 to vector<4x256xf32>
    %363 = arith.select %361, %359, %362 : vector<4x256xi1>, vector<4x256xf32>
    %364 = vector.extract_strided_slice %363 {offsets = [0, 0], sizes = [1, 256], strides = [1, 1]} : vector<4x256xf32> to vector<1x256xf32>
    %365 = vector.extract_strided_slice %34 {offsets = [0, 8], sizes = [4, 1], strides = [1, 1]} : vector<4x36xf32> to vector<4x1xf32>
    %366 = vector.broadcast %365 : vector<4x1xf32> to vector<4x256xf32>
    %367 = vector.broadcast %364 : vector<1x256xf32> to vector<4x256xf32>
    %368 = arith.mulf %366, %367 : vector<4x256xf32>
    %369 = arith.addf %358, %368 : vector<4x256xf32>
    %370 = vector.extract_strided_slice %363 {offsets = [1, 0], sizes = [1, 256], strides = [1, 1]} : vector<4x256xf32> to vector<1x256xf32>
    %371 = vector.extract_strided_slice %34 {offsets = [0, 9], sizes = [4, 1], strides = [1, 1]} : vector<4x36xf32> to vector<4x1xf32>
    %372 = vector.broadcast %371 : vector<4x1xf32> to vector<4x256xf32>
    %373 = vector.broadcast %370 : vector<1x256xf32> to vector<4x256xf32>
    %374 = arith.mulf %372, %373 : vector<4x256xf32>
    %375 = arith.addf %369, %374 : vector<4x256xf32>
    %376 = vector.extract_strided_slice %363 {offsets = [2, 0], sizes = [1, 256], strides = [1, 1]} : vector<4x256xf32> to vector<1x256xf32>
    %377 = vector.extract_strided_slice %34 {offsets = [0, 10], sizes = [4, 1], strides = [1, 1]} : vector<4x36xf32> to vector<4x1xf32>
    %378 = vector.broadcast %377 : vector<4x1xf32> to vector<4x256xf32>
    %379 = vector.broadcast %376 : vector<1x256xf32> to vector<4x256xf32>
    %380 = arith.mulf %378, %379 : vector<4x256xf32>
    %381 = arith.addf %375, %380 : vector<4x256xf32>
    %382 = vector.extract_strided_slice %363 {offsets = [3, 0], sizes = [1, 256], strides = [1, 1]} : vector<4x256xf32> to vector<1x256xf32>
    %383 = vector.extract_strided_slice %34 {offsets = [0, 11], sizes = [4, 1], strides = [1, 1]} : vector<4x36xf32> to vector<4x1xf32>
    %384 = vector.broadcast %383 : vector<4x1xf32> to vector<4x256xf32>
    %385 = vector.broadcast %382 : vector<1x256xf32> to vector<4x256xf32>
    %386 = arith.mulf %384, %385 : vector<4x256xf32>
    %387 = arith.addf %381, %386 : vector<4x256xf32>
    %c1_i32_36 = arith.constant 1 : i32
    %388 = tpu.dynamic_rotate %298 by %c1_i32_36 dim 1 : vector<4x256xf32>, i32 -> vector<4x256xf32>
    %cst_37 = arith.constant 0.000000e+00 : f32
    %389 = vector.shape_cast %18 : vector<1x256xi1> to vector<1x256xi1>
    %390 = vector.broadcast %389 : vector<1x256xi1> to vector<4x256xi1>
    %391 = vector.broadcast %cst_37 : f32 to vector<4x256xf32>
    %392 = arith.select %390, %388, %391 : vector<4x256xi1>, vector<4x256xf32>
    %393 = vector.extract_strided_slice %392 {offsets = [0, 0], sizes = [1, 256], strides = [1, 1]} : vector<4x256xf32> to vector<1x256xf32>
    %394 = vector.extract_strided_slice %34 {offsets = [0, 12], sizes = [4, 1], strides = [1, 1]} : vector<4x36xf32> to vector<4x1xf32>
    %395 = vector.broadcast %394 : vector<4x1xf32> to vector<4x256xf32>
    %396 = vector.broadcast %393 : vector<1x256xf32> to vector<4x256xf32>
    %397 = arith.mulf %395, %396 : vector<4x256xf32>
    %398 = arith.addf %387, %397 : vector<4x256xf32>
    %399 = vector.extract_strided_slice %392 {offsets = [1, 0], sizes = [1, 256], strides = [1, 1]} : vector<4x256xf32> to vector<1x256xf32>
    %400 = vector.extract_strided_slice %34 {offsets = [0, 13], sizes = [4, 1], strides = [1, 1]} : vector<4x36xf32> to vector<4x1xf32>
    %401 = vector.broadcast %400 : vector<4x1xf32> to vector<4x256xf32>
    %402 = vector.broadcast %399 : vector<1x256xf32> to vector<4x256xf32>
    %403 = arith.mulf %401, %402 : vector<4x256xf32>
    %404 = arith.addf %398, %403 : vector<4x256xf32>
    %405 = vector.extract_strided_slice %392 {offsets = [2, 0], sizes = [1, 256], strides = [1, 1]} : vector<4x256xf32> to vector<1x256xf32>
    %406 = vector.extract_strided_slice %34 {offsets = [0, 14], sizes = [4, 1], strides = [1, 1]} : vector<4x36xf32> to vector<4x1xf32>
    %407 = vector.broadcast %406 : vector<4x1xf32> to vector<4x256xf32>
    %408 = vector.broadcast %405 : vector<1x256xf32> to vector<4x256xf32>
    %409 = arith.mulf %407, %408 : vector<4x256xf32>
    %410 = arith.addf %404, %409 : vector<4x256xf32>
    %411 = vector.extract_strided_slice %392 {offsets = [3, 0], sizes = [1, 256], strides = [1, 1]} : vector<4x256xf32> to vector<1x256xf32>
    %412 = vector.extract_strided_slice %34 {offsets = [0, 15], sizes = [4, 1], strides = [1, 1]} : vector<4x36xf32> to vector<4x1xf32>
    %413 = vector.broadcast %412 : vector<4x1xf32> to vector<4x256xf32>
    %414 = vector.broadcast %411 : vector<1x256xf32> to vector<4x256xf32>
    %415 = arith.mulf %413, %414 : vector<4x256xf32>
    %416 = arith.addf %410, %415 : vector<4x256xf32>
    %417 = vector.extract_strided_slice %298 {offsets = [0, 0], sizes = [1, 256], strides = [1, 1]} : vector<4x256xf32> to vector<1x256xf32>
    %418 = vector.extract_strided_slice %34 {offsets = [0, 16], sizes = [4, 1], strides = [1, 1]} : vector<4x36xf32> to vector<4x1xf32>
    %419 = vector.broadcast %418 : vector<4x1xf32> to vector<4x256xf32>
    %420 = vector.broadcast %417 : vector<1x256xf32> to vector<4x256xf32>
    %421 = arith.mulf %419, %420 : vector<4x256xf32>
    %422 = arith.addf %416, %421 : vector<4x256xf32>
    %423 = vector.extract_strided_slice %298 {offsets = [1, 0], sizes = [1, 256], strides = [1, 1]} : vector<4x256xf32> to vector<1x256xf32>
    %424 = vector.extract_strided_slice %34 {offsets = [0, 17], sizes = [4, 1], strides = [1, 1]} : vector<4x36xf32> to vector<4x1xf32>
    %425 = vector.broadcast %424 : vector<4x1xf32> to vector<4x256xf32>
    %426 = vector.broadcast %423 : vector<1x256xf32> to vector<4x256xf32>
    %427 = arith.mulf %425, %426 : vector<4x256xf32>
    %428 = arith.addf %422, %427 : vector<4x256xf32>
    %429 = vector.extract_strided_slice %298 {offsets = [2, 0], sizes = [1, 256], strides = [1, 1]} : vector<4x256xf32> to vector<1x256xf32>
    %430 = vector.extract_strided_slice %34 {offsets = [0, 18], sizes = [4, 1], strides = [1, 1]} : vector<4x36xf32> to vector<4x1xf32>
    %431 = vector.broadcast %430 : vector<4x1xf32> to vector<4x256xf32>
    %432 = vector.broadcast %429 : vector<1x256xf32> to vector<4x256xf32>
    %433 = arith.mulf %431, %432 : vector<4x256xf32>
    %434 = arith.addf %428, %433 : vector<4x256xf32>
    %435 = vector.extract_strided_slice %298 {offsets = [3, 0], sizes = [1, 256], strides = [1, 1]} : vector<4x256xf32> to vector<1x256xf32>
    %436 = vector.extract_strided_slice %34 {offsets = [0, 19], sizes = [4, 1], strides = [1, 1]} : vector<4x36xf32> to vector<4x1xf32>
    %437 = vector.broadcast %436 : vector<4x1xf32> to vector<4x256xf32>
    %438 = vector.broadcast %435 : vector<1x256xf32> to vector<4x256xf32>
    %439 = arith.mulf %437, %438 : vector<4x256xf32>
    %440 = arith.addf %434, %439 : vector<4x256xf32>
    %c255_i32_38 = arith.constant 255 : i32
    %441 = tpu.dynamic_rotate %298 by %c255_i32_38 dim 1 : vector<4x256xf32>, i32 -> vector<4x256xf32>
    %cst_39 = arith.constant 0.000000e+00 : f32
    %442 = vector.shape_cast %20 : vector<1x256xi1> to vector<1x256xi1>
    %443 = vector.broadcast %442 : vector<1x256xi1> to vector<4x256xi1>
    %444 = vector.broadcast %cst_39 : f32 to vector<4x256xf32>
    %445 = arith.select %443, %441, %444 : vector<4x256xi1>, vector<4x256xf32>
    %446 = vector.extract_strided_slice %445 {offsets = [0, 0], sizes = [1, 256], strides = [1, 1]} : vector<4x256xf32> to vector<1x256xf32>
    %447 = vector.extract_strided_slice %34 {offsets = [0, 20], sizes = [4, 1], strides = [1, 1]} : vector<4x36xf32> to vector<4x1xf32>
    %448 = vector.broadcast %447 : vector<4x1xf32> to vector<4x256xf32>
    %449 = vector.broadcast %446 : vector<1x256xf32> to vector<4x256xf32>
    %450 = arith.mulf %448, %449 : vector<4x256xf32>
    %451 = arith.addf %440, %450 : vector<4x256xf32>
    %452 = vector.extract_strided_slice %445 {offsets = [1, 0], sizes = [1, 256], strides = [1, 1]} : vector<4x256xf32> to vector<1x256xf32>
    %453 = vector.extract_strided_slice %34 {offsets = [0, 21], sizes = [4, 1], strides = [1, 1]} : vector<4x36xf32> to vector<4x1xf32>
    %454 = vector.broadcast %453 : vector<4x1xf32> to vector<4x256xf32>
    %455 = vector.broadcast %452 : vector<1x256xf32> to vector<4x256xf32>
    %456 = arith.mulf %454, %455 : vector<4x256xf32>
    %457 = arith.addf %451, %456 : vector<4x256xf32>
    %458 = vector.extract_strided_slice %445 {offsets = [2, 0], sizes = [1, 256], strides = [1, 1]} : vector<4x256xf32> to vector<1x256xf32>
    %459 = vector.extract_strided_slice %34 {offsets = [0, 22], sizes = [4, 1], strides = [1, 1]} : vector<4x36xf32> to vector<4x1xf32>
    %460 = vector.broadcast %459 : vector<4x1xf32> to vector<4x256xf32>
    %461 = vector.broadcast %458 : vector<1x256xf32> to vector<4x256xf32>
    %462 = arith.mulf %460, %461 : vector<4x256xf32>
    %463 = arith.addf %457, %462 : vector<4x256xf32>
    %464 = vector.extract_strided_slice %445 {offsets = [3, 0], sizes = [1, 256], strides = [1, 1]} : vector<4x256xf32> to vector<1x256xf32>
    %465 = vector.extract_strided_slice %34 {offsets = [0, 23], sizes = [4, 1], strides = [1, 1]} : vector<4x36xf32> to vector<4x1xf32>
    %466 = vector.broadcast %465 : vector<4x1xf32> to vector<4x256xf32>
    %467 = vector.broadcast %464 : vector<1x256xf32> to vector<4x256xf32>
    %468 = arith.mulf %466, %467 : vector<4x256xf32>
    %469 = arith.addf %463, %468 : vector<4x256xf32>
    %c241_i32_40 = arith.constant 241 : i32
    %470 = tpu.dynamic_rotate %298 by %c241_i32_40 dim 1 : vector<4x256xf32>, i32 -> vector<4x256xf32>
    %cst_41 = arith.constant 0.000000e+00 : f32
    %471 = vector.shape_cast %25 : vector<1x256xi1> to vector<1x256xi1>
    %472 = vector.broadcast %471 : vector<1x256xi1> to vector<4x256xi1>
    %473 = vector.broadcast %cst_41 : f32 to vector<4x256xf32>
    %474 = arith.select %472, %470, %473 : vector<4x256xi1>, vector<4x256xf32>
    %475 = vector.extract_strided_slice %474 {offsets = [0, 0], sizes = [1, 256], strides = [1, 1]} : vector<4x256xf32> to vector<1x256xf32>
    %476 = vector.extract_strided_slice %34 {offsets = [0, 24], sizes = [4, 1], strides = [1, 1]} : vector<4x36xf32> to vector<4x1xf32>
    %477 = vector.broadcast %476 : vector<4x1xf32> to vector<4x256xf32>
    %478 = vector.broadcast %475 : vector<1x256xf32> to vector<4x256xf32>
    %479 = arith.mulf %477, %478 : vector<4x256xf32>
    %480 = arith.addf %469, %479 : vector<4x256xf32>
    %481 = vector.extract_strided_slice %474 {offsets = [1, 0], sizes = [1, 256], strides = [1, 1]} : vector<4x256xf32> to vector<1x256xf32>
    %482 = vector.extract_strided_slice %34 {offsets = [0, 25], sizes = [4, 1], strides = [1, 1]} : vector<4x36xf32> to vector<4x1xf32>
    %483 = vector.broadcast %482 : vector<4x1xf32> to vector<4x256xf32>
    %484 = vector.broadcast %481 : vector<1x256xf32> to vector<4x256xf32>
    %485 = arith.mulf %483, %484 : vector<4x256xf32>
    %486 = arith.addf %480, %485 : vector<4x256xf32>
    %487 = vector.extract_strided_slice %474 {offsets = [2, 0], sizes = [1, 256], strides = [1, 1]} : vector<4x256xf32> to vector<1x256xf32>
    %488 = vector.extract_strided_slice %34 {offsets = [0, 26], sizes = [4, 1], strides = [1, 1]} : vector<4x36xf32> to vector<4x1xf32>
    %489 = vector.broadcast %488 : vector<4x1xf32> to vector<4x256xf32>
    %490 = vector.broadcast %487 : vector<1x256xf32> to vector<4x256xf32>
    %491 = arith.mulf %489, %490 : vector<4x256xf32>
    %492 = arith.addf %486, %491 : vector<4x256xf32>
    %493 = vector.extract_strided_slice %474 {offsets = [3, 0], sizes = [1, 256], strides = [1, 1]} : vector<4x256xf32> to vector<1x256xf32>
    %494 = vector.extract_strided_slice %34 {offsets = [0, 27], sizes = [4, 1], strides = [1, 1]} : vector<4x36xf32> to vector<4x1xf32>
    %495 = vector.broadcast %494 : vector<4x1xf32> to vector<4x256xf32>
    %496 = vector.broadcast %493 : vector<1x256xf32> to vector<4x256xf32>
    %497 = arith.mulf %495, %496 : vector<4x256xf32>
    %498 = arith.addf %492, %497 : vector<4x256xf32>
    %c240_i32_42 = arith.constant 240 : i32
    %499 = tpu.dynamic_rotate %298 by %c240_i32_42 dim 1 : vector<4x256xf32>, i32 -> vector<4x256xf32>
    %cst_43 = arith.constant 0.000000e+00 : f32
    %500 = vector.shape_cast %27 : vector<1x256xi1> to vector<1x256xi1>
    %501 = vector.broadcast %500 : vector<1x256xi1> to vector<4x256xi1>
    %502 = vector.broadcast %cst_43 : f32 to vector<4x256xf32>
    %503 = arith.select %501, %499, %502 : vector<4x256xi1>, vector<4x256xf32>
    %504 = vector.extract_strided_slice %503 {offsets = [0, 0], sizes = [1, 256], strides = [1, 1]} : vector<4x256xf32> to vector<1x256xf32>
    %505 = vector.extract_strided_slice %34 {offsets = [0, 28], sizes = [4, 1], strides = [1, 1]} : vector<4x36xf32> to vector<4x1xf32>
    %506 = vector.broadcast %505 : vector<4x1xf32> to vector<4x256xf32>
    %507 = vector.broadcast %504 : vector<1x256xf32> to vector<4x256xf32>
    %508 = arith.mulf %506, %507 : vector<4x256xf32>
    %509 = arith.addf %498, %508 : vector<4x256xf32>
    %510 = vector.extract_strided_slice %503 {offsets = [1, 0], sizes = [1, 256], strides = [1, 1]} : vector<4x256xf32> to vector<1x256xf32>
    %511 = vector.extract_strided_slice %34 {offsets = [0, 29], sizes = [4, 1], strides = [1, 1]} : vector<4x36xf32> to vector<4x1xf32>
    %512 = vector.broadcast %511 : vector<4x1xf32> to vector<4x256xf32>
    %513 = vector.broadcast %510 : vector<1x256xf32> to vector<4x256xf32>
    %514 = arith.mulf %512, %513 : vector<4x256xf32>
    %515 = arith.addf %509, %514 : vector<4x256xf32>
    %516 = vector.extract_strided_slice %503 {offsets = [2, 0], sizes = [1, 256], strides = [1, 1]} : vector<4x256xf32> to vector<1x256xf32>
    %517 = vector.extract_strided_slice %34 {offsets = [0, 30], sizes = [4, 1], strides = [1, 1]} : vector<4x36xf32> to vector<4x1xf32>
    %518 = vector.broadcast %517 : vector<4x1xf32> to vector<4x256xf32>
    %519 = vector.broadcast %516 : vector<1x256xf32> to vector<4x256xf32>
    %520 = arith.mulf %518, %519 : vector<4x256xf32>
    %521 = arith.addf %515, %520 : vector<4x256xf32>
    %522 = vector.extract_strided_slice %503 {offsets = [3, 0], sizes = [1, 256], strides = [1, 1]} : vector<4x256xf32> to vector<1x256xf32>
    %523 = vector.extract_strided_slice %34 {offsets = [0, 31], sizes = [4, 1], strides = [1, 1]} : vector<4x36xf32> to vector<4x1xf32>
    %524 = vector.broadcast %523 : vector<4x1xf32> to vector<4x256xf32>
    %525 = vector.broadcast %522 : vector<1x256xf32> to vector<4x256xf32>
    %526 = arith.mulf %524, %525 : vector<4x256xf32>
    %527 = arith.addf %521, %526 : vector<4x256xf32>
    %c239_i32_44 = arith.constant 239 : i32
    %528 = tpu.dynamic_rotate %298 by %c239_i32_44 dim 1 : vector<4x256xf32>, i32 -> vector<4x256xf32>
    %cst_45 = arith.constant 0.000000e+00 : f32
    %529 = vector.shape_cast %32 : vector<1x256xi1> to vector<1x256xi1>
    %530 = vector.broadcast %529 : vector<1x256xi1> to vector<4x256xi1>
    %531 = vector.broadcast %cst_45 : f32 to vector<4x256xf32>
    %532 = arith.select %530, %528, %531 : vector<4x256xi1>, vector<4x256xf32>
    %533 = vector.extract_strided_slice %532 {offsets = [0, 0], sizes = [1, 256], strides = [1, 1]} : vector<4x256xf32> to vector<1x256xf32>
    %534 = vector.extract_strided_slice %34 {offsets = [0, 32], sizes = [4, 1], strides = [1, 1]} : vector<4x36xf32> to vector<4x1xf32>
    %535 = vector.broadcast %534 : vector<4x1xf32> to vector<4x256xf32>
    %536 = vector.broadcast %533 : vector<1x256xf32> to vector<4x256xf32>
    %537 = arith.mulf %535, %536 : vector<4x256xf32>
    %538 = arith.addf %527, %537 : vector<4x256xf32>
    %539 = vector.extract_strided_slice %532 {offsets = [1, 0], sizes = [1, 256], strides = [1, 1]} : vector<4x256xf32> to vector<1x256xf32>
    %540 = vector.extract_strided_slice %34 {offsets = [0, 33], sizes = [4, 1], strides = [1, 1]} : vector<4x36xf32> to vector<4x1xf32>
    %541 = vector.broadcast %540 : vector<4x1xf32> to vector<4x256xf32>
    %542 = vector.broadcast %539 : vector<1x256xf32> to vector<4x256xf32>
    %543 = arith.mulf %541, %542 : vector<4x256xf32>
    %544 = arith.addf %538, %543 : vector<4x256xf32>
    %545 = vector.extract_strided_slice %532 {offsets = [2, 0], sizes = [1, 256], strides = [1, 1]} : vector<4x256xf32> to vector<1x256xf32>
    %546 = vector.extract_strided_slice %34 {offsets = [0, 34], sizes = [4, 1], strides = [1, 1]} : vector<4x36xf32> to vector<4x1xf32>
    %547 = vector.broadcast %546 : vector<4x1xf32> to vector<4x256xf32>
    %548 = vector.broadcast %545 : vector<1x256xf32> to vector<4x256xf32>
    %549 = arith.mulf %547, %548 : vector<4x256xf32>
    %550 = arith.addf %544, %549 : vector<4x256xf32>
    %551 = vector.extract_strided_slice %532 {offsets = [3, 0], sizes = [1, 256], strides = [1, 1]} : vector<4x256xf32> to vector<1x256xf32>
    %552 = vector.extract_strided_slice %34 {offsets = [0, 35], sizes = [4, 1], strides = [1, 1]} : vector<4x36xf32> to vector<4x1xf32>
    %553 = vector.broadcast %552 : vector<4x1xf32> to vector<4x256xf32>
    %554 = vector.broadcast %551 : vector<1x256xf32> to vector<4x256xf32>
    %555 = arith.mulf %553, %554 : vector<4x256xf32>
    %556 = arith.addf %550, %555 : vector<4x256xf32>
    %557 = arith.addf %556, %38 : vector<4x256xf32>
    %c0_46 = arith.constant 0 : index
    %c0_47 = arith.constant 0 : index
    %c0_48 = arith.constant 0 : index
    %558 = vector.load %arg6[%c0_46, %c0_47, %c0_48] : memref<2x4x256xf32, #tpu.memory_space<vmem>>, vector<1x4x256xf32>
    %559 = vector.shape_cast %558 : vector<1x4x256xf32> to vector<4x256xf32>
    %560 = vector.shape_cast %557 : vector<4x256xf32> to vector<1x4x256xf32>
    tpu.vector_store %arg6[%c0_46, %c0_47, %c0_48], %560 {strides = array<i32>} : memref<2x4x256xf32, #tpu.memory_space<vmem>>, vector<1x4x256xf32>,
    %c1 = arith.constant 1 : index
    %c0_49 = arith.constant 0 : index
    %c0_50 = arith.constant 0 : index
    %561 = vector.load %arg1[%c1, %c0_49, %c0_50] : memref<2x4x256xf32, #tpu.memory_space<vmem>>, vector<1x4x256xf32>
    %562 = vector.shape_cast %561 : vector<1x4x256xf32> to vector<4x256xf32>
    %563 = vector.shape_cast %35 : vector<4x1xf32> to vector<4x1xf32>
    %564 = vector.broadcast %563 : vector<4x1xf32> to vector<4x256xf32>
    %c17_i32_51 = arith.constant 17 : i32
    %565 = tpu.dynamic_rotate %562 by %c17_i32_51 dim 1 : vector<4x256xf32>, i32 -> vector<4x256xf32>
    %cst_52 = arith.constant 0.000000e+00 : f32
    %566 = vector.shape_cast %9 : vector<1x256xi1> to vector<1x256xi1>
    %567 = vector.broadcast %566 : vector<1x256xi1> to vector<4x256xi1>
    %568 = vector.broadcast %cst_52 : f32 to vector<4x256xf32>
    %569 = arith.select %567, %565, %568 : vector<4x256xi1>, vector<4x256xf32>
    %570 = vector.extract_strided_slice %569 {offsets = [0, 0], sizes = [1, 256], strides = [1, 1]} : vector<4x256xf32> to vector<1x256xf32>
    %571 = vector.extract_strided_slice %33 {offsets = [0, 0], sizes = [4, 1], strides = [1, 1]} : vector<4x36xf32> to vector<4x1xf32>
    %572 = vector.broadcast %571 : vector<4x1xf32> to vector<4x256xf32>
    %573 = vector.broadcast %570 : vector<1x256xf32> to vector<4x256xf32>
    %574 = arith.mulf %572, %573 : vector<4x256xf32>
    %575 = arith.addf %564, %574 : vector<4x256xf32>
    %576 = vector.extract_strided_slice %569 {offsets = [1, 0], sizes = [1, 256], strides = [1, 1]} : vector<4x256xf32> to vector<1x256xf32>
    %577 = vector.extract_strided_slice %33 {offsets = [0, 1], sizes = [4, 1], strides = [1, 1]} : vector<4x36xf32> to vector<4x1xf32>
    %578 = vector.broadcast %577 : vector<4x1xf32> to vector<4x256xf32>
    %579 = vector.broadcast %576 : vector<1x256xf32> to vector<4x256xf32>
    %580 = arith.mulf %578, %579 : vector<4x256xf32>
    %581 = arith.addf %575, %580 : vector<4x256xf32>
    %582 = vector.extract_strided_slice %569 {offsets = [2, 0], sizes = [1, 256], strides = [1, 1]} : vector<4x256xf32> to vector<1x256xf32>
    %583 = vector.extract_strided_slice %33 {offsets = [0, 2], sizes = [4, 1], strides = [1, 1]} : vector<4x36xf32> to vector<4x1xf32>
    %584 = vector.broadcast %583 : vector<4x1xf32> to vector<4x256xf32>
    %585 = vector.broadcast %582 : vector<1x256xf32> to vector<4x256xf32>
    %586 = arith.mulf %584, %585 : vector<4x256xf32>
    %587 = arith.addf %581, %586 : vector<4x256xf32>
    %588 = vector.extract_strided_slice %569 {offsets = [3, 0], sizes = [1, 256], strides = [1, 1]} : vector<4x256xf32> to vector<1x256xf32>
    %589 = vector.extract_strided_slice %33 {offsets = [0, 3], sizes = [4, 1], strides = [1, 1]} : vector<4x36xf32> to vector<4x1xf32>
    %590 = vector.broadcast %589 : vector<4x1xf32> to vector<4x256xf32>
    %591 = vector.broadcast %588 : vector<1x256xf32> to vector<4x256xf32>
    %592 = arith.mulf %590, %591 : vector<4x256xf32>
    %593 = arith.addf %587, %592 : vector<4x256xf32>
    %c16_i32_53 = arith.constant 16 : i32
    %594 = tpu.dynamic_rotate %562 by %c16_i32_53 dim 1 : vector<4x256xf32>, i32 -> vector<4x256xf32>
    %cst_54 = arith.constant 0.000000e+00 : f32
    %595 = vector.shape_cast %11 : vector<1x256xi1> to vector<1x256xi1>
    %596 = vector.broadcast %595 : vector<1x256xi1> to vector<4x256xi1>
    %597 = vector.broadcast %cst_54 : f32 to vector<4x256xf32>
    %598 = arith.select %596, %594, %597 : vector<4x256xi1>, vector<4x256xf32>
    %599 = vector.extract_strided_slice %598 {offsets = [0, 0], sizes = [1, 256], strides = [1, 1]} : vector<4x256xf32> to vector<1x256xf32>
    %600 = vector.extract_strided_slice %33 {offsets = [0, 4], sizes = [4, 1], strides = [1, 1]} : vector<4x36xf32> to vector<4x1xf32>
    %601 = vector.broadcast %600 : vector<4x1xf32> to vector<4x256xf32>
    %602 = vector.broadcast %599 : vector<1x256xf32> to vector<4x256xf32>
    %603 = arith.mulf %601, %602 : vector<4x256xf32>
    %604 = arith.addf %593, %603 : vector<4x256xf32>
    %605 = vector.extract_strided_slice %598 {offsets = [1, 0], sizes = [1, 256], strides = [1, 1]} : vector<4x256xf32> to vector<1x256xf32>
    %606 = vector.extract_strided_slice %33 {offsets = [0, 5], sizes = [4, 1], strides = [1, 1]} : vector<4x36xf32> to vector<4x1xf32>
    %607 = vector.broadcast %606 : vector<4x1xf32> to vector<4x256xf32>
    %608 = vector.broadcast %605 : vector<1x256xf32> to vector<4x256xf32>
    %609 = arith.mulf %607, %608 : vector<4x256xf32>
    %610 = arith.addf %604, %609 : vector<4x256xf32>
    %611 = vector.extract_strided_slice %598 {offsets = [2, 0], sizes = [1, 256], strides = [1, 1]} : vector<4x256xf32> to vector<1x256xf32>
    %612 = vector.extract_strided_slice %33 {offsets = [0, 6], sizes = [4, 1], strides = [1, 1]} : vector<4x36xf32> to vector<4x1xf32>
    %613 = vector.broadcast %612 : vector<4x1xf32> to vector<4x256xf32>
    %614 = vector.broadcast %611 : vector<1x256xf32> to vector<4x256xf32>
    %615 = arith.mulf %613, %614 : vector<4x256xf32>
    %616 = arith.addf %610, %615 : vector<4x256xf32>
    %617 = vector.extract_strided_slice %598 {offsets = [3, 0], sizes = [1, 256], strides = [1, 1]} : vector<4x256xf32> to vector<1x256xf32>
    %618 = vector.extract_strided_slice %33 {offsets = [0, 7], sizes = [4, 1], strides = [1, 1]} : vector<4x36xf32> to vector<4x1xf32>
    %619 = vector.broadcast %618 : vector<4x1xf32> to vector<4x256xf32>
    %620 = vector.broadcast %617 : vector<1x256xf32> to vector<4x256xf32>
    %621 = arith.mulf %619, %620 : vector<4x256xf32>
    %622 = arith.addf %616, %621 : vector<4x256xf32>
    %c15_i32_55 = arith.constant 15 : i32
    %623 = tpu.dynamic_rotate %562 by %c15_i32_55 dim 1 : vector<4x256xf32>, i32 -> vector<4x256xf32>
    %cst_56 = arith.constant 0.000000e+00 : f32
    %624 = vector.shape_cast %16 : vector<1x256xi1> to vector<1x256xi1>
    %625 = vector.broadcast %624 : vector<1x256xi1> to vector<4x256xi1>
    %626 = vector.broadcast %cst_56 : f32 to vector<4x256xf32>
    %627 = arith.select %625, %623, %626 : vector<4x256xi1>, vector<4x256xf32>
    %628 = vector.extract_strided_slice %627 {offsets = [0, 0], sizes = [1, 256], strides = [1, 1]} : vector<4x256xf32> to vector<1x256xf32>
    %629 = vector.extract_strided_slice %33 {offsets = [0, 8], sizes = [4, 1], strides = [1, 1]} : vector<4x36xf32> to vector<4x1xf32>
    %630 = vector.broadcast %629 : vector<4x1xf32> to vector<4x256xf32>
    %631 = vector.broadcast %628 : vector<1x256xf32> to vector<4x256xf32>
    %632 = arith.mulf %630, %631 : vector<4x256xf32>
    %633 = arith.addf %622, %632 : vector<4x256xf32>
    %634 = vector.extract_strided_slice %627 {offsets = [1, 0], sizes = [1, 256], strides = [1, 1]} : vector<4x256xf32> to vector<1x256xf32>
    %635 = vector.extract_strided_slice %33 {offsets = [0, 9], sizes = [4, 1], strides = [1, 1]} : vector<4x36xf32> to vector<4x1xf32>
    %636 = vector.broadcast %635 : vector<4x1xf32> to vector<4x256xf32>
    %637 = vector.broadcast %634 : vector<1x256xf32> to vector<4x256xf32>
    %638 = arith.mulf %636, %637 : vector<4x256xf32>
    %639 = arith.addf %633, %638 : vector<4x256xf32>
    %640 = vector.extract_strided_slice %627 {offsets = [2, 0], sizes = [1, 256], strides = [1, 1]} : vector<4x256xf32> to vector<1x256xf32>
    %641 = vector.extract_strided_slice %33 {offsets = [0, 10], sizes = [4, 1], strides = [1, 1]} : vector<4x36xf32> to vector<4x1xf32>
    %642 = vector.broadcast %641 : vector<4x1xf32> to vector<4x256xf32>
    %643 = vector.broadcast %640 : vector<1x256xf32> to vector<4x256xf32>
    %644 = arith.mulf %642, %643 : vector<4x256xf32>
    %645 = arith.addf %639, %644 : vector<4x256xf32>
    %646 = vector.extract_strided_slice %627 {offsets = [3, 0], sizes = [1, 256], strides = [1, 1]} : vector<4x256xf32> to vector<1x256xf32>
    %647 = vector.extract_strided_slice %33 {offsets = [0, 11], sizes = [4, 1], strides = [1, 1]} : vector<4x36xf32> to vector<4x1xf32>
    %648 = vector.broadcast %647 : vector<4x1xf32> to vector<4x256xf32>
    %649 = vector.broadcast %646 : vector<1x256xf32> to vector<4x256xf32>
    %650 = arith.mulf %648, %649 : vector<4x256xf32>
    %651 = arith.addf %645, %650 : vector<4x256xf32>
    %c1_i32_57 = arith.constant 1 : i32
    %652 = tpu.dynamic_rotate %562 by %c1_i32_57 dim 1 : vector<4x256xf32>, i32 -> vector<4x256xf32>
    %cst_58 = arith.constant 0.000000e+00 : f32
    %653 = vector.shape_cast %18 : vector<1x256xi1> to vector<1x256xi1>
    %654 = vector.broadcast %653 : vector<1x256xi1> to vector<4x256xi1>
    %655 = vector.broadcast %cst_58 : f32 to vector<4x256xf32>
    %656 = arith.select %654, %652, %655 : vector<4x256xi1>, vector<4x256xf32>
    %657 = vector.extract_strided_slice %656 {offsets = [0, 0], sizes = [1, 256], strides = [1, 1]} : vector<4x256xf32> to vector<1x256xf32>
    %658 = vector.extract_strided_slice %33 {offsets = [0, 12], sizes = [4, 1], strides = [1, 1]} : vector<4x36xf32> to vector<4x1xf32>
    %659 = vector.broadcast %658 : vector<4x1xf32> to vector<4x256xf32>
    %660 = vector.broadcast %657 : vector<1x256xf32> to vector<4x256xf32>
    %661 = arith.mulf %659, %660 : vector<4x256xf32>
    %662 = arith.addf %651, %661 : vector<4x256xf32>
    %663 = vector.extract_strided_slice %656 {offsets = [1, 0], sizes = [1, 256], strides = [1, 1]} : vector<4x256xf32> to vector<1x256xf32>
    %664 = vector.extract_strided_slice %33 {offsets = [0, 13], sizes = [4, 1], strides = [1, 1]} : vector<4x36xf32> to vector<4x1xf32>
    %665 = vector.broadcast %664 : vector<4x1xf32> to vector<4x256xf32>
    %666 = vector.broadcast %663 : vector<1x256xf32> to vector<4x256xf32>
    %667 = arith.mulf %665, %666 : vector<4x256xf32>
    %668 = arith.addf %662, %667 : vector<4x256xf32>
    %669 = vector.extract_strided_slice %656 {offsets = [2, 0], sizes = [1, 256], strides = [1, 1]} : vector<4x256xf32> to vector<1x256xf32>
    %670 = vector.extract_strided_slice %33 {offsets = [0, 14], sizes = [4, 1], strides = [1, 1]} : vector<4x36xf32> to vector<4x1xf32>
    %671 = vector.broadcast %670 : vector<4x1xf32> to vector<4x256xf32>
    %672 = vector.broadcast %669 : vector<1x256xf32> to vector<4x256xf32>
    %673 = arith.mulf %671, %672 : vector<4x256xf32>
    %674 = arith.addf %668, %673 : vector<4x256xf32>
    %675 = vector.extract_strided_slice %656 {offsets = [3, 0], sizes = [1, 256], strides = [1, 1]} : vector<4x256xf32> to vector<1x256xf32>
    %676 = vector.extract_strided_slice %33 {offsets = [0, 15], sizes = [4, 1], strides = [1, 1]} : vector<4x36xf32> to vector<4x1xf32>
    %677 = vector.broadcast %676 : vector<4x1xf32> to vector<4x256xf32>
    %678 = vector.broadcast %675 : vector<1x256xf32> to vector<4x256xf32>
    %679 = arith.mulf %677, %678 : vector<4x256xf32>
    %680 = arith.addf %674, %679 : vector<4x256xf32>
    %681 = vector.extract_strided_slice %562 {offsets = [0, 0], sizes = [1, 256], strides = [1, 1]} : vector<4x256xf32> to vector<1x256xf32>
    %682 = vector.extract_strided_slice %33 {offsets = [0, 16], sizes = [4, 1], strides = [1, 1]} : vector<4x36xf32> to vector<4x1xf32>
    %683 = vector.broadcast %682 : vector<4x1xf32> to vector<4x256xf32>
    %684 = vector.broadcast %681 : vector<1x256xf32> to vector<4x256xf32>
    %685 = arith.mulf %683, %684 : vector<4x256xf32>
    %686 = arith.addf %680, %685 : vector<4x256xf32>
    %687 = vector.extract_strided_slice %562 {offsets = [1, 0], sizes = [1, 256], strides = [1, 1]} : vector<4x256xf32> to vector<1x256xf32>
    %688 = vector.extract_strided_slice %33 {offsets = [0, 17], sizes = [4, 1], strides = [1, 1]} : vector<4x36xf32> to vector<4x1xf32>
    %689 = vector.broadcast %688 : vector<4x1xf32> to vector<4x256xf32>
    %690 = vector.broadcast %687 : vector<1x256xf32> to vector<4x256xf32>
    %691 = arith.mulf %689, %690 : vector<4x256xf32>
    %692 = arith.addf %686, %691 : vector<4x256xf32>
    %693 = vector.extract_strided_slice %562 {offsets = [2, 0], sizes = [1, 256], strides = [1, 1]} : vector<4x256xf32> to vector<1x256xf32>
    %694 = vector.extract_strided_slice %33 {offsets = [0, 18], sizes = [4, 1], strides = [1, 1]} : vector<4x36xf32> to vector<4x1xf32>
    %695 = vector.broadcast %694 : vector<4x1xf32> to vector<4x256xf32>
    %696 = vector.broadcast %693 : vector<1x256xf32> to vector<4x256xf32>
    %697 = arith.mulf %695, %696 : vector<4x256xf32>
    %698 = arith.addf %692, %697 : vector<4x256xf32>
    %699 = vector.extract_strided_slice %562 {offsets = [3, 0], sizes = [1, 256], strides = [1, 1]} : vector<4x256xf32> to vector<1x256xf32>
    %700 = vector.extract_strided_slice %33 {offsets = [0, 19], sizes = [4, 1], strides = [1, 1]} : vector<4x36xf32> to vector<4x1xf32>
    %701 = vector.broadcast %700 : vector<4x1xf32> to vector<4x256xf32>
    %702 = vector.broadcast %699 : vector<1x256xf32> to vector<4x256xf32>
    %703 = arith.mulf %701, %702 : vector<4x256xf32>
    %704 = arith.addf %698, %703 : vector<4x256xf32>
    %c255_i32_59 = arith.constant 255 : i32
    %705 = tpu.dynamic_rotate %562 by %c255_i32_59 dim 1 : vector<4x256xf32>, i32 -> vector<4x256xf32>
    %cst_60 = arith.constant 0.000000e+00 : f32
    %706 = vector.shape_cast %20 : vector<1x256xi1> to vector<1x256xi1>
    %707 = vector.broadcast %706 : vector<1x256xi1> to vector<4x256xi1>
    %708 = vector.broadcast %cst_60 : f32 to vector<4x256xf32>
    %709 = arith.select %707, %705, %708 : vector<4x256xi1>, vector<4x256xf32>
    %710 = vector.extract_strided_slice %709 {offsets = [0, 0], sizes = [1, 256], strides = [1, 1]} : vector<4x256xf32> to vector<1x256xf32>
    %711 = vector.extract_strided_slice %33 {offsets = [0, 20], sizes = [4, 1], strides = [1, 1]} : vector<4x36xf32> to vector<4x1xf32>
    %712 = vector.broadcast %711 : vector<4x1xf32> to vector<4x256xf32>
    %713 = vector.broadcast %710 : vector<1x256xf32> to vector<4x256xf32>
    %714 = arith.mulf %712, %713 : vector<4x256xf32>
    %715 = arith.addf %704, %714 : vector<4x256xf32>
    %716 = vector.extract_strided_slice %709 {offsets = [1, 0], sizes = [1, 256], strides = [1, 1]} : vector<4x256xf32> to vector<1x256xf32>
    %717 = vector.extract_strided_slice %33 {offsets = [0, 21], sizes = [4, 1], strides = [1, 1]} : vector<4x36xf32> to vector<4x1xf32>
    %718 = vector.broadcast %717 : vector<4x1xf32> to vector<4x256xf32>
    %719 = vector.broadcast %716 : vector<1x256xf32> to vector<4x256xf32>
    %720 = arith.mulf %718, %719 : vector<4x256xf32>
    %721 = arith.addf %715, %720 : vector<4x256xf32>
    %722 = vector.extract_strided_slice %709 {offsets = [2, 0], sizes = [1, 256], strides = [1, 1]} : vector<4x256xf32> to vector<1x256xf32>
    %723 = vector.extract_strided_slice %33 {offsets = [0, 22], sizes = [4, 1], strides = [1, 1]} : vector<4x36xf32> to vector<4x1xf32>
    %724 = vector.broadcast %723 : vector<4x1xf32> to vector<4x256xf32>
    %725 = vector.broadcast %722 : vector<1x256xf32> to vector<4x256xf32>
    %726 = arith.mulf %724, %725 : vector<4x256xf32>
    %727 = arith.addf %721, %726 : vector<4x256xf32>
    %728 = vector.extract_strided_slice %709 {offsets = [3, 0], sizes = [1, 256], strides = [1, 1]} : vector<4x256xf32> to vector<1x256xf32>
    %729 = vector.extract_strided_slice %33 {offsets = [0, 23], sizes = [4, 1], strides = [1, 1]} : vector<4x36xf32> to vector<4x1xf32>
    %730 = vector.broadcast %729 : vector<4x1xf32> to vector<4x256xf32>
    %731 = vector.broadcast %728 : vector<1x256xf32> to vector<4x256xf32>
    %732 = arith.mulf %730, %731 : vector<4x256xf32>
    %733 = arith.addf %727, %732 : vector<4x256xf32>
    %c241_i32_61 = arith.constant 241 : i32
    %734 = tpu.dynamic_rotate %562 by %c241_i32_61 dim 1 : vector<4x256xf32>, i32 -> vector<4x256xf32>
    %cst_62 = arith.constant 0.000000e+00 : f32
    %735 = vector.shape_cast %25 : vector<1x256xi1> to vector<1x256xi1>
    %736 = vector.broadcast %735 : vector<1x256xi1> to vector<4x256xi1>
    %737 = vector.broadcast %cst_62 : f32 to vector<4x256xf32>
    %738 = arith.select %736, %734, %737 : vector<4x256xi1>, vector<4x256xf32>
    %739 = vector.extract_strided_slice %738 {offsets = [0, 0], sizes = [1, 256], strides = [1, 1]} : vector<4x256xf32> to vector<1x256xf32>
    %740 = vector.extract_strided_slice %33 {offsets = [0, 24], sizes = [4, 1], strides = [1, 1]} : vector<4x36xf32> to vector<4x1xf32>
    %741 = vector.broadcast %740 : vector<4x1xf32> to vector<4x256xf32>
    %742 = vector.broadcast %739 : vector<1x256xf32> to vector<4x256xf32>
    %743 = arith.mulf %741, %742 : vector<4x256xf32>
    %744 = arith.addf %733, %743 : vector<4x256xf32>
    %745 = vector.extract_strided_slice %738 {offsets = [1, 0], sizes = [1, 256], strides = [1, 1]} : vector<4x256xf32> to vector<1x256xf32>
    %746 = vector.extract_strided_slice %33 {offsets = [0, 25], sizes = [4, 1], strides = [1, 1]} : vector<4x36xf32> to vector<4x1xf32>
    %747 = vector.broadcast %746 : vector<4x1xf32> to vector<4x256xf32>
    %748 = vector.broadcast %745 : vector<1x256xf32> to vector<4x256xf32>
    %749 = arith.mulf %747, %748 : vector<4x256xf32>
    %750 = arith.addf %744, %749 : vector<4x256xf32>
    %751 = vector.extract_strided_slice %738 {offsets = [2, 0], sizes = [1, 256], strides = [1, 1]} : vector<4x256xf32> to vector<1x256xf32>
    %752 = vector.extract_strided_slice %33 {offsets = [0, 26], sizes = [4, 1], strides = [1, 1]} : vector<4x36xf32> to vector<4x1xf32>
    %753 = vector.broadcast %752 : vector<4x1xf32> to vector<4x256xf32>
    %754 = vector.broadcast %751 : vector<1x256xf32> to vector<4x256xf32>
    %755 = arith.mulf %753, %754 : vector<4x256xf32>
    %756 = arith.addf %750, %755 : vector<4x256xf32>
    %757 = vector.extract_strided_slice %738 {offsets = [3, 0], sizes = [1, 256], strides = [1, 1]} : vector<4x256xf32> to vector<1x256xf32>
    %758 = vector.extract_strided_slice %33 {offsets = [0, 27], sizes = [4, 1], strides = [1, 1]} : vector<4x36xf32> to vector<4x1xf32>
    %759 = vector.broadcast %758 : vector<4x1xf32> to vector<4x256xf32>
    %760 = vector.broadcast %757 : vector<1x256xf32> to vector<4x256xf32>
    %761 = arith.mulf %759, %760 : vector<4x256xf32>
    %762 = arith.addf %756, %761 : vector<4x256xf32>
    %c240_i32_63 = arith.constant 240 : i32
    %763 = tpu.dynamic_rotate %562 by %c240_i32_63 dim 1 : vector<4x256xf32>, i32 -> vector<4x256xf32>
    %cst_64 = arith.constant 0.000000e+00 : f32
    %764 = vector.shape_cast %27 : vector<1x256xi1> to vector<1x256xi1>
    %765 = vector.broadcast %764 : vector<1x256xi1> to vector<4x256xi1>
    %766 = vector.broadcast %cst_64 : f32 to vector<4x256xf32>
    %767 = arith.select %765, %763, %766 : vector<4x256xi1>, vector<4x256xf32>
    %768 = vector.extract_strided_slice %767 {offsets = [0, 0], sizes = [1, 256], strides = [1, 1]} : vector<4x256xf32> to vector<1x256xf32>
    %769 = vector.extract_strided_slice %33 {offsets = [0, 28], sizes = [4, 1], strides = [1, 1]} : vector<4x36xf32> to vector<4x1xf32>
    %770 = vector.broadcast %769 : vector<4x1xf32> to vector<4x256xf32>
    %771 = vector.broadcast %768 : vector<1x256xf32> to vector<4x256xf32>
    %772 = arith.mulf %770, %771 : vector<4x256xf32>
    %773 = arith.addf %762, %772 : vector<4x256xf32>
    %774 = vector.extract_strided_slice %767 {offsets = [1, 0], sizes = [1, 256], strides = [1, 1]} : vector<4x256xf32> to vector<1x256xf32>
    %775 = vector.extract_strided_slice %33 {offsets = [0, 29], sizes = [4, 1], strides = [1, 1]} : vector<4x36xf32> to vector<4x1xf32>
    %776 = vector.broadcast %775 : vector<4x1xf32> to vector<4x256xf32>
    %777 = vector.broadcast %774 : vector<1x256xf32> to vector<4x256xf32>
    %778 = arith.mulf %776, %777 : vector<4x256xf32>
    %779 = arith.addf %773, %778 : vector<4x256xf32>
    %780 = vector.extract_strided_slice %767 {offsets = [2, 0], sizes = [1, 256], strides = [1, 1]} : vector<4x256xf32> to vector<1x256xf32>
    %781 = vector.extract_strided_slice %33 {offsets = [0, 30], sizes = [4, 1], strides = [1, 1]} : vector<4x36xf32> to vector<4x1xf32>
    %782 = vector.broadcast %781 : vector<4x1xf32> to vector<4x256xf32>
    %783 = vector.broadcast %780 : vector<1x256xf32> to vector<4x256xf32>
    %784 = arith.mulf %782, %783 : vector<4x256xf32>
    %785 = arith.addf %779, %784 : vector<4x256xf32>
    %786 = vector.extract_strided_slice %767 {offsets = [3, 0], sizes = [1, 256], strides = [1, 1]} : vector<4x256xf32> to vector<1x256xf32>
    %787 = vector.extract_strided_slice %33 {offsets = [0, 31], sizes = [4, 1], strides = [1, 1]} : vector<4x36xf32> to vector<4x1xf32>
    %788 = vector.broadcast %787 : vector<4x1xf32> to vector<4x256xf32>
    %789 = vector.broadcast %786 : vector<1x256xf32> to vector<4x256xf32>
    %790 = arith.mulf %788, %789 : vector<4x256xf32>
    %791 = arith.addf %785, %790 : vector<4x256xf32>
    %c239_i32_65 = arith.constant 239 : i32
    %792 = tpu.dynamic_rotate %562 by %c239_i32_65 dim 1 : vector<4x256xf32>, i32 -> vector<4x256xf32>
    %cst_66 = arith.constant 0.000000e+00 : f32
    %793 = vector.shape_cast %32 : vector<1x256xi1> to vector<1x256xi1>
    %794 = vector.broadcast %793 : vector<1x256xi1> to vector<4x256xi1>
    %795 = vector.broadcast %cst_66 : f32 to vector<4x256xf32>
    %796 = arith.select %794, %792, %795 : vector<4x256xi1>, vector<4x256xf32>
    %797 = vector.extract_strided_slice %796 {offsets = [0, 0], sizes = [1, 256], strides = [1, 1]} : vector<4x256xf32> to vector<1x256xf32>
    %798 = vector.extract_strided_slice %33 {offsets = [0, 32], sizes = [4, 1], strides = [1, 1]} : vector<4x36xf32> to vector<4x1xf32>
    %799 = vector.broadcast %798 : vector<4x1xf32> to vector<4x256xf32>
    %800 = vector.broadcast %797 : vector<1x256xf32> to vector<4x256xf32>
    %801 = arith.mulf %799, %800 : vector<4x256xf32>
    %802 = arith.addf %791, %801 : vector<4x256xf32>
    %803 = vector.extract_strided_slice %796 {offsets = [1, 0], sizes = [1, 256], strides = [1, 1]} : vector<4x256xf32> to vector<1x256xf32>
    %804 = vector.extract_strided_slice %33 {offsets = [0, 33], sizes = [4, 1], strides = [1, 1]} : vector<4x36xf32> to vector<4x1xf32>
    %805 = vector.broadcast %804 : vector<4x1xf32> to vector<4x256xf32>
    %806 = vector.broadcast %803 : vector<1x256xf32> to vector<4x256xf32>
    %807 = arith.mulf %805, %806 : vector<4x256xf32>
    %808 = arith.addf %802, %807 : vector<4x256xf32>
    %809 = vector.extract_strided_slice %796 {offsets = [2, 0], sizes = [1, 256], strides = [1, 1]} : vector<4x256xf32> to vector<1x256xf32>
    %810 = vector.extract_strided_slice %33 {offsets = [0, 34], sizes = [4, 1], strides = [1, 1]} : vector<4x36xf32> to vector<4x1xf32>
    %811 = vector.broadcast %810 : vector<4x1xf32> to vector<4x256xf32>
    %812 = vector.broadcast %809 : vector<1x256xf32> to vector<4x256xf32>
    %813 = arith.mulf %811, %812 : vector<4x256xf32>
    %814 = arith.addf %808, %813 : vector<4x256xf32>
    %815 = vector.extract_strided_slice %796 {offsets = [3, 0], sizes = [1, 256], strides = [1, 1]} : vector<4x256xf32> to vector<1x256xf32>
    %816 = vector.extract_strided_slice %33 {offsets = [0, 35], sizes = [4, 1], strides = [1, 1]} : vector<4x36xf32> to vector<4x1xf32>
    %817 = vector.broadcast %816 : vector<4x1xf32> to vector<4x256xf32>
    %818 = vector.broadcast %815 : vector<1x256xf32> to vector<4x256xf32>
    %819 = arith.mulf %817, %818 : vector<4x256xf32>
    %820 = arith.addf %814, %819 : vector<4x256xf32>
    %cst_67 = arith.constant 0.000000e+00 : f32
    %821 = vector.broadcast %cst_67 : f32 to vector<4x256xf32>
    %822 = arith.maximumf %820, %821 : vector<4x256xf32>
    %823 = vector.shape_cast %36 : vector<4x1xf32> to vector<4x1xf32>
    %824 = vector.broadcast %823 : vector<4x1xf32> to vector<4x256xf32>
    %c17_i32_68 = arith.constant 17 : i32
    %825 = tpu.dynamic_rotate %822 by %c17_i32_68 dim 1 : vector<4x256xf32>, i32 -> vector<4x256xf32>
    %cst_69 = arith.constant 0.000000e+00 : f32
    %826 = vector.shape_cast %9 : vector<1x256xi1> to vector<1x256xi1>
    %827 = vector.broadcast %826 : vector<1x256xi1> to vector<4x256xi1>
    %828 = vector.broadcast %cst_69 : f32 to vector<4x256xf32>
    %829 = arith.select %827, %825, %828 : vector<4x256xi1>, vector<4x256xf32>
    %830 = vector.extract_strided_slice %829 {offsets = [0, 0], sizes = [1, 256], strides = [1, 1]} : vector<4x256xf32> to vector<1x256xf32>
    %831 = vector.extract_strided_slice %34 {offsets = [0, 0], sizes = [4, 1], strides = [1, 1]} : vector<4x36xf32> to vector<4x1xf32>
    %832 = vector.broadcast %831 : vector<4x1xf32> to vector<4x256xf32>
    %833 = vector.broadcast %830 : vector<1x256xf32> to vector<4x256xf32>
    %834 = arith.mulf %832, %833 : vector<4x256xf32>
    %835 = arith.addf %824, %834 : vector<4x256xf32>
    %836 = vector.extract_strided_slice %829 {offsets = [1, 0], sizes = [1, 256], strides = [1, 1]} : vector<4x256xf32> to vector<1x256xf32>
    %837 = vector.extract_strided_slice %34 {offsets = [0, 1], sizes = [4, 1], strides = [1, 1]} : vector<4x36xf32> to vector<4x1xf32>
    %838 = vector.broadcast %837 : vector<4x1xf32> to vector<4x256xf32>
    %839 = vector.broadcast %836 : vector<1x256xf32> to vector<4x256xf32>
    %840 = arith.mulf %838, %839 : vector<4x256xf32>
    %841 = arith.addf %835, %840 : vector<4x256xf32>
    %842 = vector.extract_strided_slice %829 {offsets = [2, 0], sizes = [1, 256], strides = [1, 1]} : vector<4x256xf32> to vector<1x256xf32>
    %843 = vector.extract_strided_slice %34 {offsets = [0, 2], sizes = [4, 1], strides = [1, 1]} : vector<4x36xf32> to vector<4x1xf32>
    %844 = vector.broadcast %843 : vector<4x1xf32> to vector<4x256xf32>
    %845 = vector.broadcast %842 : vector<1x256xf32> to vector<4x256xf32>
    %846 = arith.mulf %844, %845 : vector<4x256xf32>
    %847 = arith.addf %841, %846 : vector<4x256xf32>
    %848 = vector.extract_strided_slice %829 {offsets = [3, 0], sizes = [1, 256], strides = [1, 1]} : vector<4x256xf32> to vector<1x256xf32>
    %849 = vector.extract_strided_slice %34 {offsets = [0, 3], sizes = [4, 1], strides = [1, 1]} : vector<4x36xf32> to vector<4x1xf32>
    %850 = vector.broadcast %849 : vector<4x1xf32> to vector<4x256xf32>
    %851 = vector.broadcast %848 : vector<1x256xf32> to vector<4x256xf32>
    %852 = arith.mulf %850, %851 : vector<4x256xf32>
    %853 = arith.addf %847, %852 : vector<4x256xf32>
    %c16_i32_70 = arith.constant 16 : i32
    %854 = tpu.dynamic_rotate %822 by %c16_i32_70 dim 1 : vector<4x256xf32>, i32 -> vector<4x256xf32>
    %cst_71 = arith.constant 0.000000e+00 : f32
    %855 = vector.shape_cast %11 : vector<1x256xi1> to vector<1x256xi1>
    %856 = vector.broadcast %855 : vector<1x256xi1> to vector<4x256xi1>
    %857 = vector.broadcast %cst_71 : f32 to vector<4x256xf32>
    %858 = arith.select %856, %854, %857 : vector<4x256xi1>, vector<4x256xf32>
    %859 = vector.extract_strided_slice %858 {offsets = [0, 0], sizes = [1, 256], strides = [1, 1]} : vector<4x256xf32> to vector<1x256xf32>
    %860 = vector.extract_strided_slice %34 {offsets = [0, 4], sizes = [4, 1], strides = [1, 1]} : vector<4x36xf32> to vector<4x1xf32>
    %861 = vector.broadcast %860 : vector<4x1xf32> to vector<4x256xf32>
    %862 = vector.broadcast %859 : vector<1x256xf32> to vector<4x256xf32>
    %863 = arith.mulf %861, %862 : vector<4x256xf32>
    %864 = arith.addf %853, %863 : vector<4x256xf32>
    %865 = vector.extract_strided_slice %858 {offsets = [1, 0], sizes = [1, 256], strides = [1, 1]} : vector<4x256xf32> to vector<1x256xf32>
    %866 = vector.extract_strided_slice %34 {offsets = [0, 5], sizes = [4, 1], strides = [1, 1]} : vector<4x36xf32> to vector<4x1xf32>
    %867 = vector.broadcast %866 : vector<4x1xf32> to vector<4x256xf32>
    %868 = vector.broadcast %865 : vector<1x256xf32> to vector<4x256xf32>
    %869 = arith.mulf %867, %868 : vector<4x256xf32>
    %870 = arith.addf %864, %869 : vector<4x256xf32>
    %871 = vector.extract_strided_slice %858 {offsets = [2, 0], sizes = [1, 256], strides = [1, 1]} : vector<4x256xf32> to vector<1x256xf32>
    %872 = vector.extract_strided_slice %34 {offsets = [0, 6], sizes = [4, 1], strides = [1, 1]} : vector<4x36xf32> to vector<4x1xf32>
    %873 = vector.broadcast %872 : vector<4x1xf32> to vector<4x256xf32>
    %874 = vector.broadcast %871 : vector<1x256xf32> to vector<4x256xf32>
    %875 = arith.mulf %873, %874 : vector<4x256xf32>
    %876 = arith.addf %870, %875 : vector<4x256xf32>
    %877 = vector.extract_strided_slice %858 {offsets = [3, 0], sizes = [1, 256], strides = [1, 1]} : vector<4x256xf32> to vector<1x256xf32>
    %878 = vector.extract_strided_slice %34 {offsets = [0, 7], sizes = [4, 1], strides = [1, 1]} : vector<4x36xf32> to vector<4x1xf32>
    %879 = vector.broadcast %878 : vector<4x1xf32> to vector<4x256xf32>
    %880 = vector.broadcast %877 : vector<1x256xf32> to vector<4x256xf32>
    %881 = arith.mulf %879, %880 : vector<4x256xf32>
    %882 = arith.addf %876, %881 : vector<4x256xf32>
    %c15_i32_72 = arith.constant 15 : i32
    %883 = tpu.dynamic_rotate %822 by %c15_i32_72 dim 1 : vector<4x256xf32>, i32 -> vector<4x256xf32>
    %cst_73 = arith.constant 0.000000e+00 : f32
    %884 = vector.shape_cast %16 : vector<1x256xi1> to vector<1x256xi1>
    %885 = vector.broadcast %884 : vector<1x256xi1> to vector<4x256xi1>
    %886 = vector.broadcast %cst_73 : f32 to vector<4x256xf32>
    %887 = arith.select %885, %883, %886 : vector<4x256xi1>, vector<4x256xf32>
    %888 = vector.extract_strided_slice %887 {offsets = [0, 0], sizes = [1, 256], strides = [1, 1]} : vector<4x256xf32> to vector<1x256xf32>
    %889 = vector.extract_strided_slice %34 {offsets = [0, 8], sizes = [4, 1], strides = [1, 1]} : vector<4x36xf32> to vector<4x1xf32>
    %890 = vector.broadcast %889 : vector<4x1xf32> to vector<4x256xf32>
    %891 = vector.broadcast %888 : vector<1x256xf32> to vector<4x256xf32>
    %892 = arith.mulf %890, %891 : vector<4x256xf32>
    %893 = arith.addf %882, %892 : vector<4x256xf32>
    %894 = vector.extract_strided_slice %887 {offsets = [1, 0], sizes = [1, 256], strides = [1, 1]} : vector<4x256xf32> to vector<1x256xf32>
    %895 = vector.extract_strided_slice %34 {offsets = [0, 9], sizes = [4, 1], strides = [1, 1]} : vector<4x36xf32> to vector<4x1xf32>
    %896 = vector.broadcast %895 : vector<4x1xf32> to vector<4x256xf32>
    %897 = vector.broadcast %894 : vector<1x256xf32> to vector<4x256xf32>
    %898 = arith.mulf %896, %897 : vector<4x256xf32>
    %899 = arith.addf %893, %898 : vector<4x256xf32>
    %900 = vector.extract_strided_slice %887 {offsets = [2, 0], sizes = [1, 256], strides = [1, 1]} : vector<4x256xf32> to vector<1x256xf32>
    %901 = vector.extract_strided_slice %34 {offsets = [0, 10], sizes = [4, 1], strides = [1, 1]} : vector<4x36xf32> to vector<4x1xf32>
    %902 = vector.broadcast %901 : vector<4x1xf32> to vector<4x256xf32>
    %903 = vector.broadcast %900 : vector<1x256xf32> to vector<4x256xf32>
    %904 = arith.mulf %902, %903 : vector<4x256xf32>
    %905 = arith.addf %899, %904 : vector<4x256xf32>
    %906 = vector.extract_strided_slice %887 {offsets = [3, 0], sizes = [1, 256], strides = [1, 1]} : vector<4x256xf32> to vector<1x256xf32>
    %907 = vector.extract_strided_slice %34 {offsets = [0, 11], sizes = [4, 1], strides = [1, 1]} : vector<4x36xf32> to vector<4x1xf32>
    %908 = vector.broadcast %907 : vector<4x1xf32> to vector<4x256xf32>
    %909 = vector.broadcast %906 : vector<1x256xf32> to vector<4x256xf32>
    %910 = arith.mulf %908, %909 : vector<4x256xf32>
    %911 = arith.addf %905, %910 : vector<4x256xf32>
    %c1_i32_74 = arith.constant 1 : i32
    %912 = tpu.dynamic_rotate %822 by %c1_i32_74 dim 1 : vector<4x256xf32>, i32 -> vector<4x256xf32>
    %cst_75 = arith.constant 0.000000e+00 : f32
    %913 = vector.shape_cast %18 : vector<1x256xi1> to vector<1x256xi1>
    %914 = vector.broadcast %913 : vector<1x256xi1> to vector<4x256xi1>
    %915 = vector.broadcast %cst_75 : f32 to vector<4x256xf32>
    %916 = arith.select %914, %912, %915 : vector<4x256xi1>, vector<4x256xf32>
    %917 = vector.extract_strided_slice %916 {offsets = [0, 0], sizes = [1, 256], strides = [1, 1]} : vector<4x256xf32> to vector<1x256xf32>
    %918 = vector.extract_strided_slice %34 {offsets = [0, 12], sizes = [4, 1], strides = [1, 1]} : vector<4x36xf32> to vector<4x1xf32>
    %919 = vector.broadcast %918 : vector<4x1xf32> to vector<4x256xf32>
    %920 = vector.broadcast %917 : vector<1x256xf32> to vector<4x256xf32>
    %921 = arith.mulf %919, %920 : vector<4x256xf32>
    %922 = arith.addf %911, %921 : vector<4x256xf32>
    %923 = vector.extract_strided_slice %916 {offsets = [1, 0], sizes = [1, 256], strides = [1, 1]} : vector<4x256xf32> to vector<1x256xf32>
    %924 = vector.extract_strided_slice %34 {offsets = [0, 13], sizes = [4, 1], strides = [1, 1]} : vector<4x36xf32> to vector<4x1xf32>
    %925 = vector.broadcast %924 : vector<4x1xf32> to vector<4x256xf32>
    %926 = vector.broadcast %923 : vector<1x256xf32> to vector<4x256xf32>
    %927 = arith.mulf %925, %926 : vector<4x256xf32>
    %928 = arith.addf %922, %927 : vector<4x256xf32>
    %929 = vector.extract_strided_slice %916 {offsets = [2, 0], sizes = [1, 256], strides = [1, 1]} : vector<4x256xf32> to vector<1x256xf32>
    %930 = vector.extract_strided_slice %34 {offsets = [0, 14], sizes = [4, 1], strides = [1, 1]} : vector<4x36xf32> to vector<4x1xf32>
    %931 = vector.broadcast %930 : vector<4x1xf32> to vector<4x256xf32>
    %932 = vector.broadcast %929 : vector<1x256xf32> to vector<4x256xf32>
    %933 = arith.mulf %931, %932 : vector<4x256xf32>
    %934 = arith.addf %928, %933 : vector<4x256xf32>
    %935 = vector.extract_strided_slice %916 {offsets = [3, 0], sizes = [1, 256], strides = [1, 1]} : vector<4x256xf32> to vector<1x256xf32>
    %936 = vector.extract_strided_slice %34 {offsets = [0, 15], sizes = [4, 1], strides = [1, 1]} : vector<4x36xf32> to vector<4x1xf32>
    %937 = vector.broadcast %936 : vector<4x1xf32> to vector<4x256xf32>
    %938 = vector.broadcast %935 : vector<1x256xf32> to vector<4x256xf32>
    %939 = arith.mulf %937, %938 : vector<4x256xf32>
    %940 = arith.addf %934, %939 : vector<4x256xf32>
    %941 = vector.extract_strided_slice %822 {offsets = [0, 0], sizes = [1, 256], strides = [1, 1]} : vector<4x256xf32> to vector<1x256xf32>
    %942 = vector.extract_strided_slice %34 {offsets = [0, 16], sizes = [4, 1], strides = [1, 1]} : vector<4x36xf32> to vector<4x1xf32>
    %943 = vector.broadcast %942 : vector<4x1xf32> to vector<4x256xf32>
    %944 = vector.broadcast %941 : vector<1x256xf32> to vector<4x256xf32>
    %945 = arith.mulf %943, %944 : vector<4x256xf32>
    %946 = arith.addf %940, %945 : vector<4x256xf32>
    %947 = vector.extract_strided_slice %822 {offsets = [1, 0], sizes = [1, 256], strides = [1, 1]} : vector<4x256xf32> to vector<1x256xf32>
    %948 = vector.extract_strided_slice %34 {offsets = [0, 17], sizes = [4, 1], strides = [1, 1]} : vector<4x36xf32> to vector<4x1xf32>
    %949 = vector.broadcast %948 : vector<4x1xf32> to vector<4x256xf32>
    %950 = vector.broadcast %947 : vector<1x256xf32> to vector<4x256xf32>
    %951 = arith.mulf %949, %950 : vector<4x256xf32>
    %952 = arith.addf %946, %951 : vector<4x256xf32>
    %953 = vector.extract_strided_slice %822 {offsets = [2, 0], sizes = [1, 256], strides = [1, 1]} : vector<4x256xf32> to vector<1x256xf32>
    %954 = vector.extract_strided_slice %34 {offsets = [0, 18], sizes = [4, 1], strides = [1, 1]} : vector<4x36xf32> to vector<4x1xf32>
    %955 = vector.broadcast %954 : vector<4x1xf32> to vector<4x256xf32>
    %956 = vector.broadcast %953 : vector<1x256xf32> to vector<4x256xf32>
    %957 = arith.mulf %955, %956 : vector<4x256xf32>
    %958 = arith.addf %952, %957 : vector<4x256xf32>
    %959 = vector.extract_strided_slice %822 {offsets = [3, 0], sizes = [1, 256], strides = [1, 1]} : vector<4x256xf32> to vector<1x256xf32>
    %960 = vector.extract_strided_slice %34 {offsets = [0, 19], sizes = [4, 1], strides = [1, 1]} : vector<4x36xf32> to vector<4x1xf32>
    %961 = vector.broadcast %960 : vector<4x1xf32> to vector<4x256xf32>
    %962 = vector.broadcast %959 : vector<1x256xf32> to vector<4x256xf32>
    %963 = arith.mulf %961, %962 : vector<4x256xf32>
    %964 = arith.addf %958, %963 : vector<4x256xf32>
    %c255_i32_76 = arith.constant 255 : i32
    %965 = tpu.dynamic_rotate %822 by %c255_i32_76 dim 1 : vector<4x256xf32>, i32 -> vector<4x256xf32>
    %cst_77 = arith.constant 0.000000e+00 : f32
    %966 = vector.shape_cast %20 : vector<1x256xi1> to vector<1x256xi1>
    %967 = vector.broadcast %966 : vector<1x256xi1> to vector<4x256xi1>
    %968 = vector.broadcast %cst_77 : f32 to vector<4x256xf32>
    %969 = arith.select %967, %965, %968 : vector<4x256xi1>, vector<4x256xf32>
    %970 = vector.extract_strided_slice %969 {offsets = [0, 0], sizes = [1, 256], strides = [1, 1]} : vector<4x256xf32> to vector<1x256xf32>
    %971 = vector.extract_strided_slice %34 {offsets = [0, 20], sizes = [4, 1], strides = [1, 1]} : vector<4x36xf32> to vector<4x1xf32>
    %972 = vector.broadcast %971 : vector<4x1xf32> to vector<4x256xf32>
    %973 = vector.broadcast %970 : vector<1x256xf32> to vector<4x256xf32>
    %974 = arith.mulf %972, %973 : vector<4x256xf32>
    %975 = arith.addf %964, %974 : vector<4x256xf32>
    %976 = vector.extract_strided_slice %969 {offsets = [1, 0], sizes = [1, 256], strides = [1, 1]} : vector<4x256xf32> to vector<1x256xf32>
    %977 = vector.extract_strided_slice %34 {offsets = [0, 21], sizes = [4, 1], strides = [1, 1]} : vector<4x36xf32> to vector<4x1xf32>
    %978 = vector.broadcast %977 : vector<4x1xf32> to vector<4x256xf32>
    %979 = vector.broadcast %976 : vector<1x256xf32> to vector<4x256xf32>
    %980 = arith.mulf %978, %979 : vector<4x256xf32>
    %981 = arith.addf %975, %980 : vector<4x256xf32>
    %982 = vector.extract_strided_slice %969 {offsets = [2, 0], sizes = [1, 256], strides = [1, 1]} : vector<4x256xf32> to vector<1x256xf32>
    %983 = vector.extract_strided_slice %34 {offsets = [0, 22], sizes = [4, 1], strides = [1, 1]} : vector<4x36xf32> to vector<4x1xf32>
    %984 = vector.broadcast %983 : vector<4x1xf32> to vector<4x256xf32>
    %985 = vector.broadcast %982 : vector<1x256xf32> to vector<4x256xf32>
    %986 = arith.mulf %984, %985 : vector<4x256xf32>
    %987 = arith.addf %981, %986 : vector<4x256xf32>
    %988 = vector.extract_strided_slice %969 {offsets = [3, 0], sizes = [1, 256], strides = [1, 1]} : vector<4x256xf32> to vector<1x256xf32>
    %989 = vector.extract_strided_slice %34 {offsets = [0, 23], sizes = [4, 1], strides = [1, 1]} : vector<4x36xf32> to vector<4x1xf32>
    %990 = vector.broadcast %989 : vector<4x1xf32> to vector<4x256xf32>
    %991 = vector.broadcast %988 : vector<1x256xf32> to vector<4x256xf32>
    %992 = arith.mulf %990, %991 : vector<4x256xf32>
    %993 = arith.addf %987, %992 : vector<4x256xf32>
    %c241_i32_78 = arith.constant 241 : i32
    %994 = tpu.dynamic_rotate %822 by %c241_i32_78 dim 1 : vector<4x256xf32>, i32 -> vector<4x256xf32>
    %cst_79 = arith.constant 0.000000e+00 : f32
    %995 = vector.shape_cast %25 : vector<1x256xi1> to vector<1x256xi1>
    %996 = vector.broadcast %995 : vector<1x256xi1> to vector<4x256xi1>
    %997 = vector.broadcast %cst_79 : f32 to vector<4x256xf32>
    %998 = arith.select %996, %994, %997 : vector<4x256xi1>, vector<4x256xf32>
    %999 = vector.extract_strided_slice %998 {offsets = [0, 0], sizes = [1, 256], strides = [1, 1]} : vector<4x256xf32> to vector<1x256xf32>
    %1000 = vector.extract_strided_slice %34 {offsets = [0, 24], sizes = [4, 1], strides = [1, 1]} : vector<4x36xf32> to vector<4x1xf32>
    %1001 = vector.broadcast %1000 : vector<4x1xf32> to vector<4x256xf32>
    %1002 = vector.broadcast %999 : vector<1x256xf32> to vector<4x256xf32>
    %1003 = arith.mulf %1001, %1002 : vector<4x256xf32>
    %1004 = arith.addf %993, %1003 : vector<4x256xf32>
    %1005 = vector.extract_strided_slice %998 {offsets = [1, 0], sizes = [1, 256], strides = [1, 1]} : vector<4x256xf32> to vector<1x256xf32>
    %1006 = vector.extract_strided_slice %34 {offsets = [0, 25], sizes = [4, 1], strides = [1, 1]} : vector<4x36xf32> to vector<4x1xf32>
    %1007 = vector.broadcast %1006 : vector<4x1xf32> to vector<4x256xf32>
    %1008 = vector.broadcast %1005 : vector<1x256xf32> to vector<4x256xf32>
    %1009 = arith.mulf %1007, %1008 : vector<4x256xf32>
    %1010 = arith.addf %1004, %1009 : vector<4x256xf32>
    %1011 = vector.extract_strided_slice %998 {offsets = [2, 0], sizes = [1, 256], strides = [1, 1]} : vector<4x256xf32> to vector<1x256xf32>
    %1012 = vector.extract_strided_slice %34 {offsets = [0, 26], sizes = [4, 1], strides = [1, 1]} : vector<4x36xf32> to vector<4x1xf32>
    %1013 = vector.broadcast %1012 : vector<4x1xf32> to vector<4x256xf32>
    %1014 = vector.broadcast %1011 : vector<1x256xf32> to vector<4x256xf32>
    %1015 = arith.mulf %1013, %1014 : vector<4x256xf32>
    %1016 = arith.addf %1010, %1015 : vector<4x256xf32>
    %1017 = vector.extract_strided_slice %998 {offsets = [3, 0], sizes = [1, 256], strides = [1, 1]} : vector<4x256xf32> to vector<1x256xf32>
    %1018 = vector.extract_strided_slice %34 {offsets = [0, 27], sizes = [4, 1], strides = [1, 1]} : vector<4x36xf32> to vector<4x1xf32>
    %1019 = vector.broadcast %1018 : vector<4x1xf32> to vector<4x256xf32>
    %1020 = vector.broadcast %1017 : vector<1x256xf32> to vector<4x256xf32>
    %1021 = arith.mulf %1019, %1020 : vector<4x256xf32>
    %1022 = arith.addf %1016, %1021 : vector<4x256xf32>
    %c240_i32_80 = arith.constant 240 : i32
    %1023 = tpu.dynamic_rotate %822 by %c240_i32_80 dim 1 : vector<4x256xf32>, i32 -> vector<4x256xf32>
    %cst_81 = arith.constant 0.000000e+00 : f32
    %1024 = vector.shape_cast %27 : vector<1x256xi1> to vector<1x256xi1>
    %1025 = vector.broadcast %1024 : vector<1x256xi1> to vector<4x256xi1>
    %1026 = vector.broadcast %cst_81 : f32 to vector<4x256xf32>
    %1027 = arith.select %1025, %1023, %1026 : vector<4x256xi1>, vector<4x256xf32>
    %1028 = vector.extract_strided_slice %1027 {offsets = [0, 0], sizes = [1, 256], strides = [1, 1]} : vector<4x256xf32> to vector<1x256xf32>
    %1029 = vector.extract_strided_slice %34 {offsets = [0, 28], sizes = [4, 1], strides = [1, 1]} : vector<4x36xf32> to vector<4x1xf32>
    %1030 = vector.broadcast %1029 : vector<4x1xf32> to vector<4x256xf32>
    %1031 = vector.broadcast %1028 : vector<1x256xf32> to vector<4x256xf32>
    %1032 = arith.mulf %1030, %1031 : vector<4x256xf32>
    %1033 = arith.addf %1022, %1032 : vector<4x256xf32>
    %1034 = vector.extract_strided_slice %1027 {offsets = [1, 0], sizes = [1, 256], strides = [1, 1]} : vector<4x256xf32> to vector<1x256xf32>
    %1035 = vector.extract_strided_slice %34 {offsets = [0, 29], sizes = [4, 1], strides = [1, 1]} : vector<4x36xf32> to vector<4x1xf32>
    %1036 = vector.broadcast %1035 : vector<4x1xf32> to vector<4x256xf32>
    %1037 = vector.broadcast %1034 : vector<1x256xf32> to vector<4x256xf32>
    %1038 = arith.mulf %1036, %1037 : vector<4x256xf32>
    %1039 = arith.addf %1033, %1038 : vector<4x256xf32>
    %1040 = vector.extract_strided_slice %1027 {offsets = [2, 0], sizes = [1, 256], strides = [1, 1]} : vector<4x256xf32> to vector<1x256xf32>
    %1041 = vector.extract_strided_slice %34 {offsets = [0, 30], sizes = [4, 1], strides = [1, 1]} : vector<4x36xf32> to vector<4x1xf32>
    %1042 = vector.broadcast %1041 : vector<4x1xf32> to vector<4x256xf32>
    %1043 = vector.broadcast %1040 : vector<1x256xf32> to vector<4x256xf32>
    %1044 = arith.mulf %1042, %1043 : vector<4x256xf32>
    %1045 = arith.addf %1039, %1044 : vector<4x256xf32>
    %1046 = vector.extract_strided_slice %1027 {offsets = [3, 0], sizes = [1, 256], strides = [1, 1]} : vector<4x256xf32> to vector<1x256xf32>
    %1047 = vector.extract_strided_slice %34 {offsets = [0, 31], sizes = [4, 1], strides = [1, 1]} : vector<4x36xf32> to vector<4x1xf32>
    %1048 = vector.broadcast %1047 : vector<4x1xf32> to vector<4x256xf32>
    %1049 = vector.broadcast %1046 : vector<1x256xf32> to vector<4x256xf32>
    %1050 = arith.mulf %1048, %1049 : vector<4x256xf32>
    %1051 = arith.addf %1045, %1050 : vector<4x256xf32>
    %c239_i32_82 = arith.constant 239 : i32
    %1052 = tpu.dynamic_rotate %822 by %c239_i32_82 dim 1 : vector<4x256xf32>, i32 -> vector<4x256xf32>
    %cst_83 = arith.constant 0.000000e+00 : f32
    %1053 = vector.shape_cast %32 : vector<1x256xi1> to vector<1x256xi1>
    %1054 = vector.broadcast %1053 : vector<1x256xi1> to vector<4x256xi1>
    %1055 = vector.broadcast %cst_83 : f32 to vector<4x256xf32>
    %1056 = arith.select %1054, %1052, %1055 : vector<4x256xi1>, vector<4x256xf32>
    %1057 = vector.extract_strided_slice %1056 {offsets = [0, 0], sizes = [1, 256], strides = [1, 1]} : vector<4x256xf32> to vector<1x256xf32>
    %1058 = vector.extract_strided_slice %34 {offsets = [0, 32], sizes = [4, 1], strides = [1, 1]} : vector<4x36xf32> to vector<4x1xf32>
    %1059 = vector.broadcast %1058 : vector<4x1xf32> to vector<4x256xf32>
    %1060 = vector.broadcast %1057 : vector<1x256xf32> to vector<4x256xf32>
    %1061 = arith.mulf %1059, %1060 : vector<4x256xf32>
    %1062 = arith.addf %1051, %1061 : vector<4x256xf32>
    %1063 = vector.extract_strided_slice %1056 {offsets = [1, 0], sizes = [1, 256], strides = [1, 1]} : vector<4x256xf32> to vector<1x256xf32>
    %1064 = vector.extract_strided_slice %34 {offsets = [0, 33], sizes = [4, 1], strides = [1, 1]} : vector<4x36xf32> to vector<4x1xf32>
    %1065 = vector.broadcast %1064 : vector<4x1xf32> to vector<4x256xf32>
    %1066 = vector.broadcast %1063 : vector<1x256xf32> to vector<4x256xf32>
    %1067 = arith.mulf %1065, %1066 : vector<4x256xf32>
    %1068 = arith.addf %1062, %1067 : vector<4x256xf32>
    %1069 = vector.extract_strided_slice %1056 {offsets = [2, 0], sizes = [1, 256], strides = [1, 1]} : vector<4x256xf32> to vector<1x256xf32>
    %1070 = vector.extract_strided_slice %34 {offsets = [0, 34], sizes = [4, 1], strides = [1, 1]} : vector<4x36xf32> to vector<4x1xf32>
    %1071 = vector.broadcast %1070 : vector<4x1xf32> to vector<4x256xf32>
    %1072 = vector.broadcast %1069 : vector<1x256xf32> to vector<4x256xf32>
    %1073 = arith.mulf %1071, %1072 : vector<4x256xf32>
    %1074 = arith.addf %1068, %1073 : vector<4x256xf32>
    %1075 = vector.extract_strided_slice %1056 {offsets = [3, 0], sizes = [1, 256], strides = [1, 1]} : vector<4x256xf32> to vector<1x256xf32>
    %1076 = vector.extract_strided_slice %34 {offsets = [0, 35], sizes = [4, 1], strides = [1, 1]} : vector<4x36xf32> to vector<4x1xf32>
    %1077 = vector.broadcast %1076 : vector<4x1xf32> to vector<4x256xf32>
    %1078 = vector.broadcast %1075 : vector<1x256xf32> to vector<4x256xf32>
    %1079 = arith.mulf %1077, %1078 : vector<4x256xf32>
    %1080 = arith.addf %1074, %1079 : vector<4x256xf32>
    %1081 = arith.addf %1080, %562 : vector<4x256xf32>
    %c1_84 = arith.constant 1 : index
    %c0_85 = arith.constant 0 : index
    %c0_86 = arith.constant 0 : index
    %1082 = vector.load %arg6[%c1_84, %c0_85, %c0_86] : memref<2x4x256xf32, #tpu.memory_space<vmem>>, vector<1x4x256xf32>
    %1083 = vector.shape_cast %1082 : vector<1x4x256xf32> to vector<4x256xf32>
    %1084 = vector.shape_cast %1081 : vector<4x256xf32> to vector<1x4x256xf32>
    tpu.vector_store %arg6[%c1_84, %c0_85, %c0_86], %1084 {strides = array<i32>} : memref<2x4x256xf32, #tpu.memory_space<vmem>>, vector<1x4x256xf32>,
    return
  }
  func.func @transform_0(%arg0: i32) -> (i32, i32, i32) {
    %c0_i32 = arith.constant 0 : i32
    %c0_i32_0 = arith.constant 0 : i32
    %c0_i32_1 = arith.constant 0 : i32
    return %arg0, %c0_i32, %c0_i32_0 : i32, i32, i32
  }
  func.func @transform_1(%arg0: i32) -> (i32, i32) {
    %c0_i32 = arith.constant 0 : i32
    %c0_i32_0 = arith.constant 0 : i32
    %c0_i32_1 = arith.constant 0 : i32
    return %c0_i32, %c0_i32_0 : i32, i32
  }
  func.func @transform_2(%arg0: i32) -> (i32, i32) {
    %c0_i32 = arith.constant 0 : i32
    %c0_i32_0 = arith.constant 0 : i32
    %c0_i32_1 = arith.constant 0 : i32
    return %c0_i32, %c0_i32_0 : i32, i32
  }
  func.func @transform_3(%arg0: i32) -> (i32, i32) {
    %c0_i32 = arith.constant 0 : i32
    %c0_i32_0 = arith.constant 0 : i32
    %c0_i32_1 = arith.constant 0 : i32
    return %c0_i32, %c0_i32_0 : i32, i32
  }
  func.func @transform_4(%arg0: i32) -> (i32, i32) {
    %c0_i32 = arith.constant 0 : i32
    %c0_i32_0 = arith.constant 0 : i32
    %c0_i32_1 = arith.constant 0 : i32
    return %c0_i32, %c0_i32_0 : i32, i32
  }
  func.func @transform_5(%arg0: i32) -> (i32, i32, i32) {
    %c0_i32 = arith.constant 0 : i32
    %c0_i32_0 = arith.constant 0 : i32
    %c0_i32_1 = arith.constant 0 : i32
    return %arg0, %c0_i32, %c0_i32_0 : i32, i32, i32
  }
}

</mosaic_0001>

<llo_original>
// kernel: _residual_block_pallas.1
$region0: #{_residual_block_pallas.1}
  #allocation0 [shape = 'u32[]', space=smem, size = 0x4, offset = 0x4, fixed_abs, tag = 'smem constant byte address 0x4 - core index']
  #allocation1 [shape = 'u32[144,128]{1,0:T(1,128)}', space=vmem, size = 0x12000, scoped, tag = 'internal scratch']
  %s0 = inlined_call_operand.hbm [shape: f32[2,4,256], index: 0, kind: input, shape index: {}]
  %s1 = inlined_call_operand.vmem [shape: f32[4,36], index: 1, kind: input, shape index: {}]
  %s2 = inlined_call_operand.vmem [shape: f32[4,1], index: 2, kind: input, shape index: {}]
  %s3 = inlined_call_operand.vmem [shape: f32[4,36], index: 3, kind: input, shape index: {}]
  %s4 = inlined_call_operand.vmem [shape: f32[4,1], index: 4, kind: input, shape index: {}]
  %s5 = inlined_call_operand.hbm [shape: f32[2,4,256], index: 5, kind: output, shape index: {}]
  %s6 = sld [smem:[#allocation0]]
  $region34: #{_residual_block_pallas.1} parent=0
    _
  %s8 = ssub.s32 1, %s6
  %s9 = scalar_select 0, %s8, %s6
  $region1: #{_residual_block_pallas.1} parent=0
    #allocation2 [shape = 'u8[8192]{0}', space=vmem, size = 0x2000, scoped, tag = 'input window, operand 0, single buffered']
    #allocation3 [shape = 's32[1]{0}', space=sflag, size = 0x4, scoped, tag = 'scoped memory for _residual_block_pallas.1']
    #allocation4 [shape = 's32[1]{0}', space=sflag, size = 0x4, scoped, tag = 'scoped memory for _residual_block_pallas.1']
    #allocation5 [shape = 'u8[8192]{0}', space=vmem, size = 0x2000, scoped, tag = 'output window, operand 0, single buffered']
    %10 = vsyncpa [#allocation3], 0
    %11 = vsyncpa [#allocation4], 0
    // Predicated region
    $region2: #{_residual_block_pallas.1} parent=1 // pred_check
      _
    $region3: #{_residual_block_pallas.1} parent=1 // pred_check_branch
      %13 = sbr.rel (0) target = $region5
    $region4: #{_residual_block_pallas.1} parent=1 // pred_region
      %s15 = ssub.s32 256, 256
      %16 = vsyncadd [#allocation3], %s15
      %s17 = sshll.u32 [#allocation2], 4
      %s18 = int_to_ptr.vmem [resolvable:$true] %s17
      %23 = dma.hbm_to_vmem [thread:$0]  %s0, 256, %s18, [#allocation3], 128, 128, 8
    $region5: #{_residual_block_pallas.1} parent=1 // pred_fallthru
      _
    // Predicated region
    $region6: #{_residual_block_pallas.1} parent=1 // pred_check
      _
    $region7: #{_residual_block_pallas.1} parent=1 // pred_check_branch
      %25 = sbr.rel (0) target = $region9
    $region8: #{_residual_block_pallas.1} parent=1 // pred_region
      _
    $region9: #{_residual_block_pallas.1} parent=1 // pred_fallthru
      _
    // Predicated region
    $region10: #{_residual_block_pallas.1} parent=1 // pred_check
      _
    $region11: #{_residual_block_pallas.1} parent=1 // pred_check_branch
      %27 = sbr.rel (0) target = $region13
    $region12: #{_residual_block_pallas.1} parent=1 // pred_region
      _
    $region13: #{_residual_block_pallas.1} parent=1 // pred_fallthru
      _
    // Predicated region
    $region14: #{_residual_block_pallas.1} parent=1 // pred_check
      _
    $region15: #{_residual_block_pallas.1} parent=1 // pred_check_branch
      %29 = sbr.rel (0) target = $region17
    $region16: #{_residual_block_pallas.1} parent=1 // pred_region
      _
    $region17: #{_residual_block_pallas.1} parent=1 // pred_fallthru
      _
    // Predicated region
    $region18: #{_residual_block_pallas.1} parent=1 // pred_check
      _
    $region19: #{_residual_block_pallas.1} parent=1 // pred_check_branch
      %31 = sbr.rel (0) target = $region21
    $region20: #{_residual_block_pallas.1} parent=1 // pred_region
      _
    $region21: #{_residual_block_pallas.1} parent=1 // pred_fallthru
      _
    // Predicated region
    $region22: #{_residual_block_pallas.1} parent=1 // pred_check
      _
    $region23: #{_residual_block_pallas.1} parent=1 // pred_check_branch
      %33 = sbr.rel (0) target = $region25
    $region24: #{_residual_block_pallas.1} parent=1 // pred_region
      %34 = dma.done [#allocation3], 256
    $region25: #{_residual_block_pallas.1} parent=1 // pred_fallthru
      _
    %v35 = vlaneseq
    %v36 = vand.u32 %v35, 127
    %v37 = vadd.s32 %v36, 128
    %v38 = vshra.s32 %v36, 4
    %v39 = vshra.s32 %v37, 4
    %v40 = vand.u32 %v36, 15
    %v41 = vand.u32 %v37, 15
    %vm42 = vcmp.ge.s32.totalorder %v38, 1
    %vm43 = vcmp.ge.s32.totalorder %v39, 1
    %vm44 = vcmp.ge.s32.totalorder %v40, 1
    %vm45 = vcmp.ge.s32.totalorder %v41, 1
    %vm46 = vmand %vm42, %vm44
    %vm47 = vmand %vm43, %vm45
    %vm48 = vcmp.le.s32.totalorder %v40, 14
    %vm49 = vcmp.le.s32.totalorder %v41, 14
    %vm50 = vmand %vm42, %vm48
    %vm51 = vmand %vm43, %vm49
    %vm52 = vcmp.le.s32.totalorder %v38, 14
    %vm53 = vcmp.le.s32.totalorder %v39, 14
    %vm54 = vmand %vm52, %vm44
    %vm55 = vmand %vm53, %vm45
    %vm56 = vmand %vm52, %vm48
    %vm57 = vmand %vm53, %vm49
    %v58 = vld [vmem:[%s1] sm:$0xf]
    %v59 = vld [vmem:[%s3] sm:$0xf]
    %v60 = vld [vmem:[%s2] sm:$0xf]
    %v61 = vld [vmem:[%s4] sm:$0xf]
    %v62 = vld [vmem:[#allocation2] sm:$0xff]
    %64 = vset.pattern.permute.xlu0 0
    %65 = vperm.xlu0 %64, %v60
    %v66 = vpop.permute.xlu0 %65
    %v69 = vcombine.high %v62, %v62
    %71 = vrot.lane.b32.xlu0 %v62, 17
    %v72 = vpop.permute.xlu0 %71
    %73 = vrot.lane.b32.xlu0 %v69, 17
    %v74 = vpop.permute.xlu0 %73
    %vm75 = vcmp.lt.s32.totalorder %v36, 17
    %v76 = vsel %vm75, %v72, %v74
    %v77 = vsel %vm75, %v74, %v72
    %v78 = vsel %vm46, 1, 0
    %v79 = vsel %vm47, 1, 0
    %vm80 = vcmp.eq.s32.totalorder %v78, 1
    %vm81 = vcmp.eq.s32.totalorder %v79, 1
    %v82 = vsel %vm80, %v77, 0.0
    %v83 = vsel %vm81, %v76, 0.0
    %85 = vset.pattern.permute.xlu0 0
    %86 = vperm.xlu0 %85, %v58
    %v87 = vpop.permute.xlu0 %86
    %v89 = vlaneseq
    %v90 = vshrl.u32 %v89, 7
    %v91 = vsub.s32 0, %v90
    %v92 = vrot.slane %v82, %v91
    %v93 = vlaneseq
    %v94 = vshrl.u32 %v93, 7
    %v95 = vsub.s32 0, %v94
    %v96 = vrot.slane %v83, %v95
    %v97 = vmul.f32 %v87, %v92
    %v98 = vmul.f32 %v87, %v96
    %v99 = vadd.f32 %v66, %v97
    %v100 = vadd.f32 %v66, %v98
    %101 = vset.pattern.permute.xlu0 1
    %102 = vperm.xlu0 %101, %v58
    %v103 = vpop.permute.xlu0 %102
    %v105 = vlaneseq
    %v106 = vshrl.u32 %v105, 7
    %v107 = vsub.s32 1, %v106
    %v108 = vrot.slane %v82, %v107
    %v109 = vlaneseq
    %v110 = vshrl.u32 %v109, 7
    %v111 = vsub.s32 1, %v110
    %v112 = vrot.slane %v83, %v111
    %v113 = vmul.f32 %v103, %v108
    %v114 = vmul.f32 %v103, %v112
    %v115 = vadd.f32 %v99, %v113
    %v116 = vadd.f32 %v100, %v114
    %117 = vset.pattern.permute.xlu0 2
    %118 = vperm.xlu0 %117, %v58
    %v119 = vpop.permute.xlu0 %118
    %v121 = vlaneseq
    %v122 = vshrl.u32 %v121, 7
    %v123 = vsub.s32 2, %v122
    %v124 = vrot.slane %v82, %v123
    %v125 = vlaneseq
    %v126 = vshrl.u32 %v125, 7
    %v127 = vsub.s32 2, %v126
    %v128 = vrot.slane %v83, %v127
    %v129 = vmul.f32 %v119, %v124
    %v130 = vmul.f32 %v119, %v128
    %v131 = vadd.f32 %v115, %v129
    %v132 = vadd.f32 %v116, %v130
    %133 = vset.pattern.permute.xlu0 3
    %134 = vperm.xlu0 %133, %v58
    %v135 = vpop.permute.xlu0 %134
    %v137 = vlaneseq
    %v138 = vshrl.u32 %v137, 7
    %v139 = vsub.s32 3, %v138
    %v140 = vrot.slane %v82, %v139
    %v141 = vlaneseq
    %v142 = vshrl.u32 %v141, 7
    %v143 = vsub.s32 3, %v142
    %v144 = vrot.slane %v83, %v143
    %v145 = vmul.f32 %v135, %v140
    %v146 = vmul.f32 %v135, %v144
    %v147 = vadd.f32 %v131, %v145
    %v148 = vadd.f32 %v132, %v146
    %149 = vrot.lane.b32.xlu0 %v62, 16
    %v150 = vpop.permute.xlu0 %149
    %151 = vrot.lane.b32.xlu0 %v69, 16
    %v152 = vpop.permute.xlu0 %151
    %vm153 = vcmp.lt.s32.totalorder %v36, 16
    %v154 = vsel %vm153, %v150, %v152
    %v155 = vsel %vm153, %v152, %v150
    %v156 = vsel %vm42, 1, 0
    %v157 = vsel %vm43, 1, 0
    %vm158 = vcmp.eq.s32.totalorder %v156, 1
    %vm159 = vcmp.eq.s32.totalorder %v157, 1
    %v160 = vsel %vm158, %v155, 0.0
    %v161 = vsel %vm159, %v154, 0.0
    %162 = vset.pattern.permute.xlu0 4
    %163 = vperm.xlu0 %162, %v58
    %v164 = vpop.permute.xlu0 %163
    %v166 = vlaneseq
    %v167 = vshrl.u32 %v166, 7
    %v168 = vsub.s32 0, %v167
    %v169 = vrot.slane %v160, %v168
    %v170 = vlaneseq
    %v171 = vshrl.u32 %v170, 7
    %v172 = vsub.s32 0, %v171
    %v173 = vrot.slane %v161, %v172
    %v174 = vmul.f32 %v164, %v169
    %v175 = vmul.f32 %v164, %v173
    %v176 = vadd.f32 %v147, %v174
    %v177 = vadd.f32 %v148, %v175
    %178 = vset.pattern.permute.xlu0 5
    %179 = vperm.xlu0 %178, %v58
    %v180 = vpop.permute.xlu0 %179
    %v182 = vlaneseq
    %v183 = vshrl.u32 %v182, 7
    %v184 = vsub.s32 1, %v183
    %v185 = vrot.slane %v160, %v184
    %v186 = vlaneseq
    %v187 = vshrl.u32 %v186, 7
    %v188 = vsub.s32 1, %v187
    %v189 = vrot.slane %v161, %v188
    %v190 = vmul.f32 %v180, %v185
    %v191 = vmul.f32 %v180, %v189
    %v192 = vadd.f32 %v176, %v190
    %v193 = vadd.f32 %v177, %v191
    %194 = vset.pattern.permute.xlu0 6
    %195 = vperm.xlu0 %194, %v58
    %v196 = vpop.permute.xlu0 %195
    %v198 = vlaneseq
    %v199 = vshrl.u32 %v198, 7
    %v200 = vsub.s32 2, %v199
    %v201 = vrot.slane %v160, %v200
    %v202 = vlaneseq
    %v203 = vshrl.u32 %v202, 7
    %v204 = vsub.s32 2, %v203
    %v205 = vrot.slane %v161, %v204
    %v206 = vmul.f32 %v196, %v201
    %v207 = vmul.f32 %v196, %v205
    %v208 = vadd.f32 %v192, %v206
    %v209 = vadd.f32 %v193, %v207
    %210 = vset.pattern.permute.xlu0 7
    %211 = vperm.xlu0 %210, %v58
    %v212 = vpop.permute.xlu0 %211
    %v214 = vlaneseq
    %v215 = vshrl.u32 %v214, 7
    %v216 = vsub.s32 3, %v215
    %v217 = vrot.slane %v160, %v216
    %v218 = vlaneseq
    %v219 = vshrl.u32 %v218, 7
    %v220 = vsub.s32 3, %v219
    %v221 = vrot.slane %v161, %v220
    %v222 = vmul.f32 %v212, %v217
    %v223 = vmul.f32 %v212, %v221
    %v224 = vadd.f32 %v208, %v222
    %v225 = vadd.f32 %v209, %v223
    %226 = vrot.lane.b32.xlu0 %v62, 15
    %v227 = vpop.permute.xlu0 %226
    %228 = vrot.lane.b32.xlu0 %v69, 15
    %v229 = vpop.permute.xlu0 %228
    %vm230 = vcmp.lt.s32.totalorder %v36, 15
    %v231 = vsel %vm230, %v227, %v229
    %v232 = vsel %vm230, %v229, %v227
    %v233 = vsel %vm50, 1, 0
    %v234 = vsel %vm51, 1, 0
    %vm235 = vcmp.eq.s32.totalorder %v233, 1
    %vm236 = vcmp.eq.s32.totalorder %v234, 1
    %v237 = vsel %vm235, %v232, 0.0
    %v238 = vsel %vm236, %v231, 0.0
    %239 = vset.pattern.permute.xlu0 8
    %240 = vperm.xlu0 %239, %v58
    %v241 = vpop.permute.xlu0 %240
    %v243 = vlaneseq
    %v244 = vshrl.u32 %v243, 7
    %v245 = vsub.s32 0, %v244
    %v246 = vrot.slane %v237, %v245
    %v247 = vlaneseq
    %v248 = vshrl.u32 %v247, 7
    %v249 = vsub.s32 0, %v248
    %v250 = vrot.slane %v238, %v249
    %v251 = vmul.f32 %v241, %v246
    %v252 = vmul.f32 %v241, %v250
    %v253 = vadd.f32 %v224, %v251
    %v254 = vadd.f32 %v225, %v252
    %255 = vset.pattern.permute.xlu0 9
    %256 = vperm.xlu0 %255, %v58
    %v257 = vpop.permute.xlu0 %256
    %v259 = vlaneseq
    %v260 = vshrl.u32 %v259, 7
    %v261 = vsub.s32 1, %v260
    %v262 = vrot.slane %v237, %v261
    %v263 = vlaneseq
    %v264 = vshrl.u32 %v263, 7
    %v265 = vsub.s32 1, %v264
    %v266 = vrot.slane %v238, %v265
    %v267 = vmul.f32 %v257, %v262
    %v268 = vmul.f32 %v257, %v266
    %v269 = vadd.f32 %v253, %v267
    %v270 = vadd.f32 %v254, %v268
    %271 = vset.pattern.permute.xlu0 10
    %272 = vperm.xlu0 %271, %v58
    %v273 = vpop.permute.xlu0 %272
    %v275 = vlaneseq
    %v276 = vshrl.u32 %v275, 7
    %v277 = vsub.s32 2, %v276
    %v278 = vrot.slane %v237, %v277
    %v279 = vlaneseq
    %v280 = vshrl.u32 %v279, 7
    %v281 = vsub.s32 2, %v280
    %v282 = vrot.slane %v238, %v281
    %v283 = vmul.f32 %v273, %v278
    %v284 = vmul.f32 %v273, %v282
    %v285 = vadd.f32 %v269, %v283
    %v286 = vadd.f32 %v270, %v284
    %287 = vset.pattern.permute.xlu0 11
    %288 = vperm.xlu0 %287, %v58
    %v289 = vpop.permute.xlu0 %288
    %v291 = vlaneseq
    %v292 = vshrl.u32 %v291, 7
    %v293 = vsub.s32 3, %v292
    %v294 = vrot.slane %v237, %v293
    %v295 = vlaneseq
    %v296 = vshrl.u32 %v295, 7
    %v297 = vsub.s32 3, %v296
    %v298 = vrot.slane %v238, %v297
    %v299 = vmul.f32 %v289, %v294
    %v300 = vmul.f32 %v289, %v298
    %v301 = vadd.f32 %v285, %v299
    %v302 = vadd.f32 %v286, %v300
    %303 = vrot.lane.b32.xlu0 %v62, 1
    %v304 = vpop.permute.xlu0 %303
    %305 = vrot.lane.b32.xlu0 %v69, 1
    %v306 = vpop.permute.xlu0 %305
    %vm307 = vcmp.lt.s32.totalorder %v36, 1
    %v308 = vsel %vm307, %v304, %v306
    %v309 = vsel %vm307, %v306, %v304
    %v310 = vsel %vm44, 1, 0
    %v311 = vsel %vm45, 1, 0
    %vm312 = vcmp.eq.s32.totalorder %v310, 1
    %vm313 = vcmp.eq.s32.totalorder %v311, 1
    %v314 = vsel %vm312, %v309, 0.0
    %v315 = vsel %vm313, %v308, 0.0
    %316 = vset.pattern.permute.xlu0 12
    %317 = vperm.xlu0 %316, %v58
    %v318 = vpop.permute.xlu0 %317
    %v320 = vlaneseq
    %v321 = vshrl.u32 %v320, 7
    %v322 = vsub.s32 0, %v321
    %v323 = vrot.slane %v314, %v322
    %v324 = vlaneseq
    %v325 = vshrl.u32 %v324, 7
    %v326 = vsub.s32 0, %v325
    %v327 = vrot.slane %v315, %v326
    %v328 = vmul.f32 %v318, %v323
    %v329 = vmul.f32 %v318, %v327
    %v330 = vadd.f32 %v301, %v328
    %v331 = vadd.f32 %v302, %v329
    %332 = vset.pattern.permute.xlu0 13
    %333 = vperm.xlu0 %332, %v58
    %v334 = vpop.permute.xlu0 %333
    %v336 = vlaneseq
    %v337 = vshrl.u32 %v336, 7
    %v338 = vsub.s32 1, %v337
    %v339 = vrot.slane %v314, %v338
    %v340 = vlaneseq
    %v341 = vshrl.u32 %v340, 7
    %v342 = vsub.s32 1, %v341
    %v343 = vrot.slane %v315, %v342
    %v344 = vmul.f32 %v334, %v339
    %v345 = vmul.f32 %v334, %v343
    %v346 = vadd.f32 %v330, %v344
    %v347 = vadd.f32 %v331, %v345
    %348 = vset.pattern.permute.xlu0 14
    %349 = vperm.xlu0 %348, %v58
    %v350 = vpop.permute.xlu0 %349
    %v352 = vlaneseq
    %v353 = vshrl.u32 %v352, 7
    %v354 = vsub.s32 2, %v353
    %v355 = vrot.slane %v314, %v354
    %v356 = vlaneseq
    %v357 = vshrl.u32 %v356, 7
    %v358 = vsub.s32 2, %v357
    %v359 = vrot.slane %v315, %v358
    %v360 = vmul.f32 %v350, %v355
    %v361 = vmul.f32 %v350, %v359
    %v362 = vadd.f32 %v346, %v360
    %v363 = vadd.f32 %v347, %v361
    %364 = vset.pattern.permute.xlu0 15
    %365 = vperm.xlu0 %364, %v58
    %v366 = vpop.permute.xlu0 %365
    %v368 = vlaneseq
    %v369 = vshrl.u32 %v368, 7
    %v370 = vsub.s32 3, %v369
    %v371 = vrot.slane %v314, %v370
    %v372 = vlaneseq
    %v373 = vshrl.u32 %v372, 7
    %v374 = vsub.s32 3, %v373
    %v375 = vrot.slane %v315, %v374
    %v376 = vmul.f32 %v366, %v371
    %v377 = vmul.f32 %v366, %v375
    %v378 = vadd.f32 %v362, %v376
    %v379 = vadd.f32 %v363, %v377
    %380 = vset.pattern.permute.xlu0 16
    %381 = vperm.xlu0 %380, %v58
    %v382 = vpop.permute.xlu0 %381
    %v384 = vlaneseq
    %v385 = vshrl.u32 %v384, 7
    %v386 = vsub.s32 0, %v385
    %v387 = vrot.slane %v62, %v386
    %v388 = vlaneseq
    %v389 = vshrl.u32 %v388, 7
    %v390 = vsub.s32 4, %v389
    %v391 = vrot.slane %v62, %v390
    %v394 = vlaneseq
    %v395 = vshrl.u32 %v394, 7
    %v396 = vsub.s32 0, %v395
    %v397 = vrot.slane %v387, %v396
    %v398 = vlaneseq
    %v399 = vshrl.u32 %v398, 7
    %v400 = vsub.s32 0, %v399
    %v401 = vrot.slane %v391, %v400
    %v402 = vmul.f32 %v382, %v397
    %v403 = vmul.f32 %v382, %v401
    %v404 = vadd.f32 %v378, %v402
    %v405 = vadd.f32 %v379, %v403
    %406 = vset.pattern.permute.xlu0 17
    %407 = vperm.xlu0 %406, %v58
    %v408 = vpop.permute.xlu0 %407
    %v410 = vlaneseq
    %v411 = vshrl.u32 %v410, 7
    %v412 = vsub.s32 1, %v411
    %v413 = vrot.slane %v62, %v412
    %v414 = vlaneseq
    %v415 = vshrl.u32 %v414, 7
    %v416 = vsub.s32 5, %v415
    %v417 = vrot.slane %v62, %v416
    %v420 = vlaneseq
    %v421 = vshrl.u32 %v420, 7
    %v422 = vsub.s32 1, %v421
    %v423 = vrot.slane %v413, %v422
    %v424 = vlaneseq
    %v425 = vshrl.u32 %v424, 7
    %v426 = vsub.s32 1, %v425
    %v427 = vrot.slane %v417, %v426
    %v428 = vmul.f32 %v408, %v423
    %v429 = vmul.f32 %v408, %v427
    %v430 = vadd.f32 %v404, %v428
    %v431 = vadd.f32 %v405, %v429
    %432 = vset.pattern.permute.xlu0 18
    %433 = vperm.xlu0 %432, %v58
    %v434 = vpop.permute.xlu0 %433
    %v436 = vlaneseq
    %v437 = vshrl.u32 %v436, 7
    %v438 = vsub.s32 2, %v437
    %v439 = vrot.slane %v62, %v438
    %v440 = vlaneseq
    %v441 = vshrl.u32 %v440, 7
    %v442 = vsub.s32 6, %v441
    %v443 = vrot.slane %v62, %v442
    %v446 = vlaneseq
    %v447 = vshrl.u32 %v446, 7
    %v448 = vsub.s32 2, %v447
    %v449 = vrot.slane %v439, %v448
    %v450 = vlaneseq
    %v451 = vshrl.u32 %v450, 7
    %v452 = vsub.s32 2, %v451
    %v453 = vrot.slane %v443, %v452
    %v454 = vmul.f32 %v434, %v449
    %v455 = vmul.f32 %v434, %v453
    %v456 = vadd.f32 %v430, %v454
    %v457 = vadd.f32 %v431, %v455
    %458 = vset.pattern.permute.xlu0 19
    %459 = vperm.xlu0 %458, %v58
    %v460 = vpop.permute.xlu0 %459
    %v462 = vlaneseq
    %v463 = vshrl.u32 %v462, 7
    %v464 = vsub.s32 3, %v463
    %v465 = vrot.slane %v62, %v464
    %v466 = vlaneseq
    %v467 = vshrl.u32 %v466, 7
    %v468 = vsub.s32 7, %v467
    %v469 = vrot.slane %v62, %v468
    %v472 = vlaneseq
    %v473 = vshrl.u32 %v472, 7
    %v474 = vsub.s32 3, %v473
    %v475 = vrot.slane %v465, %v474
    %v476 = vlaneseq
    %v477 = vshrl.u32 %v476, 7
    %v478 = vsub.s32 3, %v477
    %v479 = vrot.slane %v469, %v478
    %v480 = vmul.f32 %v460, %v475
    %v481 = vmul.f32 %v460, %v479
    %v482 = vadd.f32 %v456, %v480
    %v483 = vadd.f32 %v457, %v481
    %484 = vrot.lane.b32.xlu0 %v62, 127
    %v485 = vpop.permute.xlu0 %484
    %486 = vrot.lane.b32.xlu0 %v69, 127
    %v487 = vpop.permute.xlu0 %486
    %vm488 = vcmp.lt.s32.totalorder %v36, 127
    %v489 = vsel %vm488, %v485, %v487
    %v490 = vsel %vm488, %v487, %v485
    %v491 = vsel %vm48, 1, 0
    %v492 = vsel %vm49, 1, 0
    %vm493 = vcmp.eq.s32.totalorder %v491, 1
    %vm494 = vcmp.eq.s32.totalorder %v492, 1
    %v495 = vsel %vm493, %v489, 0.0
    %v496 = vsel %vm494, %v490, 0.0
    %497 = vset.pattern.permute.xlu0 20
    %498 = vperm.xlu0 %497, %v58
    %v499 = vpop.permute.xlu0 %498
    %v501 = vlaneseq
    %v502 = vshrl.u32 %v501, 7
    %v503 = vsub.s32 0, %v502
    %v504 = vrot.slane %v495, %v503
    %v505 = vlaneseq
    %v506 = vshrl.u32 %v505, 7
    %v507 = vsub.s32 0, %v506
    %v508 = vrot.slane %v496, %v507
    %v509 = vmul.f32 %v499, %v504
    %v510 = vmul.f32 %v499, %v508
    %v511 = vadd.f32 %v482, %v509
    %v512 = vadd.f32 %v483, %v510
    %513 = vset.pattern.permute.xlu0 21
    %514 = vperm.xlu0 %513, %v58
    %v515 = vpop.permute.xlu0 %514
    %v517 = vlaneseq
    %v518 = vshrl.u32 %v517, 7
    %v519 = vsub.s32 1, %v518
    %v520 = vrot.slane %v495, %v519
    %v521 = vlaneseq
    %v522 = vshrl.u32 %v521, 7
    %v523 = vsub.s32 1, %v522
    %v524 = vrot.slane %v496, %v523
    %v525 = vmul.f32 %v515, %v520
    %v526 = vmul.f32 %v515, %v524
    %v527 = vadd.f32 %v511, %v525
    %v528 = vadd.f32 %v512, %v526
    %529 = vset.pattern.permute.xlu0 22
    %530 = vperm.xlu0 %529, %v58
    %v531 = vpop.permute.xlu0 %530
    %v533 = vlaneseq
    %v534 = vshrl.u32 %v533, 7
    %v535 = vsub.s32 2, %v534
    %v536 = vrot.slane %v495, %v535
    %v537 = vlaneseq
    %v538 = vshrl.u32 %v537, 7
    %v539 = vsub.s32 2, %v538
    %v540 = vrot.slane %v496, %v539
    %v541 = vmul.f32 %v531, %v536
    %v542 = vmul.f32 %v531, %v540
    %v543 = vadd.f32 %v527, %v541
    %v544 = vadd.f32 %v528, %v542
    %545 = vset.pattern.permute.xlu0 23
    %546 = vperm.xlu0 %545, %v58
    %v547 = vpop.permute.xlu0 %546
    %v549 = vlaneseq
    %v550 = vshrl.u32 %v549, 7
    %v551 = vsub.s32 3, %v550
    %v552 = vrot.slane %v495, %v551
    %v553 = vlaneseq
    %v554 = vshrl.u32 %v553, 7
    %v555 = vsub.s32 3, %v554
    %v556 = vrot.slane %v496, %v555
    %v557 = vmul.f32 %v547, %v552
    %v558 = vmul.f32 %v547, %v556
    %v559 = vadd.f32 %v543, %v557
    %v560 = vadd.f32 %v544, %v558
    %561 = vrot.lane.b32.xlu0 %v62, 113
    %v562 = vpop.permute.xlu0 %561
    %563 = vrot.lane.b32.xlu0 %v69, 113
    %v564 = vpop.permute.xlu0 %563
    %vm565 = vcmp.lt.s32.totalorder %v36, 113
    %v566 = vsel %vm565, %v562, %v564
    %v567 = vsel %vm565, %v564, %v562
    %v568 = vsel %vm54, 1, 0
    %v569 = vsel %vm55, 1, 0
    %vm570 = vcmp.eq.s32.totalorder %v568, 1
    %vm571 = vcmp.eq.s32.totalorder %v569, 1
    %v572 = vsel %vm570, %v566, 0.0
    %v573 = vsel %vm571, %v567, 0.0
    %574 = vset.pattern.permute.xlu0 24
    %575 = vperm.xlu0 %574, %v58
    %v576 = vpop.permute.xlu0 %575
    %v578 = vlaneseq
    %v579 = vshrl.u32 %v578, 7
    %v580 = vsub.s32 0, %v579
    %v581 = vrot.slane %v572, %v580
    %v582 = vlaneseq
    %v583 = vshrl.u32 %v582, 7
    %v584 = vsub.s32 0, %v583
    %v585 = vrot.slane %v573, %v584
    %v586 = vmul.f32 %v576, %v581
    %v587 = vmul.f32 %v576, %v585
    %v588 = vadd.f32 %v559, %v586
    %v589 = vadd.f32 %v560, %v587
    %590 = vset.pattern.permute.xlu0 25
    %591 = vperm.xlu0 %590, %v58
    %v592 = vpop.permute.xlu0 %591
    %v594 = vlaneseq
    %v595 = vshrl.u32 %v594, 7
    %v596 = vsub.s32 1, %v595
    %v597 = vrot.slane %v572, %v596
    %v598 = vlaneseq
    %v599 = vshrl.u32 %v598, 7
    %v600 = vsub.s32 1, %v599
    %v601 = vrot.slane %v573, %v600
    %v602 = vmul.f32 %v592, %v597
    %v603 = vmul.f32 %v592, %v601
    %v604 = vadd.f32 %v588, %v602
    %v605 = vadd.f32 %v589, %v603
    %606 = vset.pattern.permute.xlu0 26
    %607 = vperm.xlu0 %606, %v58
    %v608 = vpop.permute.xlu0 %607
    %v610 = vlaneseq
    %v611 = vshrl.u32 %v610, 7
    %v612 = vsub.s32 2, %v611
    %v613 = vrot.slane %v572, %v612
    %v614 = vlaneseq
    %v615 = vshrl.u32 %v614, 7
    %v616 = vsub.s32 2, %v615
    %v617 = vrot.slane %v573, %v616
    %v618 = vmul.f32 %v608, %v613
    %v619 = vmul.f32 %v608, %v617
    %v620 = vadd.f32 %v604, %v618
    %v621 = vadd.f32 %v605, %v619
    %622 = vset.pattern.permute.xlu0 27
    %623 = vperm.xlu0 %622, %v58
    %v624 = vpop.permute.xlu0 %623
    %v626 = vlaneseq
    %v627 = vshrl.u32 %v626, 7
    %v628 = vsub.s32 3, %v627
    %v629 = vrot.slane %v572, %v628
    %v630 = vlaneseq
    %v631 = vshrl.u32 %v630, 7
    %v632 = vsub.s32 3, %v631
    %v633 = vrot.slane %v573, %v632
    %v634 = vmul.f32 %v624, %v629
    %v635 = vmul.f32 %v624, %v633
    %v636 = vadd.f32 %v620, %v634
    %v637 = vadd.f32 %v621, %v635
    %638 = vrot.lane.b32.xlu0 %v62, 112
    %v639 = vpop.permute.xlu0 %638
    %640 = vrot.lane.b32.xlu0 %v69, 112
    %v641 = vpop.permute.xlu0 %640
    %vm642 = vcmp.lt.s32.totalorder %v36, 112
    %v643 = vsel %vm642, %v639, %v641
    %v644 = vsel %vm642, %v641, %v639
    %v645 = vsel %vm52, 1, 0
    %v646 = vsel %vm53, 1, 0
    %vm647 = vcmp.eq.s32.totalorder %v645, 1
    %vm648 = vcmp.eq.s32.totalorder %v646, 1
    %v649 = vsel %vm647, %v643, 0.0
    %v650 = vsel %vm648, %v644, 0.0
    %651 = vset.pattern.permute.xlu0 28
    %652 = vperm.xlu0 %651, %v58
    %v653 = vpop.permute.xlu0 %652
    %v655 = vlaneseq
    %v656 = vshrl.u32 %v655, 7
    %v657 = vsub.s32 0, %v656
    %v658 = vrot.slane %v649, %v657
    %v659 = vlaneseq
    %v660 = vshrl.u32 %v659, 7
    %v661 = vsub.s32 0, %v660
    %v662 = vrot.slane %v650, %v661
    %v663 = vmul.f32 %v653, %v658
    %v664 = vmul.f32 %v653, %v662
    %v665 = vadd.f32 %v636, %v663
    %v666 = vadd.f32 %v637, %v664
    %667 = vset.pattern.permute.xlu0 29
    %668 = vperm.xlu0 %667, %v58
    %v669 = vpop.permute.xlu0 %668
    %v671 = vlaneseq
    %v672 = vshrl.u32 %v671, 7
    %v673 = vsub.s32 1, %v672
    %v674 = vrot.slane %v649, %v673
    %v675 = vlaneseq
    %v676 = vshrl.u32 %v675, 7
    %v677 = vsub.s32 1, %v676
    %v678 = vrot.slane %v650, %v677
    %v679 = vmul.f32 %v669, %v674
    %v680 = vmul.f32 %v669, %v678
    %v681 = vadd.f32 %v665, %v679
    %v682 = vadd.f32 %v666, %v680
    %683 = vset.pattern.permute.xlu0 30
    %684 = vperm.xlu0 %683, %v58
    %v685 = vpop.permute.xlu0 %684
    %v687 = vlaneseq
    %v688 = vshrl.u32 %v687, 7
    %v689 = vsub.s32 2, %v688
    %v690 = vrot.slane %v649, %v689
    %v691 = vlaneseq
    %v692 = vshrl.u32 %v691, 7
    %v693 = vsub.s32 2, %v692
    %v694 = vrot.slane %v650, %v693
    %v695 = vmul.f32 %v685, %v690
    %v696 = vmul.f32 %v685, %v694
    %v697 = vadd.f32 %v681, %v695
    %v698 = vadd.f32 %v682, %v696
    %699 = vset.pattern.permute.xlu0 31
    %700 = vperm.xlu0 %699, %v58
    %v701 = vpop.permute.xlu0 %700
    %v703 = vlaneseq
    %v704 = vshrl.u32 %v703, 7
    %v705 = vsub.s32 3, %v704
    %v706 = vrot.slane %v649, %v705
    %v707 = vlaneseq
    %v708 = vshrl.u32 %v707, 7
    %v709 = vsub.s32 3, %v708
    %v710 = vrot.slane %v650, %v709
    %v711 = vmul.f32 %v701, %v706
    %v712 = vmul.f32 %v701, %v710
    %v713 = vadd.f32 %v697, %v711
    %v714 = vadd.f32 %v698, %v712
    %715 = vrot.lane.b32.xlu0 %v62, 111
    %v716 = vpop.permute.xlu0 %715
    %717 = vrot.lane.b32.xlu0 %v69, 111
    %v718 = vpop.permute.xlu0 %717
    %vm719 = vcmp.lt.s32.totalorder %v36, 111
    %v720 = vsel %vm719, %v716, %v718
    %v721 = vsel %vm719, %v718, %v716
    %v722 = vsel %vm56, 1, 0
    %v723 = vsel %vm57, 1, 0
    %vm724 = vcmp.eq.s32.totalorder %v722, 1
    %vm725 = vcmp.eq.s32.totalorder %v723, 1
    %v726 = vsel %vm724, %v720, 0.0
    %v727 = vsel %vm725, %v721, 0.0
    %728 = vset.pattern.permute.xlu0 32
    %729 = vperm.xlu0 %728, %v58
    %v730 = vpop.permute.xlu0 %729
    %v732 = vlaneseq
    %v733 = vshrl.u32 %v732, 7
    %v734 = vsub.s32 0, %v733
    %v735 = vrot.slane %v726, %v734
    %v736 = vlaneseq
    %v737 = vshrl.u32 %v736, 7
    %v738 = vsub.s32 0, %v737
    %v739 = vrot.slane %v727, %v738
    %v740 = vmul.f32 %v730, %v735
    %v741 = vmul.f32 %v730, %v739
    %v742 = vadd.f32 %v713, %v740
    %v743 = vadd.f32 %v714, %v741
    %744 = vset.pattern.permute.xlu0 33
    %745 = vperm.xlu0 %744, %v58
    %v746 = vpop.permute.xlu0 %745
    %v748 = vlaneseq
    %v749 = vshrl.u32 %v748, 7
    %v750 = vsub.s32 1, %v749
    %v751 = vrot.slane %v726, %v750
    %v752 = vlaneseq
    %v753 = vshrl.u32 %v752, 7
    %v754 = vsub.s32 1, %v753
    %v755 = vrot.slane %v727, %v754
    %v756 = vmul.f32 %v746, %v751
    %v757 = vmul.f32 %v746, %v755
    %v758 = vadd.f32 %v742, %v756
    %v759 = vadd.f32 %v743, %v757
    %760 = vset.pattern.permute.xlu0 34
    %761 = vperm.xlu0 %760, %v58
    %v762 = vpop.permute.xlu0 %761
    %v764 = vlaneseq
    %v765 = vshrl.u32 %v764, 7
    %v766 = vsub.s32 2, %v765
    %v767 = vrot.slane %v726, %v766
    %v768 = vlaneseq
    %v769 = vshrl.u32 %v768, 7
    %v770 = vsub.s32 2, %v769
    %v771 = vrot.slane %v727, %v770
    %v772 = vmul.f32 %v762, %v767
    %v773 = vmul.f32 %v762, %v771
    %v774 = vadd.f32 %v758, %v772
    %v775 = vadd.f32 %v759, %v773
    %776 = vset.pattern.permute.xlu0 35
    %777 = vperm.xlu0 %776, %v58
    %v778 = vpop.permute.xlu0 %777
    %v780 = vlaneseq
    %v781 = vshrl.u32 %v780, 7
    %v782 = vsub.s32 3, %v781
    %v783 = vrot.slane %v726, %v782
    %v784 = vlaneseq
    %v785 = vshrl.u32 %v784, 7
    %v786 = vsub.s32 3, %v785
    %v787 = vrot.slane %v727, %v786
    %v788 = vmul.f32 %v778, %v783
    %v789 = vmul.f32 %v778, %v787
    %v790 = vadd.f32 %v774, %v788
    %v791 = vadd.f32 %v775, %v789
    %v792 = vmax.f32 %v790, 0.0
    %v793 = vmax.f32 %v791, 0.0
    %795 = vset.pattern.permute.xlu0 0
    %796 = vperm.xlu0 %795, %v61
    %v797 = vpop.permute.xlu0 %796
    %799 = vrot.lane.b32.xlu0 %v792, 17
    %v800 = vpop.permute.xlu0 %799
    %801 = vrot.lane.b32.xlu0 %v793, 17
    %v802 = vpop.permute.xlu0 %801
    %v803 = vsel %vm75, %v800, %v802
    %v804 = vsel %vm75, %v802, %v800
    %v805 = vsel %vm80, %v804, 0.0
    %v806 = vsel %vm81, %v803, 0.0
    %808 = vset.pattern.permute.xlu0 0
    %809 = vperm.xlu0 %808, %v59
    %v810 = vpop.permute.xlu0 %809
    %v812 = vlaneseq
    %v813 = vshrl.u32 %v812, 7
    %v814 = vsub.s32 0, %v813
    %v815 = vrot.slane %v805, %v814
    %v816 = vlaneseq
    %v817 = vshrl.u32 %v816, 7
    %v818 = vsub.s32 0, %v817
    %v819 = vrot.slane %v806, %v818
    %v820 = vmul.f32 %v810, %v815
    %v821 = vmul.f32 %v810, %v819
    %v822 = vadd.f32 %v797, %v820
    %v823 = vadd.f32 %v797, %v821
    %824 = vset.pattern.permute.xlu0 1
    %825 = vperm.xlu0 %824, %v59
    %v826 = vpop.permute.xlu0 %825
    %v828 = vlaneseq
    %v829 = vshrl.u32 %v828, 7
    %v830 = vsub.s32 1, %v829
    %v831 = vrot.slane %v805, %v830
    %v832 = vlaneseq
    %v833 = vshrl.u32 %v832, 7
    %v834 = vsub.s32 1, %v833
    %v835 = vrot.slane %v806, %v834
    %v836 = vmul.f32 %v826, %v831
    %v837 = vmul.f32 %v826, %v835
    %v838 = vadd.f32 %v822, %v836
    %v839 = vadd.f32 %v823, %v837
    %840 = vset.pattern.permute.xlu0 2
    %841 = vperm.xlu0 %840, %v59
    %v842 = vpop.permute.xlu0 %841
    %v844 = vlaneseq
    %v845 = vshrl.u32 %v844, 7
    %v846 = vsub.s32 2, %v845
    %v847 = vrot.slane %v805, %v846
    %v848 = vlaneseq
    %v849 = vshrl.u32 %v848, 7
    %v850 = vsub.s32 2, %v849
    %v851 = vrot.slane %v806, %v850
    %v852 = vmul.f32 %v842, %v847
    %v853 = vmul.f32 %v842, %v851
    %v854 = vadd.f32 %v838, %v852
    %v855 = vadd.f32 %v839, %v853
    %856 = vset.pattern.permute.xlu0 3
    %857 = vperm.xlu0 %856, %v59
    %v858 = vpop.permute.xlu0 %857
    %v860 = vlaneseq
    %v861 = vshrl.u32 %v860, 7
    %v862 = vsub.s32 3, %v861
    %v863 = vrot.slane %v805, %v862
    %v864 = vlaneseq
    %v865 = vshrl.u32 %v864, 7
    %v866 = vsub.s32 3, %v865
    %v867 = vrot.slane %v806, %v866
    %v868 = vmul.f32 %v858, %v863
    %v869 = vmul.f32 %v858, %v867
    %v870 = vadd.f32 %v854, %v868
    %v871 = vadd.f32 %v855, %v869
    %872 = vrot.lane.b32.xlu0 %v792, 16
    %v873 = vpop.permute.xlu0 %872
    %874 = vrot.lane.b32.xlu0 %v793, 16
    %v875 = vpop.permute.xlu0 %874
    %v876 = vsel %vm153, %v873, %v875
    %v877 = vsel %vm153, %v875, %v873
    %v878 = vsel %vm158, %v877, 0.0
    %v879 = vsel %vm159, %v876, 0.0
    %880 = vset.pattern.permute.xlu0 4
    %881 = vperm.xlu0 %880, %v59
    %v882 = vpop.permute.xlu0 %881
    %v884 = vlaneseq
    %v885 = vshrl.u32 %v884, 7
    %v886 = vsub.s32 0, %v885
    %v887 = vrot.slane %v878, %v886
    %v888 = vlaneseq
    %v889 = vshrl.u32 %v888, 7
    %v890 = vsub.s32 0, %v889
    %v891 = vrot.slane %v879, %v890
    %v892 = vmul.f32 %v882, %v887
    %v893 = vmul.f32 %v882, %v891
    %v894 = vadd.f32 %v870, %v892
    %v895 = vadd.f32 %v871, %v893
    %896 = vset.pattern.permute.xlu0 5
    %897 = vperm.xlu0 %896, %v59
    %v898 = vpop.permute.xlu0 %897
    %v900 = vlaneseq
    %v901 = vshrl.u32 %v900, 7
    %v902 = vsub.s32 1, %v901
    %v903 = vrot.slane %v878, %v902
    %v904 = vlaneseq
    %v905 = vshrl.u32 %v904, 7
    %v906 = vsub.s32 1, %v905
    %v907 = vrot.slane %v879, %v906
    %v908 = vmul.f32 %v898, %v903
    %v909 = vmul.f32 %v898, %v907
    %v910 = vadd.f32 %v894, %v908
    %v911 = vadd.f32 %v895, %v909
    %912 = vset.pattern.permute.xlu0 6
    %913 = vperm.xlu0 %912, %v59
    %v914 = vpop.permute.xlu0 %913
    %v916 = vlaneseq
    %v917 = vshrl.u32 %v916, 7
    %v918 = vsub.s32 2, %v917
    %v919 = vrot.slane %v878, %v918
    %v920 = vlaneseq
    %v921 = vshrl.u32 %v920, 7
    %v922 = vsub.s32 2, %v921
    %v923 = vrot.slane %v879, %v922
    %v924 = vmul.f32 %v914, %v919
    %v925 = vmul.f32 %v914, %v923
    %v926 = vadd.f32 %v910, %v924
    %v927 = vadd.f32 %v911, %v925
    %928 = vset.pattern.permute.xlu0 7
    %929 = vperm.xlu0 %928, %v59
    %v930 = vpop.permute.xlu0 %929
    %v932 = vlaneseq
    %v933 = vshrl.u32 %v932, 7
    %v934 = vsub.s32 3, %v933
    %v935 = vrot.slane %v878, %v934
    %v936 = vlaneseq
    %v937 = vshrl.u32 %v936, 7
    %v938 = vsub.s32 3, %v937
    %v939 = vrot.slane %v879, %v938
    %v940 = vmul.f32 %v930, %v935
    %v941 = vmul.f32 %v930, %v939
    %v942 = vadd.f32 %v926, %v940
    %v943 = vadd.f32 %v927, %v941
    %944 = vrot.lane.b32.xlu0 %v792, 15
    %v945 = vpop.permute.xlu0 %944
    %946 = vrot.lane.b32.xlu0 %v793, 15
    %v947 = vpop.permute.xlu0 %946
    %v948 = vsel %vm230, %v945, %v947
    %v949 = vsel %vm230, %v947, %v945
    %v950 = vsel %vm235, %v949, 0.0
    %v951 = vsel %vm236, %v948, 0.0
    %952 = vset.pattern.permute.xlu0 8
    %953 = vperm.xlu0 %952, %v59
    %v954 = vpop.permute.xlu0 %953
    %v956 = vlaneseq
    %v957 = vshrl.u32 %v956, 7
    %v958 = vsub.s32 0, %v957
    %v959 = vrot.slane %v950, %v958
    %v960 = vlaneseq
    %v961 = vshrl.u32 %v960, 7
    %v962 = vsub.s32 0, %v961
    %v963 = vrot.slane %v951, %v962
    %v964 = vmul.f32 %v954, %v959
    %v965 = vmul.f32 %v954, %v963
    %v966 = vadd.f32 %v942, %v964
    %v967 = vadd.f32 %v943, %v965
    %968 = vset.pattern.permute.xlu0 9
    %969 = vperm.xlu0 %968, %v59
    %v970 = vpop.permute.xlu0 %969
    %v972 = vlaneseq
    %v973 = vshrl.u32 %v972, 7
    %v974 = vsub.s32 1, %v973
    %v975 = vrot.slane %v950, %v974
    %v976 = vlaneseq
    %v977 = vshrl.u32 %v976, 7
    %v978 = vsub.s32 1, %v977
    %v979 = vrot.slane %v951, %v978
    %v980 = vmul.f32 %v970, %v975
    %v981 = vmul.f32 %v970, %v979
    %v982 = vadd.f32 %v966, %v980
    %v983 = vadd.f32 %v967, %v981
    %984 = vset.pattern.permute.xlu0 10
    %985 = vperm.xlu0 %984, %v59
    %v986 = vpop.permute.xlu0 %985
    %v988 = vlaneseq
    %v989 = vshrl.u32 %v988, 7
    %v990 = vsub.s32 2, %v989
    %v991 = vrot.slane %v950, %v990
    %v992 = vlaneseq
    %v993 = vshrl.u32 %v992, 7
    %v994 = vsub.s32 2, %v993
    %v995 = vrot.slane %v951, %v994
    %v996 = vmul.f32 %v986, %v991
    %v997 = vmul.f32 %v986, %v995
    %v998 = vadd.f32 %v982, %v996
    %v999 = vadd.f32 %v983, %v997
    %1000 = vset.pattern.permute.xlu0 11
    %1001 = vperm.xlu0 %1000, %v59
    %v1002 = vpop.permute.xlu0 %1001
    %v1004 = vlaneseq
    %v1005 = vshrl.u32 %v1004, 7
    %v1006 = vsub.s32 3, %v1005
    %v1007 = vrot.slane %v950, %v1006
    %v1008 = vlaneseq
    %v1009 = vshrl.u32 %v1008, 7
    %v1010 = vsub.s32 3, %v1009
    %v1011 = vrot.slane %v951, %v1010
    %v1012 = vmul.f32 %v1002, %v1007
    %v1013 = vmul.f32 %v1002, %v1011
    %v1014 = vadd.f32 %v998, %v1012
    %v1015 = vadd.f32 %v999, %v1013
    %1016 = vrot.lane.b32.xlu0 %v792, 1
    %v1017 = vpop.permute.xlu0 %1016
    %1018 = vrot.lane.b32.xlu0 %v793, 1
    %v1019 = vpop.permute.xlu0 %1018
    %v1020 = vsel %vm307, %v1017, %v1019
    %v1021 = vsel %vm307, %v1019, %v1017
    %v1022 = vsel %vm312, %v1021, 0.0
    %v1023 = vsel %vm313, %v1020, 0.0
    %1024 = vset.pattern.permute.xlu0 12
    %1025 = vperm.xlu0 %1024, %v59
    %v1026 = vpop.permute.xlu0 %1025
    %v1028 = vlaneseq
    %v1029 = vshrl.u32 %v1028, 7
    %v1030 = vsub.s32 0, %v1029
    %v1031 = vrot.slane %v1022, %v1030
    %v1032 = vlaneseq
    %v1033 = vshrl.u32 %v1032, 7
    %v1034 = vsub.s32 0, %v1033
    %v1035 = vrot.slane %v1023, %v1034
    %v1036 = vmul.f32 %v1026, %v1031
    %v1037 = vmul.f32 %v1026, %v1035
    %v1038 = vadd.f32 %v1014, %v1036
    %v1039 = vadd.f32 %v1015, %v1037
    %1040 = vset.pattern.permute.xlu0 13
    %1041 = vperm.xlu0 %1040, %v59
    %v1042 = vpop.permute.xlu0 %1041
    %v1044 = vlaneseq
    %v1045 = vshrl.u32 %v1044, 7
    %v1046 = vsub.s32 1, %v1045
    %v1047 = vrot.slane %v1022, %v1046
    %v1048 = vlaneseq
    %v1049 = vshrl.u32 %v1048, 7
    %v1050 = vsub.s32 1, %v1049
    %v1051 = vrot.slane %v1023, %v1050
    %v1052 = vmul.f32 %v1042, %v1047
    %v1053 = vmul.f32 %v1042, %v1051
    %v1054 = vadd.f32 %v1038, %v1052
    %v1055 = vadd.f32 %v1039, %v1053
    %1056 = vset.pattern.permute.xlu0 14
    %1057 = vperm.xlu0 %1056, %v59
    %v1058 = vpop.permute.xlu0 %1057
    %v1060 = vlaneseq
    %v1061 = vshrl.u32 %v1060, 7
    %v1062 = vsub.s32 2, %v1061
    %v1063 = vrot.slane %v1022, %v1062
    %v1064 = vlaneseq
    %v1065 = vshrl.u32 %v1064, 7
    %v1066 = vsub.s32 2, %v1065
    %v1067 = vrot.slane %v1023, %v1066
    %v1068 = vmul.f32 %v1058, %v1063
    %v1069 = vmul.f32 %v1058, %v1067
    %v1070 = vadd.f32 %v1054, %v1068
    %v1071 = vadd.f32 %v1055, %v1069
    %1072 = vset.pattern.permute.xlu0 15
    %1073 = vperm.xlu0 %1072, %v59
    %v1074 = vpop.permute.xlu0 %1073
    %v1076 = vlaneseq
    %v1077 = vshrl.u32 %v1076, 7
    %v1078 = vsub.s32 3, %v1077
    %v1079 = vrot.slane %v1022, %v1078
    %v1080 = vlaneseq
    %v1081 = vshrl.u32 %v1080, 7
    %v1082 = vsub.s32 3, %v1081
    %v1083 = vrot.slane %v1023, %v1082
    %v1084 = vmul.f32 %v1074, %v1079
    %v1085 = vmul.f32 %v1074, %v1083
    %v1086 = vadd.f32 %v1070, %v1084
    %v1087 = vadd.f32 %v1071, %v1085
    %1088 = vset.pattern.permute.xlu0 16
    %1089 = vperm.xlu0 %1088, %v59
    %v1090 = vpop.permute.xlu0 %1089
    %v1092 = vlaneseq
    %v1093 = vshrl.u32 %v1092, 7
    %v1094 = vsub.s32 0, %v1093
    %v1095 = vrot.slane %v792, %v1094
    %v1096 = vlaneseq
    %v1097 = vshrl.u32 %v1096, 7
    %v1098 = vsub.s32 0, %v1097
    %v1099 = vrot.slane %v793, %v1098
    %v1100 = vmul.f32 %v1090, %v1095
    %v1101 = vmul.f32 %v1090, %v1099
    %v1102 = vadd.f32 %v1086, %v1100
    %v1103 = vadd.f32 %v1087, %v1101
    %1104 = vset.pattern.permute.xlu0 17
    %1105 = vperm.xlu0 %1104, %v59
    %v1106 = vpop.permute.xlu0 %1105
    %v1108 = vlaneseq
    %v1109 = vshrl.u32 %v1108, 7
    %v1110 = vsub.s32 1, %v1109
    %v1111 = vrot.slane %v792, %v1110
    %v1112 = vlaneseq
    %v1113 = vshrl.u32 %v1112, 7
    %v1114 = vsub.s32 1, %v1113
    %v1115 = vrot.slane %v793, %v1114
    %v1116 = vmul.f32 %v1106, %v1111
    %v1117 = vmul.f32 %v1106, %v1115
    %v1118 = vadd.f32 %v1102, %v1116
    %v1119 = vadd.f32 %v1103, %v1117
    %1120 = vset.pattern.permute.xlu0 18
    %1121 = vperm.xlu0 %1120, %v59
    %v1122 = vpop.permute.xlu0 %1121
    %v1124 = vlaneseq
    %v1125 = vshrl.u32 %v1124, 7
    %v1126 = vsub.s32 2, %v1125
    %v1127 = vrot.slane %v792, %v1126
    %v1128 = vlaneseq
    %v1129 = vshrl.u32 %v1128, 7
    %v1130 = vsub.s32 2, %v1129
    %v1131 = vrot.slane %v793, %v1130
    %v1132 = vmul.f32 %v1122, %v1127
    %v1133 = vmul.f32 %v1122, %v1131
    %v1134 = vadd.f32 %v1118, %v1132
    %v1135 = vadd.f32 %v1119, %v1133
    %1136 = vset.pattern.permute.xlu0 19
    %1137 = vperm.xlu0 %1136, %v59
    %v1138 = vpop.permute.xlu0 %1137
    %v1140 = vlaneseq
    %v1141 = vshrl.u32 %v1140, 7
    %v1142 = vsub.s32 3, %v1141
    %v1143 = vrot.slane %v792, %v1142
    %v1144 = vlaneseq
    %v1145 = vshrl.u32 %v1144, 7
    %v1146 = vsub.s32 3, %v1145
    %v1147 = vrot.slane %v793, %v1146
    %v1148 = vmul.f32 %v1138, %v1143
    %v1149 = vmul.f32 %v1138, %v1147
    %v1150 = vadd.f32 %v1134, %v1148
    %v1151 = vadd.f32 %v1135, %v1149
    %1152 = vrot.lane.b32.xlu0 %v792, 127
    %v1153 = vpop.permute.xlu0 %1152
    %1154 = vrot.lane.b32.xlu0 %v793, 127
    %v1155 = vpop.permute.xlu0 %1154
    %v1156 = vsel %vm488, %v1153, %v1155
    %v1157 = vsel %vm488, %v1155, %v1153
    %v1158 = vsel %vm493, %v1156, 0.0
    %v1159 = vsel %vm494, %v1157, 0.0
    %1160 = vset.pattern.permute.xlu0 20
    %1161 = vperm.xlu0 %1160, %v59
    %v1162 = vpop.permute.xlu0 %1161
    %v1164 = vlaneseq
    %v1165 = vshrl.u32 %v1164, 7
    %v1166 = vsub.s32 0, %v1165
    %v1167 = vrot.slane %v1158, %v1166
    %v1168 = vlaneseq
    %v1169 = vshrl.u32 %v1168, 7
    %v1170 = vsub.s32 0, %v1169
    %v1171 = vrot.slane %v1159, %v1170
    %v1172 = vmul.f32 %v1162, %v1167
    %v1173 = vmul.f32 %v1162, %v1171
    %v1174 = vadd.f32 %v1150, %v1172
    %v1175 = vadd.f32 %v1151, %v1173
    %1176 = vset.pattern.permute.xlu0 21
    %1177 = vperm.xlu0 %1176, %v59
    %v1178 = vpop.permute.xlu0 %1177
    %v1180 = vlaneseq
    %v1181 = vshrl.u32 %v1180, 7
    %v1182 = vsub.s32 1, %v1181
    %v1183 = vrot.slane %v1158, %v1182
    %v1184 = vlaneseq
    %v1185 = vshrl.u32 %v1184, 7
    %v1186 = vsub.s32 1, %v1185
    %v1187 = vrot.slane %v1159, %v1186
    %v1188 = vmul.f32 %v1178, %v1183
    %v1189 = vmul.f32 %v1178, %v1187
    %v1190 = vadd.f32 %v1174, %v1188
    %v1191 = vadd.f32 %v1175, %v1189
    %1192 = vset.pattern.permute.xlu0 22
    %1193 = vperm.xlu0 %1192, %v59
    %v1194 = vpop.permute.xlu0 %1193
    %v1196 = vlaneseq
    %v1197 = vshrl.u32 %v1196, 7
    %v1198 = vsub.s32 2, %v1197
    %v1199 = vrot.slane %v1158, %v1198
    %v1200 = vlaneseq
    %v1201 = vshrl.u32 %v1200, 7
    %v1202 = vsub.s32 2, %v1201
    %v1203 = vrot.slane %v1159, %v1202
    %v1204 = vmul.f32 %v1194, %v1199
    %v1205 = vmul.f32 %v1194, %v1203
    %v1206 = vadd.f32 %v1190, %v1204
    %v1207 = vadd.f32 %v1191, %v1205
    %1208 = vset.pattern.permute.xlu0 23
    %1209 = vperm.xlu0 %1208, %v59
    %v1210 = vpop.permute.xlu0 %1209
    %v1212 = vlaneseq
    %v1213 = vshrl.u32 %v1212, 7
    %v1214 = vsub.s32 3, %v1213
    %v1215 = vrot.slane %v1158, %v1214
    %v1216 = vlaneseq
    %v1217 = vshrl.u32 %v1216, 7
    %v1218 = vsub.s32 3, %v1217
    %v1219 = vrot.slane %v1159, %v1218
    %v1220 = vmul.f32 %v1210, %v1215
    %v1221 = vmul.f32 %v1210, %v1219
    %v1222 = vadd.f32 %v1206, %v1220
    %v1223 = vadd.f32 %v1207, %v1221
    %1224 = vrot.lane.b32.xlu0 %v792, 113
    %v1225 = vpop.permute.xlu0 %1224
    %1226 = vrot.lane.b32.xlu0 %v793, 113
    %v1227 = vpop.permute.xlu0 %1226
    %v1228 = vsel %vm565, %v1225, %v1227
    %v1229 = vsel %vm565, %v1227, %v1225
    %v1230 = vsel %vm570, %v1228, 0.0
    %v1231 = vsel %vm571, %v1229, 0.0
    %1232 = vset.pattern.permute.xlu0 24
    %1233 = vperm.xlu0 %1232, %v59
    %v1234 = vpop.permute.xlu0 %1233
    %v1236 = vlaneseq
    %v1237 = vshrl.u32 %v1236, 7
    %v1238 = vsub.s32 0, %v1237
    %v1239 = vrot.slane %v1230, %v1238
    %v1240 = vlaneseq
    %v1241 = vshrl.u32 %v1240, 7
    %v1242 = vsub.s32 0, %v1241
    %v1243 = vrot.slane %v1231, %v1242
    %v1244 = vmul.f32 %v1234, %v1239
    %v1245 = vmul.f32 %v1234, %v1243
    %v1246 = vadd.f32 %v1222, %v1244
    %v1247 = vadd.f32 %v1223, %v1245
    %1248 = vset.pattern.permute.xlu0 25
    %1249 = vperm.xlu0 %1248, %v59
    %v1250 = vpop.permute.xlu0 %1249
    %v1252 = vlaneseq
    %v1253 = vshrl.u32 %v1252, 7
    %v1254 = vsub.s32 1, %v1253
    %v1255 = vrot.slane %v1230, %v1254
    %v1256 = vlaneseq
    %v1257 = vshrl.u32 %v1256, 7
    %v1258 = vsub.s32 1, %v1257
    %v1259 = vrot.slane %v1231, %v1258
    %v1260 = vmul.f32 %v1250, %v1255
    %v1261 = vmul.f32 %v1250, %v1259
    %v1262 = vadd.f32 %v1246, %v1260
    %v1263 = vadd.f32 %v1247, %v1261
    %1264 = vset.pattern.permute.xlu0 26
    %1265 = vperm.xlu0 %1264, %v59
    %v1266 = vpop.permute.xlu0 %1265
    %v1268 = vlaneseq
    %v1269 = vshrl.u32 %v1268, 7
    %v1270 = vsub.s32 2, %v1269
    %v1271 = vrot.slane %v1230, %v1270
    %v1272 = vlaneseq
    %v1273 = vshrl.u32 %v1272, 7
    %v1274 = vsub.s32 2, %v1273
    %v1275 = vrot.slane %v1231, %v1274
    %v1276 = vmul.f32 %v1266, %v1271
    %v1277 = vmul.f32 %v1266, %v1275
    %v1278 = vadd.f32 %v1262, %v1276
    %v1279 = vadd.f32 %v1263, %v1277
    %1280 = vset.pattern.permute.xlu0 27
    %1281 = vperm.xlu0 %1280, %v59
    %v1282 = vpop.permute.xlu0 %1281
    %v1284 = vlaneseq
    %v1285 = vshrl.u32 %v1284, 7
    %v1286 = vsub.s32 3, %v1285
    %v1287 = vrot.slane %v1230, %v1286
    %v1288 = vlaneseq
    %v1289 = vshrl.u32 %v1288, 7
    %v1290 = vsub.s32 3, %v1289
    %v1291 = vrot.slane %v1231, %v1290
    %v1292 = vmul.f32 %v1282, %v1287
    %v1293 = vmul.f32 %v1282, %v1291
    %v1294 = vadd.f32 %v1278, %v1292
    %v1295 = vadd.f32 %v1279, %v1293
    %1296 = vrot.lane.b32.xlu0 %v792, 112
    %v1297 = vpop.permute.xlu0 %1296
    %1298 = vrot.lane.b32.xlu0 %v793, 112
    %v1299 = vpop.permute.xlu0 %1298
    %v1300 = vsel %vm642, %v1297, %v1299
    %v1301 = vsel %vm642, %v1299, %v1297
    %v1302 = vsel %vm647, %v1300, 0.0
    %v1303 = vsel %vm648, %v1301, 0.0
    %1304 = vset.pattern.permute.xlu0 28
    %1305 = vperm.xlu0 %1304, %v59
    %v1306 = vpop.permute.xlu0 %1305
    %v1308 = vlaneseq
    %v1309 = vshrl.u32 %v1308, 7
    %v1310 = vsub.s32 0, %v1309
    %v1311 = vrot.slane %v1302, %v1310
    %v1312 = vlaneseq
    %v1313 = vshrl.u32 %v1312, 7
    %v1314 = vsub.s32 0, %v1313
    %v1315 = vrot.slane %v1303, %v1314
    %v1316 = vmul.f32 %v1306, %v1311
    %v1317 = vmul.f32 %v1306, %v1315
    %v1318 = vadd.f32 %v1294, %v1316
    %v1319 = vadd.f32 %v1295, %v1317
    %1320 = vset.pattern.permute.xlu0 29
    %1321 = vperm.xlu0 %1320, %v59
    %v1322 = vpop.permute.xlu0 %1321
    %v1324 = vlaneseq
    %v1325 = vshrl.u32 %v1324, 7
    %v1326 = vsub.s32 1, %v1325
    %v1327 = vrot.slane %v1302, %v1326
    %v1328 = vlaneseq
    %v1329 = vshrl.u32 %v1328, 7
    %v1330 = vsub.s32 1, %v1329
    %v1331 = vrot.slane %v1303, %v1330
    %v1332 = vmul.f32 %v1322, %v1327
    %v1333 = vmul.f32 %v1322, %v1331
    %v1334 = vadd.f32 %v1318, %v1332
    %v1335 = vadd.f32 %v1319, %v1333
    %1336 = vset.pattern.permute.xlu0 30
    %1337 = vperm.xlu0 %1336, %v59
    %v1338 = vpop.permute.xlu0 %1337
    %v1340 = vlaneseq
    %v1341 = vshrl.u32 %v1340, 7
    %v1342 = vsub.s32 2, %v1341
    %v1343 = vrot.slane %v1302, %v1342
    %v1344 = vlaneseq
    %v1345 = vshrl.u32 %v1344, 7
    %v1346 = vsub.s32 2, %v1345
    %v1347 = vrot.slane %v1303, %v1346
    %v1348 = vmul.f32 %v1338, %v1343
    %v1349 = vmul.f32 %v1338, %v1347
    %v1350 = vadd.f32 %v1334, %v1348
    %v1351 = vadd.f32 %v1335, %v1349
    %1352 = vset.pattern.permute.xlu0 31
    %1353 = vperm.xlu0 %1352, %v59
    %v1354 = vpop.permute.xlu0 %1353
    %v1356 = vlaneseq
    %v1357 = vshrl.u32 %v1356, 7
    %v1358 = vsub.s32 3, %v1357
    %v1359 = vrot.slane %v1302, %v1358
    %v1360 = vlaneseq
    %v1361 = vshrl.u32 %v1360, 7
    %v1362 = vsub.s32 3, %v1361
    %v1363 = vrot.slane %v1303, %v1362
    %v1364 = vmul.f32 %v1354, %v1359
    %v1365 = vmul.f32 %v1354, %v1363
    %v1366 = vadd.f32 %v1350, %v1364
    %v1367 = vadd.f32 %v1351, %v1365
    %1368 = vrot.lane.b32.xlu0 %v792, 111
    %v1369 = vpop.permute.xlu0 %1368
    %1370 = vrot.lane.b32.xlu0 %v793, 111
    %v1371 = vpop.permute.xlu0 %1370
    %v1372 = vsel %vm719, %v1369, %v1371
    %v1373 = vsel %vm719, %v1371, %v1369
    %v1374 = vsel %vm724, %v1372, 0.0
    %v1375 = vsel %vm725, %v1373, 0.0
    %1376 = vset.pattern.permute.xlu0 32
    %1377 = vperm.xlu0 %1376, %v59
    %v1378 = vpop.permute.xlu0 %1377
    %v1380 = vlaneseq
    %v1381 = vshrl.u32 %v1380, 7
    %v1382 = vsub.s32 0, %v1381
    %v1383 = vrot.slane %v1374, %v1382
    %v1384 = vlaneseq
    %v1385 = vshrl.u32 %v1384, 7
    %v1386 = vsub.s32 0, %v1385
    %v1387 = vrot.slane %v1375, %v1386
    %v1388 = vmul.f32 %v1378, %v1383
    %v1389 = vmul.f32 %v1378, %v1387
    %v1390 = vadd.f32 %v1366, %v1388
    %v1391 = vadd.f32 %v1367, %v1389
    %1392 = vset.pattern.permute.xlu0 33
    %1393 = vperm.xlu0 %1392, %v59
    %v1394 = vpop.permute.xlu0 %1393
    %v1396 = vlaneseq
    %v1397 = vshrl.u32 %v1396, 7
    %v1398 = vsub.s32 1, %v1397
    %v1399 = vrot.slane %v1374, %v1398
    %v1400 = vlaneseq
    %v1401 = vshrl.u32 %v1400, 7
    %v1402 = vsub.s32 1, %v1401
    %v1403 = vrot.slane %v1375, %v1402
    %v1404 = vmul.f32 %v1394, %v1399
    %v1405 = vmul.f32 %v1394, %v1403
    %v1406 = vadd.f32 %v1390, %v1404
    %v1407 = vadd.f32 %v1391, %v1405
    %1408 = vset.pattern.permute.xlu0 34
    %1409 = vperm.xlu0 %1408, %v59
    %v1410 = vpop.permute.xlu0 %1409
    %v1412 = vlaneseq
    %v1413 = vshrl.u32 %v1412, 7
    %v1414 = vsub.s32 2, %v1413
    %v1415 = vrot.slane %v1374, %v1414
    %v1416 = vlaneseq
    %v1417 = vshrl.u32 %v1416, 7
    %v1418 = vsub.s32 2, %v1417
    %v1419 = vrot.slane %v1375, %v1418
    %v1420 = vmul.f32 %v1410, %v1415
    %v1421 = vmul.f32 %v1410, %v1419
    %v1422 = vadd.f32 %v1406, %v1420
    %v1423 = vadd.f32 %v1407, %v1421
    %1424 = vset.pattern.permute.xlu0 35
    %1425 = vperm.xlu0 %1424, %v59
    %v1426 = vpop.permute.xlu0 %1425
    %v1428 = vlaneseq
    %v1429 = vshrl.u32 %v1428, 7
    %v1430 = vsub.s32 3, %v1429
    %v1431 = vrot.slane %v1374, %v1430
    %v1432 = vlaneseq
    %v1433 = vshrl.u32 %v1432, 7
    %v1434 = vsub.s32 3, %v1433
    %v1435 = vrot.slane %v1375, %v1434
    %v1436 = vmul.f32 %v1426, %v1431
    %v1437 = vmul.f32 %v1426, %v1435
    %v1438 = vadd.f32 %v1422, %v1436
    %v1439 = vadd.f32 %v1423, %v1437
    %v1440 = vadd.f32 %v1438, %v62
    %v1441 = vadd.f32 %v1439, %v69
    %v1444 = vcombine.low %v1440, %v1441
    %1446 = vst [vmem:[#allocation5] sm:$0xff] %v1444
    %s1447 = scalar_lea.vmem [#allocation2], 8
    %v1448 = vld [vmem:[%s1447] sm:$0xff]
    %v1450 = vcombine.high %v1448, %v1448
    %1452 = vrot.lane.b32.xlu0 %v1448, 17
    %v1453 = vpop.permute.xlu0 %1452
    %1454 = vrot.lane.b32.xlu0 %v1450, 17
    %v1455 = vpop.permute.xlu0 %1454
    %v1456 = vsel %vm75, %v1453, %v1455
    %v1457 = vsel %vm75, %v1455, %v1453
    %v1458 = vsel %vm80, %v1457, 0.0
    %v1459 = vsel %vm81, %v1456, 0.0
    %v1460 = vlaneseq
    %v1461 = vshrl.u32 %v1460, 7
    %v1462 = vsub.s32 0, %v1461
    %v1463 = vrot.slane %v1458, %v1462
    %v1464 = vlaneseq
    %v1465 = vshrl.u32 %v1464, 7
    %v1466 = vsub.s32 0, %v1465
    %v1467 = vrot.slane %v1459, %v1466
    %v1468 = vmul.f32 %v87, %v1463
    %v1469 = vmul.f32 %v87, %v1467
    %v1470 = vadd.f32 %v66, %v1468
    %v1471 = vadd.f32 %v66, %v1469
    %v1472 = vlaneseq
    %v1473 = vshrl.u32 %v1472, 7
    %v1474 = vsub.s32 1, %v1473
    %v1475 = vrot.slane %v1458, %v1474
    %v1476 = vlaneseq
    %v1477 = vshrl.u32 %v1476, 7
    %v1478 = vsub.s32 1, %v1477
    %v1479 = vrot.slane %v1459, %v1478
    %v1480 = vmul.f32 %v103, %v1475
    %v1481 = vmul.f32 %v103, %v1479
    %v1482 = vadd.f32 %v1470, %v1480
    %v1483 = vadd.f32 %v1471, %v1481
    %v1484 = vlaneseq
    %v1485 = vshrl.u32 %v1484, 7
    %v1486 = vsub.s32 2, %v1485
    %v1487 = vrot.slane %v1458, %v1486
    %v1488 = vlaneseq
    %v1489 = vshrl.u32 %v1488, 7
    %v1490 = vsub.s32 2, %v1489
    %v1491 = vrot.slane %v1459, %v1490
    %v1492 = vmul.f32 %v119, %v1487
    %v1493 = vmul.f32 %v119, %v1491
    %v1494 = vadd.f32 %v1482, %v1492
    %v1495 = vadd.f32 %v1483, %v1493
    %v1496 = vlaneseq
    %v1497 = vshrl.u32 %v1496, 7
    %v1498 = vsub.s32 3, %v1497
    %v1499 = vrot.slane %v1458, %v1498
    %v1500 = vlaneseq
    %v1501 = vshrl.u32 %v1500, 7
    %v1502 = vsub.s32 3, %v1501
    %v1503 = vrot.slane %v1459, %v1502
    %v1504 = vmul.f32 %v135, %v1499
    %v1505 = vmul.f32 %v135, %v1503
    %v1506 = vadd.f32 %v1494, %v1504
    %v1507 = vadd.f32 %v1495, %v1505
    %1508 = vrot.lane.b32.xlu0 %v1448, 16
    %v1509 = vpop.permute.xlu0 %1508
    %1510 = vrot.lane.b32.xlu0 %v1450, 16
    %v1511 = vpop.permute.xlu0 %1510
    %v1512 = vsel %vm153, %v1509, %v1511
    %v1513 = vsel %vm153, %v1511, %v1509
    %v1514 = vsel %vm158, %v1513, 0.0
    %v1515 = vsel %vm159, %v1512, 0.0
    %v1516 = vlaneseq
    %v1517 = vshrl.u32 %v1516, 7
    %v1518 = vsub.s32 0, %v1517
    %v1519 = vrot.slane %v1514, %v1518
    %v1520 = vlaneseq
    %v1521 = vshrl.u32 %v1520, 7
    %v1522 = vsub.s32 0, %v1521
    %v1523 = vrot.slane %v1515, %v1522
    %v1524 = vmul.f32 %v164, %v1519
    %v1525 = vmul.f32 %v164, %v1523
    %v1526 = vadd.f32 %v1506, %v1524
    %v1527 = vadd.f32 %v1507, %v1525
    %v1528 = vlaneseq
    %v1529 = vshrl.u32 %v1528, 7
    %v1530 = vsub.s32 1, %v1529
    %v1531 = vrot.slane %v1514, %v1530
    %v1532 = vlaneseq
    %v1533 = vshrl.u32 %v1532, 7
    %v1534 = vsub.s32 1, %v1533
    %v1535 = vrot.slane %v1515, %v1534
    %v1536 = vmul.f32 %v180, %v1531
    %v1537 = vmul.f32 %v180, %v1535
    %v1538 = vadd.f32 %v1526, %v1536
    %v1539 = vadd.f32 %v1527, %v1537
    %v1540 = vlaneseq
    %v1541 = vshrl.u32 %v1540, 7
    %v1542 = vsub.s32 2, %v1541
    %v1543 = vrot.slane %v1514, %v1542
    %v1544 = vlaneseq
    %v1545 = vshrl.u32 %v1544, 7
    %v1546 = vsub.s32 2, %v1545
    %v1547 = vrot.slane %v1515, %v1546
    %v1548 = vmul.f32 %v196, %v1543
    %v1549 = vmul.f32 %v196, %v1547
    %v1550 = vadd.f32 %v1538, %v1548
    %v1551 = vadd.f32 %v1539, %v1549
    %v1552 = vlaneseq
    %v1553 = vshrl.u32 %v1552, 7
    %v1554 = vsub.s32 3, %v1553
    %v1555 = vrot.slane %v1514, %v1554
    %v1556 = vlaneseq
    %v1557 = vshrl.u32 %v1556, 7
    %v1558 = vsub.s32 3, %v1557
    %v1559 = vrot.slane %v1515, %v1558
    %v1560 = vmul.f32 %v212, %v1555
    %v1561 = vmul.f32 %v212, %v1559
    %v1562 = vadd.f32 %v1550, %v1560
    %v1563 = vadd.f32 %v1551, %v1561
    %1564 = vrot.lane.b32.xlu0 %v1448, 15
    %v1565 = vpop.permute.xlu0 %1564
    %1566 = vrot.lane.b32.xlu0 %v1450, 15
    %v1567 = vpop.permute.xlu0 %1566
    %v1568 = vsel %vm230, %v1565, %v1567
    %v1569 = vsel %vm230, %v1567, %v1565
    %v1570 = vsel %vm235, %v1569, 0.0
    %v1571 = vsel %vm236, %v1568, 0.0
    %v1572 = vlaneseq
    %v1573 = vshrl.u32 %v1572, 7
    %v1574 = vsub.s32 0, %v1573
    %v1575 = vrot.slane %v1570, %v1574
    %v1576 = vlaneseq
    %v1577 = vshrl.u32 %v1576, 7
    %v1578 = vsub.s32 0, %v1577
    %v1579 = vrot.slane %v1571, %v1578
    %v1580 = vmul.f32 %v241, %v1575
    %v1581 = vmul.f32 %v241, %v1579
    %v1582 = vadd.f32 %v1562, %v1580
    %v1583 = vadd.f32 %v1563, %v1581
    %v1584 = vlaneseq
    %v1585 = vshrl.u32 %v1584, 7
    %v1586 = vsub.s32 1, %v1585
    %v1587 = vrot.slane %v1570, %v1586
    %v1588 = vlaneseq
    %v1589 = vshrl.u32 %v1588, 7
    %v1590 = vsub.s32 1, %v1589
    %v1591 = vrot.slane %v1571, %v1590
    %v1592 = vmul.f32 %v257, %v1587
    %v1593 = vmul.f32 %v257, %v1591
    %v1594 = vadd.f32 %v1582, %v1592
    %v1595 = vadd.f32 %v1583, %v1593
    %v1596 = vlaneseq
    %v1597 = vshrl.u32 %v1596, 7
    %v1598 = vsub.s32 2, %v1597
    %v1599 = vrot.slane %v1570, %v1598
    %v1600 = vlaneseq
    %v1601 = vshrl.u32 %v1600, 7
    %v1602 = vsub.s32 2, %v1601
    %v1603 = vrot.slane %v1571, %v1602
    %v1604 = vmul.f32 %v273, %v1599
    %v1605 = vmul.f32 %v273, %v1603
    %v1606 = vadd.f32 %v1594, %v1604
    %v1607 = vadd.f32 %v1595, %v1605
    %v1608 = vlaneseq
    %v1609 = vshrl.u32 %v1608, 7
    %v1610 = vsub.s32 3, %v1609
    %v1611 = vrot.slane %v1570, %v1610
    %v1612 = vlaneseq
    %v1613 = vshrl.u32 %v1612, 7
    %v1614 = vsub.s32 3, %v1613
    %v1615 = vrot.slane %v1571, %v1614
    %v1616 = vmul.f32 %v289, %v1611
    %v1617 = vmul.f32 %v289, %v1615
    %v1618 = vadd.f32 %v1606, %v1616
    %v1619 = vadd.f32 %v1607, %v1617
    %1620 = vrot.lane.b32.xlu0 %v1448, 1
    %v1621 = vpop.permute.xlu0 %1620
    %1622 = vrot.lane.b32.xlu0 %v1450, 1
    %v1623 = vpop.permute.xlu0 %1622
    %v1624 = vsel %vm307, %v1621, %v1623
    %v1625 = vsel %vm307, %v1623, %v1621
    %v1626 = vsel %vm312, %v1625, 0.0
    %v1627 = vsel %vm313, %v1624, 0.0
    %v1628 = vlaneseq
    %v1629 = vshrl.u32 %v1628, 7
    %v1630 = vsub.s32 0, %v1629
    %v1631 = vrot.slane %v1626, %v1630
    %v1632 = vlaneseq
    %v1633 = vshrl.u32 %v1632, 7
    %v1634 = vsub.s32 0, %v1633
    %v1635 = vrot.slane %v1627, %v1634
    %v1636 = vmul.f32 %v318, %v1631
    %v1637 = vmul.f32 %v318, %v1635
    %v1638 = vadd.f32 %v1618, %v1636
    %v1639 = vadd.f32 %v1619, %v1637
    %v1640 = vlaneseq
    %v1641 = vshrl.u32 %v1640, 7
    %v1642 = vsub.s32 1, %v1641
    %v1643 = vrot.slane %v1626, %v1642
    %v1644 = vlaneseq
    %v1645 = vshrl.u32 %v1644, 7
    %v1646 = vsub.s32 1, %v1645
    %v1647 = vrot.slane %v1627, %v1646
    %v1648 = vmul.f32 %v334, %v1643
    %v1649 = vmul.f32 %v334, %v1647
    %v1650 = vadd.f32 %v1638, %v1648
    %v1651 = vadd.f32 %v1639, %v1649
    %v1652 = vlaneseq
    %v1653 = vshrl.u32 %v1652, 7
    %v1654 = vsub.s32 2, %v1653
    %v1655 = vrot.slane %v1626, %v1654
    %v1656 = vlaneseq
    %v1657 = vshrl.u32 %v1656, 7
    %v1658 = vsub.s32 2, %v1657
    %v1659 = vrot.slane %v1627, %v1658
    %v1660 = vmul.f32 %v350, %v1655
    %v1661 = vmul.f32 %v350, %v1659
    %v1662 = vadd.f32 %v1650, %v1660
    %v1663 = vadd.f32 %v1651, %v1661
    %v1664 = vlaneseq
    %v1665 = vshrl.u32 %v1664, 7
    %v1666 = vsub.s32 3, %v1665
    %v1667 = vrot.slane %v1626, %v1666
    %v1668 = vlaneseq
    %v1669 = vshrl.u32 %v1668, 7
    %v1670 = vsub.s32 3, %v1669
    %v1671 = vrot.slane %v1627, %v1670
    %v1672 = vmul.f32 %v366, %v1667
    %v1673 = vmul.f32 %v366, %v1671
    %v1674 = vadd.f32 %v1662, %v1672
    %v1675 = vadd.f32 %v1663, %v1673
    %v1676 = vlaneseq
    %v1677 = vshrl.u32 %v1676, 7
    %v1678 = vsub.s32 0, %v1677
    %v1679 = vrot.slane %v1448, %v1678
    %v1680 = vlaneseq
    %v1681 = vshrl.u32 %v1680, 7
    %v1682 = vsub.s32 4, %v1681
    %v1683 = vrot.slane %v1448, %v1682
    %v1686 = vlaneseq
    %v1687 = vshrl.u32 %v1686, 7
    %v1688 = vsub.s32 0, %v1687
    %v1689 = vrot.slane %v1679, %v1688
    %v1690 = vlaneseq
    %v1691 = vshrl.u32 %v1690, 7
    %v1692 = vsub.s32 0, %v1691
    %v1693 = vrot.slane %v1683, %v1692
    %v1694 = vmul.f32 %v382, %v1689
    %v1695 = vmul.f32 %v382, %v1693
    %v1696 = vadd.f32 %v1674, %v1694
    %v1697 = vadd.f32 %v1675, %v1695
    %v1698 = vlaneseq
    %v1699 = vshrl.u32 %v1698, 7
    %v1700 = vsub.s32 1, %v1699
    %v1701 = vrot.slane %v1448, %v1700
    %v1702 = vlaneseq
    %v1703 = vshrl.u32 %v1702, 7
    %v1704 = vsub.s32 5, %v1703
    %v1705 = vrot.slane %v1448, %v1704
    %v1708 = vlaneseq
    %v1709 = vshrl.u32 %v1708, 7
    %v1710 = vsub.s32 1, %v1709
    %v1711 = vrot.slane %v1701, %v1710
    %v1712 = vlaneseq
    %v1713 = vshrl.u32 %v1712, 7
    %v1714 = vsub.s32 1, %v1713
    %v1715 = vrot.slane %v1705, %v1714
    %v1716 = vmul.f32 %v408, %v1711
    %v1717 = vmul.f32 %v408, %v1715
    %v1718 = vadd.f32 %v1696, %v1716
    %v1719 = vadd.f32 %v1697, %v1717
    %v1720 = vlaneseq
    %v1721 = vshrl.u32 %v1720, 7
    %v1722 = vsub.s32 2, %v1721
    %v1723 = vrot.slane %v1448, %v1722
    %v1724 = vlaneseq
    %v1725 = vshrl.u32 %v1724, 7
    %v1726 = vsub.s32 6, %v1725
    %v1727 = vrot.slane %v1448, %v1726
    %v1730 = vlaneseq
    %v1731 = vshrl.u32 %v1730, 7
    %v1732 = vsub.s32 2, %v1731
    %v1733 = vrot.slane %v1723, %v1732
    %v1734 = vlaneseq
    %v1735 = vshrl.u32 %v1734, 7
    %v1736 = vsub.s32 2, %v1735
    %v1737 = vrot.slane %v1727, %v1736
    %v1738 = vmul.f32 %v434, %v1733
    %v1739 = vmul.f32 %v434, %v1737
    %v1740 = vadd.f32 %v1718, %v1738
    %v1741 = vadd.f32 %v1719, %v1739
    %v1742 = vlaneseq
    %v1743 = vshrl.u32 %v1742, 7
    %v1744 = vsub.s32 3, %v1743
    %v1745 = vrot.slane %v1448, %v1744
    %v1746 = vlaneseq
    %v1747 = vshrl.u32 %v1746, 7
    %v1748 = vsub.s32 7, %v1747
    %v1749 = vrot.slane %v1448, %v1748
    %v1752 = vlaneseq
    %v1753 = vshrl.u32 %v1752, 7
    %v1754 = vsub.s32 3, %v1753
    %v1755 = vrot.slane %v1745, %v1754
    %v1756 = vlaneseq
    %v1757 = vshrl.u32 %v1756, 7
    %v1758 = vsub.s32 3, %v1757
    %v1759 = vrot.slane %v1749, %v1758
    %v1760 = vmul.f32 %v460, %v1755
    %v1761 = vmul.f32 %v460, %v1759
    %v1762 = vadd.f32 %v1740, %v1760
    %v1763 = vadd.f32 %v1741, %v1761
    %1764 = vrot.lane.b32.xlu0 %v1448, 127
    %v1765 = vpop.permute.xlu0 %1764
    %1766 = vrot.lane.b32.xlu0 %v1450, 127
    %v1767 = vpop.permute.xlu0 %1766
    %v1768 = vsel %vm488, %v1765, %v1767
    %v1769 = vsel %vm488, %v1767, %v1765
    %v1770 = vsel %vm493, %v1768, 0.0
    %v1771 = vsel %vm494, %v1769, 0.0
    %v1772 = vlaneseq
    %v1773 = vshrl.u32 %v1772, 7
    %v1774 = vsub.s32 0, %v1773
    %v1775 = vrot.slane %v1770, %v1774
    %v1776 = vlaneseq
    %v1777 = vshrl.u32 %v1776, 7
    %v1778 = vsub.s32 0, %v1777
    %v1779 = vrot.slane %v1771, %v1778
    %v1780 = vmul.f32 %v499, %v1775
    %v1781 = vmul.f32 %v499, %v1779
    %v1782 = vadd.f32 %v1762, %v1780
    %v1783 = vadd.f32 %v1763, %v1781
    %v1784 = vlaneseq
    %v1785 = vshrl.u32 %v1784, 7
    %v1786 = vsub.s32 1, %v1785
    %v1787 = vrot.slane %v1770, %v1786
    %v1788 = vlaneseq
    %v1789 = vshrl.u32 %v1788, 7
    %v1790 = vsub.s32 1, %v1789
    %v1791 = vrot.slane %v1771, %v1790
    %v1792 = vmul.f32 %v515, %v1787
    %v1793 = vmul.f32 %v515, %v1791
    %v1794 = vadd.f32 %v1782, %v1792
    %v1795 = vadd.f32 %v1783, %v1793
    %v1796 = vlaneseq
    %v1797 = vshrl.u32 %v1796, 7
    %v1798 = vsub.s32 2, %v1797
    %v1799 = vrot.slane %v1770, %v1798
    %v1800 = vlaneseq
    %v1801 = vshrl.u32 %v1800, 7
    %v1802 = vsub.s32 2, %v1801
    %v1803 = vrot.slane %v1771, %v1802
    %v1804 = vmul.f32 %v531, %v1799
    %v1805 = vmul.f32 %v531, %v1803
    %v1806 = vadd.f32 %v1794, %v1804
    %v1807 = vadd.f32 %v1795, %v1805
    %v1808 = vlaneseq
    %v1809 = vshrl.u32 %v1808, 7
    %v1810 = vsub.s32 3, %v1809
    %v1811 = vrot.slane %v1770, %v1810
    %v1812 = vlaneseq
    %v1813 = vshrl.u32 %v1812, 7
    %v1814 = vsub.s32 3, %v1813
    %v1815 = vrot.slane %v1771, %v1814
    %v1816 = vmul.f32 %v547, %v1811
    %v1817 = vmul.f32 %v547, %v1815
    %v1818 = vadd.f32 %v1806, %v1816
    %v1819 = vadd.f32 %v1807, %v1817
    %1820 = vrot.lane.b32.xlu0 %v1448, 113
    %v1821 = vpop.permute.xlu0 %1820
    %1822 = vrot.lane.b32.xlu0 %v1450, 113
    %v1823 = vpop.permute.xlu0 %1822
    %v1824 = vsel %vm565, %v1821, %v1823
    %v1825 = vsel %vm565, %v1823, %v1821
    %v1826 = vsel %vm570, %v1824, 0.0
    %v1827 = vsel %vm571, %v1825, 0.0
    %v1828 = vlaneseq
    %v1829 = vshrl.u32 %v1828, 7
    %v1830 = vsub.s32 0, %v1829
    %v1831 = vrot.slane %v1826, %v1830
    %v1832 = vlaneseq
    %v1833 = vshrl.u32 %v1832, 7
    %v1834 = vsub.s32 0, %v1833
    %v1835 = vrot.slane %v1827, %v1834
    %v1836 = vmul.f32 %v576, %v1831
    %v1837 = vmul.f32 %v576, %v1835
    %v1838 = vadd.f32 %v1818, %v1836
    %v1839 = vadd.f32 %v1819, %v1837
    %v1840 = vlaneseq
    %v1841 = vshrl.u32 %v1840, 7
    %v1842 = vsub.s32 1, %v1841
    %v1843 = vrot.slane %v1826, %v1842
    %v1844 = vlaneseq
    %v1845 = vshrl.u32 %v1844, 7
    %v1846 = vsub.s32 1, %v1845
    %v1847 = vrot.slane %v1827, %v1846
    %v1848 = vmul.f32 %v592, %v1843
    %v1849 = vmul.f32 %v592, %v1847
    %v1850 = vadd.f32 %v1838, %v1848
    %v1851 = vadd.f32 %v1839, %v1849
    %v1852 = vlaneseq
    %v1853 = vshrl.u32 %v1852, 7
    %v1854 = vsub.s32 2, %v1853
    %v1855 = vrot.slane %v1826, %v1854
    %v1856 = vlaneseq
    %v1857 = vshrl.u32 %v1856, 7
    %v1858 = vsub.s32 2, %v1857
    %v1859 = vrot.slane %v1827, %v1858
    %v1860 = vmul.f32 %v608, %v1855
    %v1861 = vmul.f32 %v608, %v1859
    %v1862 = vadd.f32 %v1850, %v1860
    %v1863 = vadd.f32 %v1851, %v1861
    %v1864 = vlaneseq
    %v1865 = vshrl.u32 %v1864, 7
    %v1866 = vsub.s32 3, %v1865
    %v1867 = vrot.slane %v1826, %v1866
    %v1868 = vlaneseq
    %v1869 = vshrl.u32 %v1868, 7
    %v1870 = vsub.s32 3, %v1869
    %v1871 = vrot.slane %v1827, %v1870
    %v1872 = vmul.f32 %v624, %v1867
    %v1873 = vmul.f32 %v624, %v1871
    %v1874 = vadd.f32 %v1862, %v1872
    %v1875 = vadd.f32 %v1863, %v1873
    %1876 = vrot.lane.b32.xlu0 %v1448, 112
    %v1877 = vpop.permute.xlu0 %1876
    %1878 = vrot.lane.b32.xlu0 %v1450, 112
    %v1879 = vpop.permute.xlu0 %1878
    %v1880 = vsel %vm642, %v1877, %v1879
    %v1881 = vsel %vm642, %v1879, %v1877
    %v1882 = vsel %vm647, %v1880, 0.0
    %v1883 = vsel %vm648, %v1881, 0.0
    %v1884 = vlaneseq
    %v1885 = vshrl.u32 %v1884, 7
    %v1886 = vsub.s32 0, %v1885
    %v1887 = vrot.slane %v1882, %v1886
    %v1888 = vlaneseq
    %v1889 = vshrl.u32 %v1888, 7
    %v1890 = vsub.s32 0, %v1889
    %v1891 = vrot.slane %v1883, %v1890
    %v1892 = vmul.f32 %v653, %v1887
    %v1893 = vmul.f32 %v653, %v1891
    %v1894 = vadd.f32 %v1874, %v1892
    %v1895 = vadd.f32 %v1875, %v1893
    %v1896 = vlaneseq
    %v1897 = vshrl.u32 %v1896, 7
    %v1898 = vsub.s32 1, %v1897
    %v1899 = vrot.slane %v1882, %v1898
    %v1900 = vlaneseq
    %v1901 = vshrl.u32 %v1900, 7
    %v1902 = vsub.s32 1, %v1901
    %v1903 = vrot.slane %v1883, %v1902
    %v1904 = vmul.f32 %v669, %v1899
    %v1905 = vmul.f32 %v669, %v1903
    %v1906 = vadd.f32 %v1894, %v1904
    %v1907 = vadd.f32 %v1895, %v1905
    %v1908 = vlaneseq
    %v1909 = vshrl.u32 %v1908, 7
    %v1910 = vsub.s32 2, %v1909
    %v1911 = vrot.slane %v1882, %v1910
    %v1912 = vlaneseq
    %v1913 = vshrl.u32 %v1912, 7
    %v1914 = vsub.s32 2, %v1913
    %v1915 = vrot.slane %v1883, %v1914
    %v1916 = vmul.f32 %v685, %v1911
    %v1917 = vmul.f32 %v685, %v1915
    %v1918 = vadd.f32 %v1906, %v1916
    %v1919 = vadd.f32 %v1907, %v1917
    %v1920 = vlaneseq
    %v1921 = vshrl.u32 %v1920, 7
    %v1922 = vsub.s32 3, %v1921
    %v1923 = vrot.slane %v1882, %v1922
    %v1924 = vlaneseq
    %v1925 = vshrl.u32 %v1924, 7
    %v1926 = vsub.s32 3, %v1925
    %v1927 = vrot.slane %v1883, %v1926
    %v1928 = vmul.f32 %v701, %v1923
    %v1929 = vmul.f32 %v701, %v1927
    %v1930 = vadd.f32 %v1918, %v1928
    %v1931 = vadd.f32 %v1919, %v1929
    %1932 = vrot.lane.b32.xlu0 %v1448, 111
    %v1933 = vpop.permute.xlu0 %1932
    %1934 = vrot.lane.b32.xlu0 %v1450, 111
    %v1935 = vpop.permute.xlu0 %1934
    %v1936 = vsel %vm719, %v1933, %v1935
    %v1937 = vsel %vm719, %v1935, %v1933
    %v1938 = vsel %vm724, %v1936, 0.0
    %v1939 = vsel %vm725, %v1937, 0.0
    %v1940 = vlaneseq
    %v1941 = vshrl.u32 %v1940, 7
    %v1942 = vsub.s32 0, %v1941
    %v1943 = vrot.slane %v1938, %v1942
    %v1944 = vlaneseq
    %v1945 = vshrl.u32 %v1944, 7
    %v1946 = vsub.s32 0, %v1945
    %v1947 = vrot.slane %v1939, %v1946
    %v1948 = vmul.f32 %v730, %v1943
    %v1949 = vmul.f32 %v730, %v1947
    %v1950 = vadd.f32 %v1930, %v1948
    %v1951 = vadd.f32 %v1931, %v1949
    %v1952 = vlaneseq
    %v1953 = vshrl.u32 %v1952, 7
    %v1954 = vsub.s32 1, %v1953
    %v1955 = vrot.slane %v1938, %v1954
    %v1956 = vlaneseq
    %v1957 = vshrl.u32 %v1956, 7
    %v1958 = vsub.s32 1, %v1957
    %v1959 = vrot.slane %v1939, %v1958
    %v1960 = vmul.f32 %v746, %v1955
    %v1961 = vmul.f32 %v746, %v1959
    %v1962 = vadd.f32 %v1950, %v1960
    %v1963 = vadd.f32 %v1951, %v1961
    %v1964 = vlaneseq
    %v1965 = vshrl.u32 %v1964, 7
    %v1966 = vsub.s32 2, %v1965
    %v1967 = vrot.slane %v1938, %v1966
    %v1968 = vlaneseq
    %v1969 = vshrl.u32 %v1968, 7
    %v1970 = vsub.s32 2, %v1969
    %v1971 = vrot.slane %v1939, %v1970
    %v1972 = vmul.f32 %v762, %v1967
    %v1973 = vmul.f32 %v762, %v1971
    %v1974 = vadd.f32 %v1962, %v1972
    %v1975 = vadd.f32 %v1963, %v1973
    %v1976 = vlaneseq
    %v1977 = vshrl.u32 %v1976, 7
    %v1978 = vsub.s32 3, %v1977
    %v1979 = vrot.slane %v1938, %v1978
    %v1980 = vlaneseq
    %v1981 = vshrl.u32 %v1980, 7
    %v1982 = vsub.s32 3, %v1981
    %v1983 = vrot.slane %v1939, %v1982
    %v1984 = vmul.f32 %v778, %v1979
    %v1985 = vmul.f32 %v778, %v1983
    %v1986 = vadd.f32 %v1974, %v1984
    %v1987 = vadd.f32 %v1975, %v1985
    %v1988 = vmax.f32 %v1986, 0.0
    %v1989 = vmax.f32 %v1987, 0.0
    %1990 = vrot.lane.b32.xlu0 %v1988, 17
    %v1991 = vpop.permute.xlu0 %1990
    %1992 = vrot.lane.b32.xlu0 %v1989, 17
    %v1993 = vpop.permute.xlu0 %1992
    %v1994 = vsel %vm75, %v1991, %v1993
    %v1995 = vsel %vm75, %v1993, %v1991
    %v1996 = vsel %vm80, %v1995, 0.0
    %v1997 = vsel %vm81, %v1994, 0.0
    %v1998 = vlaneseq
    %v1999 = vshrl.u32 %v1998, 7
    %v2000 = vsub.s32 0, %v1999
    %v2001 = vrot.slane %v1996, %v2000
    %v2002 = vlaneseq
    %v2003 = vshrl.u32 %v2002, 7
    %v2004 = vsub.s32 0, %v2003
    %v2005 = vrot.slane %v1997, %v2004
    %v2006 = vmul.f32 %v810, %v2001
    %v2007 = vmul.f32 %v810, %v2005
    %v2008 = vadd.f32 %v797, %v2006
    %v2009 = vadd.f32 %v797, %v2007
    %v2010 = vlaneseq
    %v2011 = vshrl.u32 %v2010, 7
    %v2012 = vsub.s32 1, %v2011
    %v2013 = vrot.slane %v1996, %v2012
    %v2014 = vlaneseq
    %v2015 = vshrl.u32 %v2014, 7
    %v2016 = vsub.s32 1, %v2015
    %v2017 = vrot.slane %v1997, %v2016
    %v2018 = vmul.f32 %v826, %v2013
    %v2019 = vmul.f32 %v826, %v2017
    %v2020 = vadd.f32 %v2008, %v2018
    %v2021 = vadd.f32 %v2009, %v2019
    %v2022 = vlaneseq
    %v2023 = vshrl.u32 %v2022, 7
    %v2024 = vsub.s32 2, %v2023
    %v2025 = vrot.slane %v1996, %v2024
    %v2026 = vlaneseq
    %v2027 = vshrl.u32 %v2026, 7
    %v2028 = vsub.s32 2, %v2027
    %v2029 = vrot.slane %v1997, %v2028
    %v2030 = vmul.f32 %v842, %v2025
    %v2031 = vmul.f32 %v842, %v2029
    %v2032 = vadd.f32 %v2020, %v2030
    %v2033 = vadd.f32 %v2021, %v2031
    %v2034 = vlaneseq
    %v2035 = vshrl.u32 %v2034, 7
    %v2036 = vsub.s32 3, %v2035
    %v2037 = vrot.slane %v1996, %v2036
    %v2038 = vlaneseq
    %v2039 = vshrl.u32 %v2038, 7
    %v2040 = vsub.s32 3, %v2039
    %v2041 = vrot.slane %v1997, %v2040
    %v2042 = vmul.f32 %v858, %v2037
    %v2043 = vmul.f32 %v858, %v2041
    %v2044 = vadd.f32 %v2032, %v2042
    %v2045 = vadd.f32 %v2033, %v2043
    %2046 = vrot.lane.b32.xlu0 %v1988, 16
    %v2047 = vpop.permute.xlu0 %2046
    %2048 = vrot.lane.b32.xlu0 %v1989, 16
    %v2049 = vpop.permute.xlu0 %2048
    %v2050 = vsel %vm153, %v2047, %v2049
    %v2051 = vsel %vm153, %v2049, %v2047
    %v2052 = vsel %vm158, %v2051, 0.0
    %v2053 = vsel %vm159, %v2050, 0.0
    %v2054 = vlaneseq
    %v2055 = vshrl.u32 %v2054, 7
    %v2056 = vsub.s32 0, %v2055
    %v2057 = vrot.slane %v2052, %v2056
    %v2058 = vlaneseq
    %v2059 = vshrl.u32 %v2058, 7
    %v2060 = vsub.s32 0, %v2059
    %v2061 = vrot.slane %v2053, %v2060
    %v2062 = vmul.f32 %v882, %v2057
    %v2063 = vmul.f32 %v882, %v2061
    %v2064 = vadd.f32 %v2044, %v2062
    %v2065 = vadd.f32 %v2045, %v2063
    %v2066 = vlaneseq
    %v2067 = vshrl.u32 %v2066, 7
    %v2068 = vsub.s32 1, %v2067
    %v2069 = vrot.slane %v2052, %v2068
    %v2070 = vlaneseq
    %v2071 = vshrl.u32 %v2070, 7
    %v2072 = vsub.s32 1, %v2071
    %v2073 = vrot.slane %v2053, %v2072
    %v2074 = vmul.f32 %v898, %v2069
    %v2075 = vmul.f32 %v898, %v2073
    %v2076 = vadd.f32 %v2064, %v2074
    %v2077 = vadd.f32 %v2065, %v2075
    %v2078 = vlaneseq
    %v2079 = vshrl.u32 %v2078, 7
    %v2080 = vsub.s32 2, %v2079
    %v2081 = vrot.slane %v2052, %v2080
    %v2082 = vlaneseq
    %v2083 = vshrl.u32 %v2082, 7
    %v2084 = vsub.s32 2, %v2083
    %v2085 = vrot.slane %v2053, %v2084
    %v2086 = vmul.f32 %v914, %v2081
    %v2087 = vmul.f32 %v914, %v2085
    %v2088 = vadd.f32 %v2076, %v2086
    %v2089 = vadd.f32 %v2077, %v2087
    %v2090 = vlaneseq
    %v2091 = vshrl.u32 %v2090, 7
    %v2092 = vsub.s32 3, %v2091
    %v2093 = vrot.slane %v2052, %v2092
    %v2094 = vlaneseq
    %v2095 = vshrl.u32 %v2094, 7
    %v2096 = vsub.s32 3, %v2095
    %v2097 = vrot.slane %v2053, %v2096
    %v2098 = vmul.f32 %v930, %v2093
    %v2099 = vmul.f32 %v930, %v2097
    %v2100 = vadd.f32 %v2088, %v2098
    %v2101 = vadd.f32 %v2089, %v2099
    %2102 = vrot.lane.b32.xlu0 %v1988, 15
    %v2103 = vpop.permute.xlu0 %2102
    %2104 = vrot.lane.b32.xlu0 %v1989, 15
    %v2105 = vpop.permute.xlu0 %2104
    %v2106 = vsel %vm230, %v2103, %v2105
    %v2107 = vsel %vm230, %v2105, %v2103
    %v2108 = vsel %vm235, %v2107, 0.0
    %v2109 = vsel %vm236, %v2106, 0.0
    %v2110 = vlaneseq
    %v2111 = vshrl.u32 %v2110, 7
    %v2112 = vsub.s32 0, %v2111
    %v2113 = vrot.slane %v2108, %v2112
    %v2114 = vlaneseq
    %v2115 = vshrl.u32 %v2114, 7
    %v2116 = vsub.s32 0, %v2115
    %v2117 = vrot.slane %v2109, %v2116
    %v2118 = vmul.f32 %v954, %v2113
    %v2119 = vmul.f32 %v954, %v2117
    %v2120 = vadd.f32 %v2100, %v2118
    %v2121 = vadd.f32 %v2101, %v2119
    %v2122 = vlaneseq
    %v2123 = vshrl.u32 %v2122, 7
    %v2124 = vsub.s32 1, %v2123
    %v2125 = vrot.slane %v2108, %v2124
    %v2126 = vlaneseq
    %v2127 = vshrl.u32 %v2126, 7
    %v2128 = vsub.s32 1, %v2127
    %v2129 = vrot.slane %v2109, %v2128
    %v2130 = vmul.f32 %v970, %v2125
    %v2131 = vmul.f32 %v970, %v2129
    %v2132 = vadd.f32 %v2120, %v2130
    %v2133 = vadd.f32 %v2121, %v2131
    %v2134 = vlaneseq
    %v2135 = vshrl.u32 %v2134, 7
    %v2136 = vsub.s32 2, %v2135
    %v2137 = vrot.slane %v2108, %v2136
    %v2138 = vlaneseq
    %v2139 = vshrl.u32 %v2138, 7
    %v2140 = vsub.s32 2, %v2139
    %v2141 = vrot.slane %v2109, %v2140
    %v2142 = vmul.f32 %v986, %v2137
    %v2143 = vmul.f32 %v986, %v2141
    %v2144 = vadd.f32 %v2132, %v2142
    %v2145 = vadd.f32 %v2133, %v2143
    %v2146 = vlaneseq
    %v2147 = vshrl.u32 %v2146, 7
    %v2148 = vsub.s32 3, %v2147
    %v2149 = vrot.slane %v2108, %v2148
    %v2150 = vlaneseq
    %v2151 = vshrl.u32 %v2150, 7
    %v2152 = vsub.s32 3, %v2151
    %v2153 = vrot.slane %v2109, %v2152
    %v2154 = vmul.f32 %v1002, %v2149
    %v2155 = vmul.f32 %v1002, %v2153
    %v2156 = vadd.f32 %v2144, %v2154
    %v2157 = vadd.f32 %v2145, %v2155
    %2158 = vrot.lane.b32.xlu0 %v1988, 1
    %v2159 = vpop.permute.xlu0 %2158
    %2160 = vrot.lane.b32.xlu0 %v1989, 1
    %v2161 = vpop.permute.xlu0 %2160
    %v2162 = vsel %vm307, %v2159, %v2161
    %v2163 = vsel %vm307, %v2161, %v2159
    %v2164 = vsel %vm312, %v2163, 0.0
    %v2165 = vsel %vm313, %v2162, 0.0
    %v2166 = vlaneseq
    %v2167 = vshrl.u32 %v2166, 7
    %v2168 = vsub.s32 0, %v2167
    %v2169 = vrot.slane %v2164, %v2168
    %v2170 = vlaneseq
    %v2171 = vshrl.u32 %v2170, 7
    %v2172 = vsub.s32 0, %v2171
    %v2173 = vrot.slane %v2165, %v2172
    %v2174 = vmul.f32 %v1026, %v2169
    %v2175 = vmul.f32 %v1026, %v2173
    %v2176 = vadd.f32 %v2156, %v2174
    %v2177 = vadd.f32 %v2157, %v2175
    %v2178 = vlaneseq
    %v2179 = vshrl.u32 %v2178, 7
    %v2180 = vsub.s32 1, %v2179
    %v2181 = vrot.slane %v2164, %v2180
    %v2182 = vlaneseq
    %v2183 = vshrl.u32 %v2182, 7
    %v2184 = vsub.s32 1, %v2183
    %v2185 = vrot.slane %v2165, %v2184
    %v2186 = vmul.f32 %v1042, %v2181
    %v2187 = vmul.f32 %v1042, %v2185
    %v2188 = vadd.f32 %v2176, %v2186
    %v2189 = vadd.f32 %v2177, %v2187
    %v2190 = vlaneseq
    %v2191 = vshrl.u32 %v2190, 7
    %v2192 = vsub.s32 2, %v2191
    %v2193 = vrot.slane %v2164, %v2192
    %v2194 = vlaneseq
    %v2195 = vshrl.u32 %v2194, 7
    %v2196 = vsub.s32 2, %v2195
    %v2197 = vrot.slane %v2165, %v2196
    %v2198 = vmul.f32 %v1058, %v2193
    %v2199 = vmul.f32 %v1058, %v2197
    %v2200 = vadd.f32 %v2188, %v2198
    %v2201 = vadd.f32 %v2189, %v2199
    %v2202 = vlaneseq
    %v2203 = vshrl.u32 %v2202, 7
    %v2204 = vsub.s32 3, %v2203
    %v2205 = vrot.slane %v2164, %v2204
    %v2206 = vlaneseq
    %v2207 = vshrl.u32 %v2206, 7
    %v2208 = vsub.s32 3, %v2207
    %v2209 = vrot.slane %v2165, %v2208
    %v2210 = vmul.f32 %v1074, %v2205
    %v2211 = vmul.f32 %v1074, %v2209
    %v2212 = vadd.f32 %v2200, %v2210
    %v2213 = vadd.f32 %v2201, %v2211
    %v2214 = vlaneseq
    %v2215 = vshrl.u32 %v2214, 7
    %v2216 = vsub.s32 0, %v2215
    %v2217 = vrot.slane %v1988, %v2216
    %v2218 = vlaneseq
    %v2219 = vshrl.u32 %v2218, 7
    %v2220 = vsub.s32 0, %v2219
    %v2221 = vrot.slane %v1989, %v2220
    %v2222 = vmul.f32 %v1090, %v2217
    %v2223 = vmul.f32 %v1090, %v2221
    %v2224 = vadd.f32 %v2212, %v2222
    %v2225 = vadd.f32 %v2213, %v2223
    %v2226 = vlaneseq
    %v2227 = vshrl.u32 %v2226, 7
    %v2228 = vsub.s32 1, %v2227
    %v2229 = vrot.slane %v1988, %v2228
    %v2230 = vlaneseq
    %v2231 = vshrl.u32 %v2230, 7
    %v2232 = vsub.s32 1, %v2231
    %v2233 = vrot.slane %v1989, %v2232
    %v2234 = vmul.f32 %v1106, %v2229
    %v2235 = vmul.f32 %v1106, %v2233
    %v2236 = vadd.f32 %v2224, %v2234
    %v2237 = vadd.f32 %v2225, %v2235
    %v2238 = vlaneseq
    %v2239 = vshrl.u32 %v2238, 7
    %v2240 = vsub.s32 2, %v2239
    %v2241 = vrot.slane %v1988, %v2240
    %v2242 = vlaneseq
    %v2243 = vshrl.u32 %v2242, 7
    %v2244 = vsub.s32 2, %v2243
    %v2245 = vrot.slane %v1989, %v2244
    %v2246 = vmul.f32 %v1122, %v2241
    %v2247 = vmul.f32 %v1122, %v2245
    %v2248 = vadd.f32 %v2236, %v2246
    %v2249 = vadd.f32 %v2237, %v2247
    %v2250 = vlaneseq
    %v2251 = vshrl.u32 %v2250, 7
    %v2252 = vsub.s32 3, %v2251
    %v2253 = vrot.slane %v1988, %v2252
    %v2254 = vlaneseq
    %v2255 = vshrl.u32 %v2254, 7
    %v2256 = vsub.s32 3, %v2255
    %v2257 = vrot.slane %v1989, %v2256
    %v2258 = vmul.f32 %v1138, %v2253
    %v2259 = vmul.f32 %v1138, %v2257
    %v2260 = vadd.f32 %v2248, %v2258
    %v2261 = vadd.f32 %v2249, %v2259
    %2262 = vrot.lane.b32.xlu0 %v1988, 127
    %v2263 = vpop.permute.xlu0 %2262
    %2264 = vrot.lane.b32.xlu0 %v1989, 127
    %v2265 = vpop.permute.xlu0 %2264
    %v2266 = vsel %vm488, %v2263, %v2265
    %v2267 = vsel %vm488, %v2265, %v2263
    %v2268 = vsel %vm493, %v2266, 0.0
    %v2269 = vsel %vm494, %v2267, 0.0
    %v2270 = vlaneseq
    %v2271 = vshrl.u32 %v2270, 7
    %v2272 = vsub.s32 0, %v2271
    %v2273 = vrot.slane %v2268, %v2272
    %v2274 = vlaneseq
    %v2275 = vshrl.u32 %v2274, 7
    %v2276 = vsub.s32 0, %v2275
    %v2277 = vrot.slane %v2269, %v2276
    %v2278 = vmul.f32 %v1162, %v2273
    %v2279 = vmul.f32 %v1162, %v2277
    %v2280 = vadd.f32 %v2260, %v2278
    %v2281 = vadd.f32 %v2261, %v2279
    %v2282 = vlaneseq
    %v2283 = vshrl.u32 %v2282, 7
    %v2284 = vsub.s32 1, %v2283
    %v2285 = vrot.slane %v2268, %v2284
    %v2286 = vlaneseq
    %v2287 = vshrl.u32 %v2286, 7
    %v2288 = vsub.s32 1, %v2287
    %v2289 = vrot.slane %v2269, %v2288
    %v2290 = vmul.f32 %v1178, %v2285
    %v2291 = vmul.f32 %v1178, %v2289
    %v2292 = vadd.f32 %v2280, %v2290
    %v2293 = vadd.f32 %v2281, %v2291
    %v2294 = vlaneseq
    %v2295 = vshrl.u32 %v2294, 7
    %v2296 = vsub.s32 2, %v2295
    %v2297 = vrot.slane %v2268, %v2296
    %v2298 = vlaneseq
    %v2299 = vshrl.u32 %v2298, 7
    %v2300 = vsub.s32 2, %v2299
    %v2301 = vrot.slane %v2269, %v2300
    %v2302 = vmul.f32 %v1194, %v2297
    %v2303 = vmul.f32 %v1194, %v2301
    %v2304 = vadd.f32 %v2292, %v2302
    %v2305 = vadd.f32 %v2293, %v2303
    %v2306 = vlaneseq
    %v2307 = vshrl.u32 %v2306, 7
    %v2308 = vsub.s32 3, %v2307
    %v2309 = vrot.slane %v2268, %v2308
    %v2310 = vlaneseq
    %v2311 = vshrl.u32 %v2310, 7
    %v2312 = vsub.s32 3, %v2311
    %v2313 = vrot.slane %v2269, %v2312
    %v2314 = vmul.f32 %v1210, %v2309
    %v2315 = vmul.f32 %v1210, %v2313
    %v2316 = vadd.f32 %v2304, %v2314
    %v2317 = vadd.f32 %v2305, %v2315
    %2318 = vrot.lane.b32.xlu0 %v1988, 113
    %v2319 = vpop.permute.xlu0 %2318
    %2320 = vrot.lane.b32.xlu0 %v1989, 113
    %v2321 = vpop.permute.xlu0 %2320
    %v2322 = vsel %vm565, %v2319, %v2321
    %v2323 = vsel %vm565, %v2321, %v2319
    %v2324 = vsel %vm570, %v2322, 0.0
    %v2325 = vsel %vm571, %v2323, 0.0
    %v2326 = vlaneseq
    %v2327 = vshrl.u32 %v2326, 7
    %v2328 = vsub.s32 0, %v2327
    %v2329 = vrot.slane %v2324, %v2328
    %v2330 = vlaneseq
    %v2331 = vshrl.u32 %v2330, 7
    %v2332 = vsub.s32 0, %v2331
    %v2333 = vrot.slane %v2325, %v2332
    %v2334 = vmul.f32 %v1234, %v2329
    %v2335 = vmul.f32 %v1234, %v2333
    %v2336 = vadd.f32 %v2316, %v2334
    %v2337 = vadd.f32 %v2317, %v2335
    %v2338 = vlaneseq
    %v2339 = vshrl.u32 %v2338, 7
    %v2340 = vsub.s32 1, %v2339
    %v2341 = vrot.slane %v2324, %v2340
    %v2342 = vlaneseq
    %v2343 = vshrl.u32 %v2342, 7
    %v2344 = vsub.s32 1, %v2343
    %v2345 = vrot.slane %v2325, %v2344
    %v2346 = vmul.f32 %v1250, %v2341
    %v2347 = vmul.f32 %v1250, %v2345
    %v2348 = vadd.f32 %v2336, %v2346
    %v2349 = vadd.f32 %v2337, %v2347
    %v2350 = vlaneseq
    %v2351 = vshrl.u32 %v2350, 7
    %v2352 = vsub.s32 2, %v2351
    %v2353 = vrot.slane %v2324, %v2352
    %v2354 = vlaneseq
    %v2355 = vshrl.u32 %v2354, 7
    %v2356 = vsub.s32 2, %v2355
    %v2357 = vrot.slane %v2325, %v2356
    %v2358 = vmul.f32 %v1266, %v2353
    %v2359 = vmul.f32 %v1266, %v2357
    %v2360 = vadd.f32 %v2348, %v2358
    %v2361 = vadd.f32 %v2349, %v2359
    %v2362 = vlaneseq
    %v2363 = vshrl.u32 %v2362, 7
    %v2364 = vsub.s32 3, %v2363
    %v2365 = vrot.slane %v2324, %v2364
    %v2366 = vlaneseq
    %v2367 = vshrl.u32 %v2366, 7
    %v2368 = vsub.s32 3, %v2367
    %v2369 = vrot.slane %v2325, %v2368
    %v2370 = vmul.f32 %v1282, %v2365
    %v2371 = vmul.f32 %v1282, %v2369
    %v2372 = vadd.f32 %v2360, %v2370
    %v2373 = vadd.f32 %v2361, %v2371
    %2374 = vrot.lane.b32.xlu0 %v1988, 112
    %v2375 = vpop.permute.xlu0 %2374
    %2376 = vrot.lane.b32.xlu0 %v1989, 112
    %v2377 = vpop.permute.xlu0 %2376
    %v2378 = vsel %vm642, %v2375, %v2377
    %v2379 = vsel %vm642, %v2377, %v2375
    %v2380 = vsel %vm647, %v2378, 0.0
    %v2381 = vsel %vm648, %v2379, 0.0
    %v2382 = vlaneseq
    %v2383 = vshrl.u32 %v2382, 7
    %v2384 = vsub.s32 0, %v2383
    %v2385 = vrot.slane %v2380, %v2384
    %v2386 = vlaneseq
    %v2387 = vshrl.u32 %v2386, 7
    %v2388 = vsub.s32 0, %v2387
    %v2389 = vrot.slane %v2381, %v2388
    %v2390 = vmul.f32 %v1306, %v2385
    %v2391 = vmul.f32 %v1306, %v2389
    %v2392 = vadd.f32 %v2372, %v2390
    %v2393 = vadd.f32 %v2373, %v2391
    %v2394 = vlaneseq
    %v2395 = vshrl.u32 %v2394, 7
    %v2396 = vsub.s32 1, %v2395
    %v2397 = vrot.slane %v2380, %v2396
    %v2398 = vlaneseq
    %v2399 = vshrl.u32 %v2398, 7
    %v2400 = vsub.s32 1, %v2399
    %v2401 = vrot.slane %v2381, %v2400
    %v2402 = vmul.f32 %v1322, %v2397
    %v2403 = vmul.f32 %v1322, %v2401
    %v2404 = vadd.f32 %v2392, %v2402
    %v2405 = vadd.f32 %v2393, %v2403
    %v2406 = vlaneseq
    %v2407 = vshrl.u32 %v2406, 7
    %v2408 = vsub.s32 2, %v2407
    %v2409 = vrot.slane %v2380, %v2408
    %v2410 = vlaneseq
    %v2411 = vshrl.u32 %v2410, 7
    %v2412 = vsub.s32 2, %v2411
    %v2413 = vrot.slane %v2381, %v2412
    %v2414 = vmul.f32 %v1338, %v2409
    %v2415 = vmul.f32 %v1338, %v2413
    %v2416 = vadd.f32 %v2404, %v2414
    %v2417 = vadd.f32 %v2405, %v2415
    %v2418 = vlaneseq
    %v2419 = vshrl.u32 %v2418, 7
    %v2420 = vsub.s32 3, %v2419
    %v2421 = vrot.slane %v2380, %v2420
    %v2422 = vlaneseq
    %v2423 = vshrl.u32 %v2422, 7
    %v2424 = vsub.s32 3, %v2423
    %v2425 = vrot.slane %v2381, %v2424
    %v2426 = vmul.f32 %v1354, %v2421
    %v2427 = vmul.f32 %v1354, %v2425
    %v2428 = vadd.f32 %v2416, %v2426
    %v2429 = vadd.f32 %v2417, %v2427
    %2430 = vrot.lane.b32.xlu0 %v1988, 111
    %v2431 = vpop.permute.xlu0 %2430
    %2432 = vrot.lane.b32.xlu0 %v1989, 111
    %v2433 = vpop.permute.xlu0 %2432
    %v2434 = vsel %vm719, %v2431, %v2433
    %v2435 = vsel %vm719, %v2433, %v2431
    %v2436 = vsel %vm724, %v2434, 0.0
    %v2437 = vsel %vm725, %v2435, 0.0
    %v2438 = vlaneseq
    %v2439 = vshrl.u32 %v2438, 7
    %v2440 = vsub.s32 0, %v2439
    %v2441 = vrot.slane %v2436, %v2440
    %v2442 = vlaneseq
    %v2443 = vshrl.u32 %v2442, 7
    %v2444 = vsub.s32 0, %v2443
    %v2445 = vrot.slane %v2437, %v2444
    %v2446 = vmul.f32 %v1378, %v2441
    %v2447 = vmul.f32 %v1378, %v2445
    %v2448 = vadd.f32 %v2428, %v2446
    %v2449 = vadd.f32 %v2429, %v2447
    %v2450 = vlaneseq
    %v2451 = vshrl.u32 %v2450, 7
    %v2452 = vsub.s32 1, %v2451
    %v2453 = vrot.slane %v2436, %v2452
    %v2454 = vlaneseq
    %v2455 = vshrl.u32 %v2454, 7
    %v2456 = vsub.s32 1, %v2455
    %v2457 = vrot.slane %v2437, %v2456
    %v2458 = vmul.f32 %v1394, %v2453
    %v2459 = vmul.f32 %v1394, %v2457
    %v2460 = vadd.f32 %v2448, %v2458
    %v2461 = vadd.f32 %v2449, %v2459
    %v2462 = vlaneseq
    %v2463 = vshrl.u32 %v2462, 7
    %v2464 = vsub.s32 2, %v2463
    %v2465 = vrot.slane %v2436, %v2464
    %v2466 = vlaneseq
    %v2467 = vshrl.u32 %v2466, 7
    %v2468 = vsub.s32 2, %v2467
    %v2469 = vrot.slane %v2437, %v2468
    %v2470 = vmul.f32 %v1410, %v2465
    %v2471 = vmul.f32 %v1410, %v2469
    %v2472 = vadd.f32 %v2460, %v2470
    %v2473 = vadd.f32 %v2461, %v2471
    %v2474 = vlaneseq
    %v2475 = vshrl.u32 %v2474, 7
    %v2476 = vsub.s32 3, %v2475
    %v2477 = vrot.slane %v2436, %v2476
    %v2478 = vlaneseq
    %v2479 = vshrl.u32 %v2478, 7
    %v2480 = vsub.s32 3, %v2479
    %v2481 = vrot.slane %v2437, %v2480
    %v2482 = vmul.f32 %v1426, %v2477
    %v2483 = vmul.f32 %v1426, %v2481
    %v2484 = vadd.f32 %v2472, %v2482
    %v2485 = vadd.f32 %v2473, %v2483
    %v2486 = vadd.f32 %v2484, %v1448
    %v2487 = vadd.f32 %v2485, %v1450
    %v2490 = vcombine.low %v2486, %v2487
    %s2492 = scalar_lea.vmem [#allocation5], 8
    %2493 = vst [vmem:[%s2492] sm:$0xff] %v2490
    // Predicated region
    $region26: #{_residual_block_pallas.1} parent=1 // pred_check
      _
    $region27: #{_residual_block_pallas.1} parent=1 // pred_check_branch
      %2495 = sbr.rel (0) target = $region29
    $region28: #{_residual_block_pallas.1} parent=1 // pred_region
      %s2497 = ssub.s32 256, 256
      %2498 = vsyncadd [#allocation4], %s2497
      %s2499 = sshll.u32 [#allocation5], 4
      %s2500 = int_to_ptr.vmem [resolvable:$true] %s2499
      %2505 = dma.vmem_to_hbm [thread:$0]  %s2500, 256, %s5, [#allocation4], 128, 128, 8
    $region29: #{_residual_block_pallas.1} parent=1 // pred_fallthru
      _
    // Predicated region
    $region30: #{_residual_block_pallas.1} parent=1 // pred_check
      _
    $region31: #{_residual_block_pallas.1} parent=1 // pred_check_branch
      %2507 = sbr.rel (0) target = $region33
    $region32: #{_residual_block_pallas.1} parent=1 // pred_region
      %2508 = dma.done [#allocation4], 256
    $region33: #{_residual_block_pallas.1} parent=1 // pred_fallthru
      _
    %2509 = vsyncpa [#allocation3], 1
    %2510 = vsyncpa [#allocation4], 1

</llo_original>
